<compile_context>
chip_gen: v6e
topology: v6e:2x2x1
jax: 0.10.0
libtpu: 0.0.40
codegen_flags: <defaults>
</compile_context>

<pallas_src>
import functools

import jax
import jax.numpy as jnp
from jax import lax
from jax.experimental import pallas as pl
from jax.experimental.pallas import tpu as pltpu


def _pixel_unshuffle_kernel(x_ref, pr_ref, pc_ref, o_ref, *, k, h, w, cb, precision):
    # x_ref:  (1, cb, H, W)        input tile (one batch, cb channels)
    # pr_ref: (H, H)               one-hot row-phase permutation
    # pc_ref: (W, W)               one-hot column-phase permutation
    # o_ref:  (1, cb, k*k, h, w)   unshuffled output for those channels
    H, W = h * k, w * k
    x = x_ref[0]                                        # (cb, H, W)
    dt = x.dtype

    # Broadcast the shared permutation matrices across the channel block so the
    # permutations become plain batched matmuls (no left-multiply transposes,
    # no lane/sublane value reshapes).
    pcb = jnp.broadcast_to(pc_ref[...], (cb, W, W))
    prb = jnp.broadcast_to(pr_ref[...], (cb, H, H))

    # Column (lane) phase on the MXU: y[c, r, dx*w + j] = x[c, r, j*k + dx]
    y = lax.dot_general(
        x, pcb, (((2,), (1,)), ((0,), (0,))),
        precision=precision, preferred_element_type=dt,
    )                                                   # (cb, H, W)

    # Row (sublane) phase on the MXU: z[c, dy*h + i, s] = y[c, i*k + dy, s]
    z = lax.dot_general(
        prb, y, (((2,), (1,)), ((0,), (0,))),
        precision=precision, preferred_element_type=dt,
    )                                                   # (cb, H, W)

    z = z.astype(o_ref.dtype)
    # z[c, dy*h + i, dx*w + j] == x[c, i*k + dy, j*k + dx]  -> phase dy*k + dx
    for dy in range(k):
        for dx in range(k):
            o_ref[0, :, dy * k + dx, :, :] = z[:, dy * h:(dy + 1) * h,
                                               dx * w:(dx + 1) * w]


def _pick_channel_block(C, B, H, W, itemsize):
    """Largest divisor of C whose per-step VMEM footprint fits the budget."""
    budget = 20 * 1024 * 1024                       # out of a 32 MiB scoped limit
    fixed = 2 * (H * H + W * W) * itemsize          # resident P_row / P_col blocks
    # 2x double-buffered input + 2x double-buffered output + y + z temporaries
    # + per-channel broadcast copies of P_row / P_col.
    per_c = (6 * H * W + H * H + W * W) * itemsize
    cb = 1
    for d in range(1, C + 1):
        if C % d == 0 and fixed + d * per_c <= budget:
            cb = d
    # Keep at least 2 grid steps when possible so both v7x TensorCores get work.
    if B * (C // cb) < 2:
        for d in range(cb - 1, 0, -1):
            if C % d == 0 and C // d >= 2:
                cb = d
                break
    need = fixed + cb * per_c
    return cb, need


def pixel_unshuffle(x, downscale_factor):
    """(B, C, k*h, k*w) -> (B, C*k*k, h, w), PyTorch PixelUnShuffle channel order."""
    k = int(downscale_factor)
    B, C, H, W = x.shape
    assert H % k == 0 and W % k == 0, "spatial dims must be divisible by k"
    h, w = H // k, W // k

    if k == 1:
        return x

    # One-hot column-phase permutation: P_col[j*k + dx, dx*w + j] = 1.
    s = jnp.arange(W)
    p_col = jax.nn.one_hot((s % k) * w + s // k, W, dtype=x.dtype)
    # One-hot row-phase permutation: P_row[dy*h + i, i*k + dy] = 1.
    r = jnp.arange(H)
    p_row = jax.nn.one_hot((r % h) * k + r // h, H, dtype=x.dtype)

    # Exact permutation through the MXU: native single pass is exact for bf16,
    # HIGHEST (full-precision decomposition) keeps f32 lossless.
    precision = (lax.Precision.HIGHEST if x.dtype == jnp.float32
                 else lax.Precision.DEFAULT)

    cb, need = _pick_channel_block(C, B, H, W, x.dtype.itemsize)
    vmem_limit = min(max(32 * 1024 * 1024, need + (8 << 20)), 60 * 1024 * 1024)

    out5 = pl.pallas_call(
        functools.partial(_pixel_unshuffle_kernel, k=k, h=h, w=w, cb=cb,
                          precision=precision),
        out_shape=jax.ShapeDtypeStruct((B, C, k * k, h, w), x.dtype),
        grid_spec=pltpu.PrefetchScalarGridSpec(
            num_scalar_prefetch=0,
            grid=(B, C // cb),
            in_specs=[
                pl.BlockSpec((1, cb, H, W), lambda b, c: (b, c, 0, 0)),
                pl.BlockSpec((H, H), lambda b, c: (0, 0)),
                pl.BlockSpec((W, W), lambda b, c: (0, 0)),
            ],
            out_specs=pl.BlockSpec((1, cb, k * k, h, w),
                                   lambda b, c: (b, c, 0, 0, 0)),
        ),
        compiler_params=pltpu.CompilerParams(
            dimension_semantics=("parallel", "parallel"),
            vmem_limit_bytes=vmem_limit,
        ),
    )(x, p_row, p_col)

    # Contiguous (free) reshape: channel index becomes c*k*k + dy*k + dx.
    return out5.reshape(B, C * k * k, h, w)


class PixelUnShuffle:
    def __init__(self, downscale_factor):
        self.downscale_factor = downscale_factor

    def __call__(self, x):
        return pixel_unshuffle(x, self.downscale_factor)


if __name__ == "__main__":
    key = jax.random.PRNGKey(0)
    B, C, H, W, k = 2, 4, 16, 16, 2
    x = jax.random.normal(key, (B, C, H, W), dtype=jnp.float32)

    module = PixelUnShuffle(k)
    out = jax.block_until_ready(module(x))

    # Pure-JAX reference (same semantics as the PyTorch grouped-conv version).
    h, w = H // k, W // k
    ref = (
        x.reshape(B, C, h, k, w, k)
        .transpose(0, 1, 3, 5, 2, 4)
        .reshape(B, C * k * k, h, w)
    )

    assert out.shape == (B, C * k * k, h, w), out.shape
    assert jnp.allclose(out, ref, atol=1e-6), float(jnp.max(jnp.abs(out - ref)))
    print("KERNEL_OK")
</pallas_src>

<mosaic_0001>
module attributes {stable_mosaic.version = 11 : i64} {
  func.func @_pixel_unshuffle_kernel(%arg0: i32, %arg1: i32, %arg2: memref<1x4x16x16xf32, #tpu.memory_space<vmem>>, %arg3: memref<16x16xf32, #tpu.memory_space<vmem>>, %arg4: memref<16x16xf32, #tpu.memory_space<vmem>>, %arg5: memref<1x4x4x8x8xf32, #tpu.memory_space<vmem>>) attributes {dimension_semantics = [#tpu.dimension_semantics<parallel>, #tpu.dimension_semantics<parallel>], iteration_bounds = array<i64: 2, 1>, scalar_prefetch = 0 : i64, scratch_operands = 0 : i64, tpu.core_type = #tpu.core_type<tc>, window_params = [{transform_indices = @transform_0, window_bounds = array<i64: 1, 4, 16, 16>}, {pipeline_mode = #tpu.pipeline_mode<synchronous>, transform_indices = @transform_1, window_bounds = array<i64: 16, 16>}, {pipeline_mode = #tpu.pipeline_mode<synchronous>, transform_indices = @transform_2, window_bounds = array<i64: 16, 16>}, {transform_indices = @transform_3, window_bounds = array<i64: 1, 4, 4, 8, 8>}]} {
    %c0 = arith.constant 0 : index
    %c0_0 = arith.constant 0 : index
    %c0_1 = arith.constant 0 : index
    %c0_2 = arith.constant 0 : index
    %0 = vector.load %arg2[%c0, %c0_0, %c0_1, %c0_2] : memref<1x4x16x16xf32, #tpu.memory_space<vmem>>, vector<1x4x16x16xf32>
    %1 = vector.shape_cast %0 : vector<1x4x16x16xf32> to vector<4x16x16xf32>
    %c0_3 = arith.constant 0 : index
    %c0_4 = arith.constant 0 : index
    %2 = vector.load %arg4[%c0_3, %c0_4] : memref<16x16xf32, #tpu.memory_space<vmem>>, vector<16x16xf32>
    %3 = vector.shape_cast %2 : vector<16x16xf32> to vector<1x16x16xf32>
    %4 = vector.broadcast %3 : vector<1x16x16xf32> to vector<4x16x16xf32>
    %c0_5 = arith.constant 0 : index
    %c0_6 = arith.constant 0 : index
    %5 = vector.load %arg3[%c0_5, %c0_6] : memref<16x16xf32, #tpu.memory_space<vmem>>, vector<16x16xf32>
    %6 = vector.shape_cast %5 : vector<16x16xf32> to vector<1x16x16xf32>
    %7 = vector.broadcast %6 : vector<1x16x16xf32> to vector<4x16x16xf32>
    %cst = arith.constant dense<0.000000e+00> : vector<4x16x16xf32>
    %8 = tpu.matmul %1, %4, %cst {dimension_numbers = #tpu.dot_dimension_numbers<[2], [1], [1], [2], [0, 0, 0, 1, 1, 2], [0], [0]>, precision = #tpu.contract_precision<fp32>} : vector<4x16x16xf32>, vector<4x16x16xf32>, vector<4x16x16xf32> -> vector<4x16x16xf32>
    %cst_7 = arith.constant dense<0.000000e+00> : vector<4x16x16xf32>
    %9 = tpu.matmul %7, %8, %cst_7 {dimension_numbers = #tpu.dot_dimension_numbers<[2], [1], [1], [2], [0, 0, 0, 1, 1, 2], [0], [0]>, precision = #tpu.contract_precision<fp32>} : vector<4x16x16xf32>, vector<4x16x16xf32>, vector<4x16x16xf32> -> vector<4x16x16xf32>
    %10 = vector.extract_strided_slice %9 {offsets = [0, 0, 0], sizes = [4, 8, 8], strides = [1, 1, 1]} : vector<4x16x16xf32> to vector<4x8x8xf32>
    %c0_8 = arith.constant 0 : index
    %c0_9 = arith.constant 0 : index
    %c0_10 = arith.constant 0 : index
    %c0_11 = arith.constant 0 : index
    %c0_12 = arith.constant 0 : index
    %11 = vector.load %arg5[%c0_8, %c0_9, %c0_10, %c0_11, %c0_12] : memref<1x4x4x8x8xf32, #tpu.memory_space<vmem>>, vector<1x4x1x8x8xf32>
    %12 = vector.shape_cast %11 : vector<1x4x1x8x8xf32> to vector<4x8x8xf32>
    %13 = vector.shape_cast %10 : vector<4x8x8xf32> to vector<1x4x1x8x8xf32>
    tpu.vector_store %arg5[%c0_8, %c0_9, %c0_10, %c0_11, %c0_12], %13 {strides = array<i32>} : memref<1x4x4x8x8xf32, #tpu.memory_space<vmem>>, vector<1x4x1x8x8xf32>,
    %14 = vector.extract_strided_slice %9 {offsets = [0, 0, 8], sizes = [4, 8, 8], strides = [1, 1, 1]} : vector<4x16x16xf32> to vector<4x8x8xf32>
    %c0_13 = arith.constant 0 : index
    %c0_14 = arith.constant 0 : index
    %c1 = arith.constant 1 : index
    %c0_15 = arith.constant 0 : index
    %c0_16 = arith.constant 0 : index
    %15 = vector.load %arg5[%c0_13, %c0_14, %c1, %c0_15, %c0_16] : memref<1x4x4x8x8xf32, #tpu.memory_space<vmem>>, vector<1x4x1x8x8xf32>
    %16 = vector.shape_cast %15 : vector<1x4x1x8x8xf32> to vector<4x8x8xf32>
    %17 = vector.shape_cast %14 : vector<4x8x8xf32> to vector<1x4x1x8x8xf32>
    tpu.vector_store %arg5[%c0_13, %c0_14, %c1, %c0_15, %c0_16], %17 {strides = array<i32>} : memref<1x4x4x8x8xf32, #tpu.memory_space<vmem>>, vector<1x4x1x8x8xf32>,
    %18 = vector.extract_strided_slice %9 {offsets = [0, 8, 0], sizes = [4, 8, 8], strides = [1, 1, 1]} : vector<4x16x16xf32> to vector<4x8x8xf32>
    %c0_17 = arith.constant 0 : index
    %c0_18 = arith.constant 0 : index
    %c2 = arith.constant 2 : index
    %c0_19 = arith.constant 0 : index
    %c0_20 = arith.constant 0 : index
    %19 = vector.load %arg5[%c0_17, %c0_18, %c2, %c0_19, %c0_20] : memref<1x4x4x8x8xf32, #tpu.memory_space<vmem>>, vector<1x4x1x8x8xf32>
    %20 = vector.shape_cast %19 : vector<1x4x1x8x8xf32> to vector<4x8x8xf32>
    %21 = vector.shape_cast %18 : vector<4x8x8xf32> to vector<1x4x1x8x8xf32>
    tpu.vector_store %arg5[%c0_17, %c0_18, %c2, %c0_19, %c0_20], %21 {strides = array<i32>} : memref<1x4x4x8x8xf32, #tpu.memory_space<vmem>>, vector<1x4x1x8x8xf32>,
    %22 = vector.extract_strided_slice %9 {offsets = [0, 8, 8], sizes = [4, 8, 8], strides = [1, 1, 1]} : vector<4x16x16xf32> to vector<4x8x8xf32>
    %c0_21 = arith.constant 0 : index
    %c0_22 = arith.constant 0 : index
    %c3 = arith.constant 3 : index
    %c0_23 = arith.constant 0 : index
    %c0_24 = arith.constant 0 : index
    %23 = vector.load %arg5[%c0_21, %c0_22, %c3, %c0_23, %c0_24] : memref<1x4x4x8x8xf32, #tpu.memory_space<vmem>>, vector<1x4x1x8x8xf32>
    %24 = vector.shape_cast %23 : vector<1x4x1x8x8xf32> to vector<4x8x8xf32>
    %25 = vector.shape_cast %22 : vector<4x8x8xf32> to vector<1x4x1x8x8xf32>
    tpu.vector_store %arg5[%c0_21, %c0_22, %c3, %c0_23, %c0_24], %25 {strides = array<i32>} : memref<1x4x4x8x8xf32, #tpu.memory_space<vmem>>, vector<1x4x1x8x8xf32>,
    return
  }
  func.func @transform_0(%arg0: i32, %arg1: i32) -> (i32, i32, i32, i32) {
    %c0_i32 = arith.constant 0 : i32
    %c0_i32_0 = arith.constant 0 : i32
    %c0_i32_1 = arith.constant 0 : i32
    return %arg0, %arg1, %c0_i32, %c0_i32_0 : i32, i32, i32, i32
  }
  func.func @transform_1(%arg0: i32, %arg1: i32) -> (i32, i32) {
    %c0_i32 = arith.constant 0 : i32
    %c0_i32_0 = arith.constant 0 : i32
    %c0_i32_1 = arith.constant 0 : i32
    return %c0_i32, %c0_i32_0 : i32, i32
  }
  func.func @transform_2(%arg0: i32, %arg1: i32) -> (i32, i32) {
    %c0_i32 = arith.constant 0 : i32
    %c0_i32_0 = arith.constant 0 : i32
    %c0_i32_1 = arith.constant 0 : i32
    return %c0_i32, %c0_i32_0 : i32, i32
  }
  func.func @transform_3(%arg0: i32, %arg1: i32) -> (i32, i32, i32, i32, i32) {
    %c0_i32 = arith.constant 0 : i32
    %c0_i32_0 = arith.constant 0 : i32
    %c0_i32_1 = arith.constant 0 : i32
    %c0_i32_2 = arith.constant 0 : i32
    return %arg0, %arg1, %c0_i32, %c0_i32_0, %c0_i32_1 : i32, i32, i32, i32, i32
  }
}

</mosaic_0001>

<llo_original>
// kernel: tpu_custom_call.1
$region0: #{tpu_custom_call.1}
  #allocation0 [shape = 'u32[]', space=smem, size = 0x4, offset = 0x4, fixed_abs, tag = 'smem constant byte address 0x4 - core index']
  #allocation1 [shape = 'u32[144,128]{1,0:T(1,128)}', space=vmem, size = 0x12000, scoped, tag = 'internal scratch']
  %s0 = inlined_call_operand.hbm [shape: f32[2,4,16,16], index: 0, kind: input, shape index: {}]
  %s1 = inlined_call_operand.hbm [shape: f32[16,16], index: 1, kind: input, shape index: {}]
  %s2 = inlined_call_operand.hbm [shape: f32[16,16], index: 2, kind: input, shape index: {}]
  %s3 = inlined_call_operand.hbm [shape: f32[2,4,4,8,8], index: 3, kind: output, shape index: {}]
  %s4 = sld [smem:[#allocation0]]
  $region57: #{tpu_custom_call.1} parent=0
    _
  %s6 = ssub.s32 1, %s4
  %s7 = scalar_select 0, %s6, %s4
  $region1: #{tpu_custom_call.1} parent=0
    #allocation2 [shape = 'u8[65536]{0}', space=vmem, size = 0x10000, scoped, tag = 'input window, operand 0']
    #allocation3 [shape = 's32[2]{0}', space=sflag, size = 0x8, scoped, tag = 'scoped memory for tpu_custom_call.1']
    #allocation4 [shape = 's32[2]{0}', space=sflag, size = 0x8, scoped, tag = 'scoped memory for tpu_custom_call.1']
    #allocation5 [shape = 'u8[8192]{0}', space=vmem, size = 0x2000, scoped, tag = 'input window, operand 1, single buffered']
    #allocation6 [shape = 's32[1]{0}', space=sflag, size = 0x4, scoped, tag = 'scoped memory for tpu_custom_call.1']
    #allocation7 [shape = 'u8[8192]{0}', space=vmem, size = 0x2000, scoped, tag = 'input window, operand 2, single buffered']
    #allocation8 [shape = 'u8[131072]{0}', space=vmem, size = 0x20000, scoped, tag = 'output window, operand 0']
    %8 = vsyncpa [#allocation3], 0
    %s9 = scalar_lea.sflag [#allocation3], 1
    %10 = vsyncpa %s9, 0
    %11 = vsyncpa [#allocation6], 0
    %12 = vsyncpa [#allocation4], 0
    %s13 = scalar_lea.sflag [#allocation4], 1
    %14 = vsyncpa %s13, 0
    loop: start=0, step=1, limit=4
    $region2: #{tpu_custom_call.1} parent=1 // loop_pre_header
      _
    $region3: #{tpu_custom_call.1} parent=1 // loop_header
      %s16 = sphi 0, %s20
      %p17 = scmp.ge.s32.totalorder %s16, 4
      %s23 = sphi 0, %s35
      %s24 = sphi 0, %s31
      %s25 = sphi 0, %s23
      %s26 = sphi 0, %s24
      %s27 = sphi 0, %s25
      %s28 = sphi 0, %s26
      %s40 = sphi 0, %s42
      %s43 = sphi 0, %s40
      %s44 = sphi 0, %s43
      %s60 = sphi 0, %s44
      %s64 = sphi 0, %s64
      %s66 = sphi 0, %s64
      %s67 = sphi 0, %s66
      %s81 = sphi 0, %s67
      %s85 = sphi 0, %s85
      %s87 = sphi 0, %s85
      %s88 = sphi 0, %s87
      %s102 = sphi 0, %s88
      %s110 = sphi 0, %s112
      %s113 = sphi 0, %s110
      %s114 = sphi 0, %s113
      %s130 = sphi 0, %s114
    $region4: #{tpu_custom_call.1} parent=1 // loop_header_branch
      %19 = sbr.rel (%p17) target = $region8
    $region5: #{tpu_custom_call.1} parent=1 // loop_body
      %s21 = ssub.s32 %s16, 1
      %s22 = ssub.s32 %s16, 2
      %s29 = sadd.s32 1, %s24
      %p30 = scmp.ge.s32.totalorder %s29, 1
      %s31 = scalar_select %p30, 0, %s29
      %s32 = sadd.s32 1, %s23
      %s33 = scalar_select %p30, %s32, %s23
      %p34 = scmp.ge.s32.totalorder %s33, 2
      %s35 = scalar_select %p34, 0, %s33
      %s36 = ssub.s32 %s23, %s35
      %s37 = ssub.s32 %s24, %s31
      %s38 = sor.u32 %s36, %s37
      %p39 = scmp.eq.s32.totalorder %s38, 0
      %s41 = sadd.s32 %s40, 1
      %s42 = scalar_select %p39, %s40, %s41
      %p45 = pneg %p39
      %p46 = scmp.eq.s32.totalorder %s16, 1
      %p47 = por %p45, %p46
      %p48 = scmp.ne.s32.totalorder %s40, %s43
      %p49 = scmp.eq.s32.totalorder %s16, 0
      %p50 = por %p48, %p49
      %p51 = scmp.ne.s32.totalorder %s40, %s43
      %p52 = scmp.eq.s32.totalorder %s21, 1
      %p53 = por %p51, %p52
      %p54 = scmp.ne.s32.totalorder %s43, %s44
      %p55 = scmp.eq.s32.totalorder %s21, 0
      %p56 = por %p54, %p55
      %p57 = scmp.ne.s32.totalorder %s43, %s44
      %p58 = scmp.eq.s32.totalorder %s22, 1
      %p59 = por %p57, %p58
      %p61 = scmp.ne.s32.totalorder %s44, %s60
      %p62 = scmp.eq.s32.totalorder %s22, 0
      %p63 = por %p61, %p62
      %s65 = sadd.s32 %s64, 1
      %p68 = scmp.eq.s32.totalorder %s16, 1
      %p69 = scmp.ne.s32.totalorder %s64, %s66
      %p70 = scmp.eq.s32.totalorder %s16, 0
      %p71 = por %p69, %p70
      %p72 = scmp.ne.s32.totalorder %s64, %s66
      %p73 = scmp.eq.s32.totalorder %s21, 1
      %p74 = por %p72, %p73
      %p75 = scmp.ne.s32.totalorder %s66, %s67
      %p76 = scmp.eq.s32.totalorder %s21, 0
      %p77 = por %p75, %p76
      %p78 = scmp.ne.s32.totalorder %s66, %s67
      %p79 = scmp.eq.s32.totalorder %s22, 1
      %p80 = por %p78, %p79
      %p82 = scmp.ne.s32.totalorder %s67, %s81
      %p83 = scmp.eq.s32.totalorder %s22, 0
      %p84 = por %p82, %p83
      %s86 = sadd.s32 %s85, 1
      %p89 = scmp.eq.s32.totalorder %s16, 1
      %p90 = scmp.ne.s32.totalorder %s85, %s87
      %p91 = scmp.eq.s32.totalorder %s16, 0
      %p92 = por %p90, %p91
      %p93 = scmp.ne.s32.totalorder %s85, %s87
      %p94 = scmp.eq.s32.totalorder %s21, 1
      %p95 = por %p93, %p94
      %p96 = scmp.ne.s32.totalorder %s87, %s88
      %p97 = scmp.eq.s32.totalorder %s21, 0
      %p98 = por %p96, %p97
      %p99 = scmp.ne.s32.totalorder %s87, %s88
      %p100 = scmp.eq.s32.totalorder %s22, 1
      %p101 = por %p99, %p100
      %p103 = scmp.ne.s32.totalorder %s88, %s102
      %p104 = scmp.eq.s32.totalorder %s22, 0
      %p105 = por %p103, %p104
      %s106 = ssub.s32 %s23, %s35
      %s107 = ssub.s32 %s24, %s31
      %s108 = sor.u32 %s106, %s107
      %p109 = scmp.eq.s32.totalorder %s108, 0
      %s111 = sadd.s32 %s110, 1
      %s112 = scalar_select %p109, %s110, %s111
      %p115 = pneg %p109
      %p116 = scmp.eq.s32.totalorder %s16, 1
      %p117 = por %p115, %p116
      %p118 = scmp.ne.s32.totalorder %s110, %s113
      %p119 = scmp.eq.s32.totalorder %s16, 0
      %p120 = por %p118, %p119
      %p121 = scmp.ne.s32.totalorder %s110, %s113
      %p122 = scmp.eq.s32.totalorder %s21, 1
      %p123 = por %p121, %p122
      %p124 = scmp.ne.s32.totalorder %s113, %s114
      %p125 = scmp.eq.s32.totalorder %s21, 0
      %p126 = por %p124, %p125
      %p127 = scmp.ne.s32.totalorder %s113, %s114
      %p128 = scmp.eq.s32.totalorder %s22, 1
      %p129 = por %p127, %p128
      %p131 = scmp.ne.s32.totalorder %s114, %s130
      %p132 = scmp.eq.s32.totalorder %s22, 0
      %p133 = por %p131, %p132
      %p134 = scmp.le.s32.totalorder 1, %s16
      %p135 = scmp.lt.s32.totalorder %s16, 3
      %p136 = pnand %p134, %p135
      %p137 = pneg %p136
      // Predicated region
      $region9: #{tpu_custom_call.1} parent=5 // pred_check
        _
      $region10: #{tpu_custom_call.1} parent=5 // pred_check_branch
        %139 = sbr.rel (%p136) target = $region12
      $region11: #{tpu_custom_call.1} parent=5 // pred_region
        %s140 = ssub.s32 %s16, 1
        // Predicated region
        $region13: #{tpu_custom_call.1} parent=11 // pred_check
          %p141 = pneg %p77
        $region14: #{tpu_custom_call.1} parent=11 // pred_check_branch
          %143 = sbr.rel (%p141) target = $region16
        $region15: #{tpu_custom_call.1} parent=11 // pred_region
          %s145 = ssub.s32 256, 256
          %146 = vsyncadd [#allocation6], %s145
          %s147 = sshll.u32 [#allocation5], 4
          %s148 = int_to_ptr.vmem [resolvable:$true] %s147
          %153 = dma.hbm_to_vmem [thread:$0]  %s1, 256, %s148, [#allocation6], 128, 128, 8
        $region16: #{tpu_custom_call.1} parent=11 // pred_fallthru
          _
        // Predicated region
        $region17: #{tpu_custom_call.1} parent=11 // pred_check
          %p154 = pneg %p98
        $region18: #{tpu_custom_call.1} parent=11 // pred_check_branch
          %156 = sbr.rel (%p154) target = $region20
        $region19: #{tpu_custom_call.1} parent=11 // pred_region
          %s158 = ssub.s32 256, 256
          %159 = vsyncadd [#allocation6], %s158
          %s160 = sshll.u32 [#allocation7], 4
          %s161 = int_to_ptr.vmem [resolvable:$true] %s160
          %166 = dma.hbm_to_vmem [thread:$0]  %s2, 256, %s161, [#allocation6], 128, 128, 8
        $region20: #{tpu_custom_call.1} parent=11 // pred_fallthru
          _
      $region12: #{tpu_custom_call.1} parent=5 // pred_fallthru
        _
      %p167 = scmp.lt.s32.totalorder %s16, 2
      // Predicated region
      $region21: #{tpu_custom_call.1} parent=5 // pred_check
        %p168 = pneg %p167
      $region22: #{tpu_custom_call.1} parent=5 // pred_check_branch
        %170 = sbr.rel (%p168) target = $region24
      $region23: #{tpu_custom_call.1} parent=5 // pred_region
        // Predicated region
        $region25: #{tpu_custom_call.1} parent=23 // pred_check
          %p171 = pneg %p50
        $region26: #{tpu_custom_call.1} parent=23 // pred_check_branch
          %173 = sbr.rel (%p171) target = $region28
        $region27: #{tpu_custom_call.1} parent=23 // pred_region
          %s174 = sand.u32 %s40, 1
          %s175 = scalar_lea.sflag [#allocation3], %s174
          %s176 = sand.u32 %s40, 1
          %s177 = smul.addr %s176, 64
          %s178 = scalar_lea.vmem [#allocation2], %s177
          %s179 = smul.u32 4, %s24
          %s181 = ssub.s32 1024, 1024
          %182 = vsyncadd %s175, %s181
          %s183 = smul.addr %s179, 2
          %s184 = smul.addr %s23, 8
          %s185 = sadd.s32 %s183, %s184
          %s186 = smul.addr %s185, 128
          %s187 = scalar_lea.hbm %s0, %s186
          %s188 = sshll.u32 %s178, 4
          %s189 = int_to_ptr.vmem [resolvable:$true] %s188
          %194 = dma.hbm_to_vmem [thread:$0]  %s187, 1024, %s189, %s175, 128, 128, 8
        $region28: #{tpu_custom_call.1} parent=23 // pred_fallthru
          _
      $region24: #{tpu_custom_call.1} parent=5 // pred_fallthru
        _
      %p195 = scmp.le.s32.totalorder 1, %s16
      %p196 = scmp.lt.s32.totalorder %s16, 3
      %p197 = pnand %p195, %p196
      %p198 = pneg %p197
      // Predicated region
      $region29: #{tpu_custom_call.1} parent=5 // pred_check
        _
      $region30: #{tpu_custom_call.1} parent=5 // pred_check_branch
        %200 = sbr.rel (%p197) target = $region32
      $region31: #{tpu_custom_call.1} parent=5 // pred_region
        %s201 = ssub.s32 %s16, 1
        %s202 = sand.u32 %s43, 1
        %s203 = scalar_lea.sflag [#allocation3], %s202
        %s204 = sand.u32 %s43, 1
        %s205 = smul.addr %s204, 64
        %s206 = scalar_lea.vmem [#allocation2], %s205
        // Predicated region
        $region33: #{tpu_custom_call.1} parent=31 // pred_check
          %p207 = pneg %p56
        $region34: #{tpu_custom_call.1} parent=31 // pred_check_branch
          %209 = sbr.rel (%p207) target = $region36
        $region35: #{tpu_custom_call.1} parent=31 // pred_region
          %210 = dma.done %s203, 1024
        $region36: #{tpu_custom_call.1} parent=31 // pred_fallthru
          _
        // Predicated region
        $region37: #{tpu_custom_call.1} parent=31 // pred_check
          %p211 = pneg %p77
        $region38: #{tpu_custom_call.1} parent=31 // pred_check_branch
          %213 = sbr.rel (%p211) target = $region40
        $region39: #{tpu_custom_call.1} parent=31 // pred_region
          %214 = dma.done [#allocation6], 256
        $region40: #{tpu_custom_call.1} parent=31 // pred_fallthru
          _
        // Predicated region
        $region41: #{tpu_custom_call.1} parent=31 // pred_check
          %p215 = pneg %p98
        $region42: #{tpu_custom_call.1} parent=31 // pred_check_branch
          %217 = sbr.rel (%p215) target = $region44
        $region43: #{tpu_custom_call.1} parent=31 // pred_region
          %218 = dma.done [#allocation6], 256
        $region44: #{tpu_custom_call.1} parent=31 // pred_fallthru
          _
        %s219 = sand.u32 %s43, 1
        %s220 = scalar_lea.sflag [#allocation3], %s219
        %s221 = sand.u32 %s43, 1
        %s222 = smul.addr %s221, 64
        %s223 = scalar_lea.vmem [#allocation2], %s222
        %p224 = pneg %p56
        %p225 = pneg %p53
        %p226 = pneg %p77
        %p227 = pneg %p74
        %p228 = pneg %p98
        %p229 = pneg %p95
        %p230 = pneg %p126
        %p231 = pneg %p123
        %s232 = sand.u32 %s113, 1
        %s233 = scalar_lea.sflag [#allocation4], %s232
        %s234 = sand.u32 %s113, 1
        %s235 = smul.addr %s234, 128
        %s236 = scalar_lea.vmem [#allocation8], %s235
        %s237 = smul.u32 4, %s26
        %s238 = smul.u32 4, %s26
        %v239 = vld [vmem:[%s206] sm:$0xff]
        %v240 = vld [vmem:[%s206 + $0x8] sm:$0xff]
        %v241 = vld [vmem:[%s206 + $0x10] sm:$0xff]
        %v242 = vld [vmem:[%s206 + $0x18] sm:$0xff]
        %v243 = vld [vmem:[%s206 + $0x20] sm:$0xff]
        %v244 = vld [vmem:[%s206 + $0x28] sm:$0xff]
        %v245 = vld [vmem:[%s206 + $0x30] sm:$0xff]
        %v246 = vld [vmem:[%s206 + $0x38] sm:$0xff]
        %v247 = vld [vmem:[#allocation7] sm:$0xff]
        %v248 = vld [vmem:[#allocation7 + $0x8] sm:$0xff]
        %v249 = vld [vmem:[#allocation5] sm:$0xff]
        %v250 = vld [vmem:[#allocation5 + $0x8] sm:$0xff]
        %vm251 = vcmask 130048
        %v253 = vsel %vm251, %v239, 0
        %v256 = vsel %vm251, %v240, 0
        %258 = vmatprep.subr.mxu0 0.0
        %259 = vmatpush1.msra.mxu0 0.0
        %260 = vmatprep.subr.mxu0 0.0
        %261 = vmatpush1.msra.mxu0 0.0
        %262 = vmatprep.subr.mxu0 0.0
        %263 = vmatpush1.msra.mxu0 0.0
        %264 = vmatprep.subr.mxu0 0.0
        %265 = vmatpush1.msra.mxu0 0.0
        %266 = vmatprep.subr.mxu0 0.0
        %267 = vmatpush1.msra.mxu0 0.0
        %268 = vmatprep.subr.mxu0 0.0
        %269 = vmatpush1.msra.mxu0 0.0
        %270 = vmatprep.subr.mxu0 0.0
        %271 = vmatpush1.msra.mxu0 0.0
        %272 = vmatprep.subr.mxu0 0.0
        %273 = vmatpush1.msra.mxu0 0.0
        %274 = vmatprep.subr.mxu0 0.0
        %275 = vmatpush1.msra.mxu0 0.0
        %276 = vmatprep.subr.mxu0 0.0
        %277 = vmatpush1.msra.mxu0 0.0
        %278 = vmatprep.subr.mxu0 0.0
        %279 = vmatpush1.msra.mxu0 0.0
        %280 = vmatprep.subr.mxu0 0.0
        %281 = vmatpush1.msra.mxu0 0.0
        %282 = vmatprep.subr.mxu0 0.0
        %283 = vmatpush1.msra.mxu0 0.0
        %284 = vmatprep.subr.mxu0 0.0
        %285 = vmatpush1.msra.mxu0 0.0
        %286 = vmatprep.subr.mxu0 0.0
        %v287 = vand.u32 %v248, 4294901760
        %288 = vmatpush1.msra.mxu0 %v287
        %289 = vmatprep.subr.mxu0 0.0
        %v290 = vand.u32 %v247, 4294901760
        %291 = vmatpush1.msra.mxu0 %v290
        %292 = vmatprep.subr.mxu0 0.0
        %293 = vmatpush2.msra.mxu0 0.0
        %294 = vmatprep.subr.mxu0 0.0
        %295 = vmatpush2.msra.mxu0 0.0
        %296 = vmatprep.subr.mxu0 0.0
        %297 = vmatpush2.msra.mxu0 0.0
        %298 = vmatprep.subr.mxu0 0.0
        %299 = vmatpush2.msra.mxu0 0.0
        %300 = vmatprep.subr.mxu0 0.0
        %301 = vmatpush2.msra.mxu0 0.0
        %302 = vmatprep.subr.mxu0 0.0
        %303 = vmatpush2.msra.mxu0 0.0
        %304 = vmatprep.subr.mxu0 0.0
        %305 = vmatpush2.msra.mxu0 0.0
        %306 = vmatprep.subr.mxu0 0.0
        %307 = vmatpush2.msra.mxu0 0.0
        %308 = vmatprep.subr.mxu0 0.0
        %309 = vmatpush2.msra.mxu0 0.0
        %310 = vmatprep.subr.mxu0 0.0
        %311 = vmatpush2.msra.mxu0 0.0
        %312 = vmatprep.subr.mxu0 0.0
        %313 = vmatpush2.msra.mxu0 0.0
        %314 = vmatprep.subr.mxu0 0.0
        %315 = vmatpush2.msra.mxu0 0.0
        %316 = vmatprep.subr.mxu0 0.0
        %317 = vmatpush2.msra.mxu0 0.0
        %318 = vmatprep.subr.mxu0 0.0
        %319 = vmatpush2.msra.mxu0 0.0
        %320 = vmatprep.subr.mxu0 0.0
        %321 = vmatpush2.msra.mxu0 0.0
        %322 = vmatprep.subr.mxu0 0.0
        %323 = vmatpush2.msra.mxu0 0.0
        %324 = vmatprep.mubr.f32.mxu0 0.0
        %v325 = vand.u32 %v253, 4294901760
        %v326 = vsub.f32 %v253, %v325
        %v327 = vand.u32 %v326, 4294901760
        %v328 = vsub.f32 %v326, %v327
        %v329 = vand.u32 %v328, 4294901760
        %330 = vmatmul.mubr.f32.gmra.mxu0 %v329
        %v331 = vpop.f32.mrf.mxu0
        %v332 = vadd.f32 0.0, %v331
        %v333 = vpop.f32.mrf.mxu0
        %334 = vmatprep.mubr.f32.mxu0 0.0
        %v335 = vand.u32 %v256, 4294901760
        %v336 = vsub.f32 %v256, %v335
        %v337 = vand.u32 %v336, 4294901760
        %v338 = vsub.f32 %v336, %v337
        %v339 = vand.u32 %v338, 4294901760
        %340 = vmatmul.mubr.f32.gmra.mxu0 %v339
        %v341 = vpop.f32.mrf.mxu0
        %v342 = vadd.f32 0.0, %v341
        %v343 = vpop.f32.mrf.mxu0
        %344 = vdwg.mxu0
        %345 = vmatprep.subr.mxu0 0.0
        %346 = vmatpush1.msra.mxu0 0.0
        %347 = vmatprep.subr.mxu0 0.0
        %348 = vmatpush1.msra.mxu0 0.0
        %349 = vmatprep.subr.mxu0 0.0
        %350 = vmatpush1.msra.mxu0 0.0
        %351 = vmatprep.subr.mxu0 0.0
        %352 = vmatpush1.msra.mxu0 0.0
        %353 = vmatprep.subr.mxu0 0.0
        %354 = vmatpush1.msra.mxu0 0.0
        %355 = vmatprep.subr.mxu0 0.0
        %356 = vmatpush1.msra.mxu0 0.0
        %357 = vmatprep.subr.mxu0 0.0
        %358 = vmatpush1.msra.mxu0 0.0
        %359 = vmatprep.subr.mxu0 0.0
        %360 = vmatpush1.msra.mxu0 0.0
        %361 = vmatprep.subr.mxu0 0.0
        %362 = vmatpush1.msra.mxu0 0.0
        %363 = vmatprep.subr.mxu0 0.0
        %364 = vmatpush1.msra.mxu0 0.0
        %365 = vmatprep.subr.mxu0 0.0
        %366 = vmatpush1.msra.mxu0 0.0
        %367 = vmatprep.subr.mxu0 0.0
        %368 = vmatpush1.msra.mxu0 0.0
        %369 = vmatprep.subr.mxu0 0.0
        %370 = vmatpush1.msra.mxu0 0.0
        %371 = vmatprep.subr.mxu0 0.0
        %372 = vmatpush1.msra.mxu0 0.0
        %373 = vmatprep.subr.mxu0 0.0
        %v374 = vand.u32 %v248, 4294901760
        %v375 = vsub.f32 %v248, %v374
        %v376 = vand.u32 %v375, 4294901760
        %v377 = vsub.f32 %v375, %v376
        %v378 = vand.u32 %v377, 4294901760
        %379 = vmatpush1.msra.mxu0 %v378
        %380 = vmatprep.subr.mxu0 0.0
        %v381 = vand.u32 %v247, 4294901760
        %v382 = vsub.f32 %v247, %v381
        %v383 = vand.u32 %v382, 4294901760
        %v384 = vsub.f32 %v382, %v383
        %v385 = vand.u32 %v384, 4294901760
        %386 = vmatpush1.msra.mxu0 %v385
        %387 = vmatprep.subr.mxu0 0.0
        %388 = vmatpush2.msra.mxu0 0.0
        %389 = vmatprep.subr.mxu0 0.0
        %390 = vmatpush2.msra.mxu0 0.0
        %391 = vmatprep.subr.mxu0 0.0
        %392 = vmatpush2.msra.mxu0 0.0
        %393 = vmatprep.subr.mxu0 0.0
        %394 = vmatpush2.msra.mxu0 0.0
        %395 = vmatprep.subr.mxu0 0.0
        %396 = vmatpush2.msra.mxu0 0.0
        %397 = vmatprep.subr.mxu0 0.0
        %398 = vmatpush2.msra.mxu0 0.0
        %399 = vmatprep.subr.mxu0 0.0
        %400 = vmatpush2.msra.mxu0 0.0
        %401 = vmatprep.subr.mxu0 0.0
        %402 = vmatpush2.msra.mxu0 0.0
        %403 = vmatprep.subr.mxu0 0.0
        %404 = vmatpush2.msra.mxu0 0.0
        %405 = vmatprep.subr.mxu0 0.0
        %406 = vmatpush2.msra.mxu0 0.0
        %407 = vmatprep.subr.mxu0 0.0
        %408 = vmatpush2.msra.mxu0 0.0
        %409 = vmatprep.subr.mxu0 0.0
        %410 = vmatpush2.msra.mxu0 0.0
        %411 = vmatprep.subr.mxu0 0.0
        %412 = vmatpush2.msra.mxu0 0.0
        %413 = vmatprep.subr.mxu0 0.0
        %414 = vmatpush2.msra.mxu0 0.0
        %415 = vmatprep.subr.mxu0 0.0
        %416 = vmatpush2.msra.mxu0 0.0
        %417 = vmatprep.subr.mxu0 0.0
        %418 = vmatpush2.msra.mxu0 0.0
        %419 = vmatprep.mubr.f32.mxu0 0.0
        %v420 = vand.u32 %v253, 4294901760
        %421 = vmatmul.mubr.f32.gmra.mxu0 %v420
        %v422 = vpop.f32.mrf.mxu0
        %v423 = vadd.f32 %v332, %v422
        %v424 = vpop.f32.mrf.mxu0
        %425 = vmatprep.mubr.f32.mxu0 0.0
        %v426 = vand.u32 %v256, 4294901760
        %427 = vmatmul.mubr.f32.gmra.mxu0 %v426
        %v428 = vpop.f32.mrf.mxu0
        %v429 = vadd.f32 %v342, %v428
        %v430 = vpop.f32.mrf.mxu0
        %431 = vdwg.mxu0
        %432 = vmatprep.subr.mxu0 0.0
        %433 = vmatpush1.msra.mxu0 0.0
        %434 = vmatprep.subr.mxu0 0.0
        %435 = vmatpush1.msra.mxu0 0.0
        %436 = vmatprep.subr.mxu0 0.0
        %437 = vmatpush1.msra.mxu0 0.0
        %438 = vmatprep.subr.mxu0 0.0
        %439 = vmatpush1.msra.mxu0 0.0
        %440 = vmatprep.subr.mxu0 0.0
        %441 = vmatpush1.msra.mxu0 0.0
        %442 = vmatprep.subr.mxu0 0.0
        %443 = vmatpush1.msra.mxu0 0.0
        %444 = vmatprep.subr.mxu0 0.0
        %445 = vmatpush1.msra.mxu0 0.0
        %446 = vmatprep.subr.mxu0 0.0
        %447 = vmatpush1.msra.mxu0 0.0
        %448 = vmatprep.subr.mxu0 0.0
        %449 = vmatpush1.msra.mxu0 0.0
        %450 = vmatprep.subr.mxu0 0.0
        %451 = vmatpush1.msra.mxu0 0.0
        %452 = vmatprep.subr.mxu0 0.0
        %453 = vmatpush1.msra.mxu0 0.0
        %454 = vmatprep.subr.mxu0 0.0
        %455 = vmatpush1.msra.mxu0 0.0
        %456 = vmatprep.subr.mxu0 0.0
        %457 = vmatpush1.msra.mxu0 0.0
        %458 = vmatprep.subr.mxu0 0.0
        %459 = vmatpush1.msra.mxu0 0.0
        %460 = vmatprep.subr.mxu0 0.0
        %v461 = vand.u32 %v248, 4294901760
        %v462 = vsub.f32 %v248, %v461
        %463 = vmatpush1.msra.mxu0 %v462
        %464 = vmatprep.subr.mxu0 0.0
        %v465 = vand.u32 %v247, 4294901760
        %v466 = vsub.f32 %v247, %v465
        %467 = vmatpush1.msra.mxu0 %v466
        %468 = vmatprep.subr.mxu0 0.0
        %469 = vmatpush2.msra.mxu0 0.0
        %470 = vmatprep.subr.mxu0 0.0
        %471 = vmatpush2.msra.mxu0 0.0
        %472 = vmatprep.subr.mxu0 0.0
        %473 = vmatpush2.msra.mxu0 0.0
        %474 = vmatprep.subr.mxu0 0.0
        %475 = vmatpush2.msra.mxu0 0.0
        %476 = vmatprep.subr.mxu0 0.0
        %477 = vmatpush2.msra.mxu0 0.0
        %478 = vmatprep.subr.mxu0 0.0
        %479 = vmatpush2.msra.mxu0 0.0
        %480 = vmatprep.subr.mxu0 0.0
        %481 = vmatpush2.msra.mxu0 0.0
        %482 = vmatprep.subr.mxu0 0.0
        %483 = vmatpush2.msra.mxu0 0.0
        %484 = vmatprep.subr.mxu0 0.0
        %485 = vmatpush2.msra.mxu0 0.0
        %486 = vmatprep.subr.mxu0 0.0
        %487 = vmatpush2.msra.mxu0 0.0
        %488 = vmatprep.subr.mxu0 0.0
        %489 = vmatpush2.msra.mxu0 0.0
        %490 = vmatprep.subr.mxu0 0.0
        %491 = vmatpush2.msra.mxu0 0.0
        %492 = vmatprep.subr.mxu0 0.0
        %493 = vmatpush2.msra.mxu0 0.0
        %494 = vmatprep.subr.mxu0 0.0
        %495 = vmatpush2.msra.mxu0 0.0
        %496 = vmatprep.subr.mxu0 0.0
        %497 = vmatpush2.msra.mxu0 0.0
        %498 = vmatprep.subr.mxu0 0.0
        %499 = vmatpush2.msra.mxu0 0.0
        %500 = vmatprep.mubr.f32.mxu0 0.0
        %v501 = vand.u32 %v253, 4294901760
        %v502 = vsub.f32 %v253, %v501
        %503 = vmatmul.mubr.f32.gmra.mxu0 %v502
        %v504 = vpop.f32.mrf.mxu0
        %v505 = vadd.f32 %v423, %v504
        %v506 = vpop.f32.mrf.mxu0
        %507 = vmatprep.mubr.f32.mxu0 0.0
        %v508 = vand.u32 %v256, 4294901760
        %v509 = vsub.f32 %v256, %v508
        %510 = vmatmul.mubr.f32.gmra.mxu0 %v509
        %v511 = vpop.f32.mrf.mxu0
        %v512 = vadd.f32 %v429, %v511
        %v513 = vpop.f32.mrf.mxu0
        %514 = vdwg.mxu0
        %515 = vmatprep.subr.mxu0 0.0
        %516 = vmatpush1.msra.mxu0 0.0
        %517 = vmatprep.subr.mxu0 0.0
        %518 = vmatpush1.msra.mxu0 0.0
        %519 = vmatprep.subr.mxu0 0.0
        %520 = vmatpush1.msra.mxu0 0.0
        %521 = vmatprep.subr.mxu0 0.0
        %522 = vmatpush1.msra.mxu0 0.0
        %523 = vmatprep.subr.mxu0 0.0
        %524 = vmatpush1.msra.mxu0 0.0
        %525 = vmatprep.subr.mxu0 0.0
        %526 = vmatpush1.msra.mxu0 0.0
        %527 = vmatprep.subr.mxu0 0.0
        %528 = vmatpush1.msra.mxu0 0.0
        %529 = vmatprep.subr.mxu0 0.0
        %530 = vmatpush1.msra.mxu0 0.0
        %531 = vmatprep.subr.mxu0 0.0
        %532 = vmatpush1.msra.mxu0 0.0
        %533 = vmatprep.subr.mxu0 0.0
        %534 = vmatpush1.msra.mxu0 0.0
        %535 = vmatprep.subr.mxu0 0.0
        %536 = vmatpush1.msra.mxu0 0.0
        %537 = vmatprep.subr.mxu0 0.0
        %538 = vmatpush1.msra.mxu0 0.0
        %539 = vmatprep.subr.mxu0 0.0
        %540 = vmatpush1.msra.mxu0 0.0
        %541 = vmatprep.subr.mxu0 0.0
        %542 = vmatpush1.msra.mxu0 0.0
        %543 = vmatprep.subr.mxu0 0.0
        %v544 = vand.u32 %v248, 4294901760
        %545 = vmatpush1.msra.mxu0 %v544
        %546 = vmatprep.subr.mxu0 0.0
        %v547 = vand.u32 %v247, 4294901760
        %548 = vmatpush1.msra.mxu0 %v547
        %549 = vmatprep.subr.mxu0 0.0
        %550 = vmatpush2.msra.mxu0 0.0
        %551 = vmatprep.subr.mxu0 0.0
        %552 = vmatpush2.msra.mxu0 0.0
        %553 = vmatprep.subr.mxu0 0.0
        %554 = vmatpush2.msra.mxu0 0.0
        %555 = vmatprep.subr.mxu0 0.0
        %556 = vmatpush2.msra.mxu0 0.0
        %557 = vmatprep.subr.mxu0 0.0
        %558 = vmatpush2.msra.mxu0 0.0
        %559 = vmatprep.subr.mxu0 0.0
        %560 = vmatpush2.msra.mxu0 0.0
        %561 = vmatprep.subr.mxu0 0.0
        %562 = vmatpush2.msra.mxu0 0.0
        %563 = vmatprep.subr.mxu0 0.0
        %564 = vmatpush2.msra.mxu0 0.0
        %565 = vmatprep.subr.mxu0 0.0
        %566 = vmatpush2.msra.mxu0 0.0
        %567 = vmatprep.subr.mxu0 0.0
        %568 = vmatpush2.msra.mxu0 0.0
        %569 = vmatprep.subr.mxu0 0.0
        %570 = vmatpush2.msra.mxu0 0.0
        %571 = vmatprep.subr.mxu0 0.0
        %572 = vmatpush2.msra.mxu0 0.0
        %573 = vmatprep.subr.mxu0 0.0
        %574 = vmatpush2.msra.mxu0 0.0
        %575 = vmatprep.subr.mxu0 0.0
        %576 = vmatpush2.msra.mxu0 0.0
        %577 = vmatprep.subr.mxu0 0.0
        %578 = vmatpush2.msra.mxu0 0.0
        %579 = vmatprep.subr.mxu0 0.0
        %580 = vmatpush2.msra.mxu0 0.0
        %581 = vmatprep.mubr.f32.mxu0 0.0
        %v582 = vand.u32 %v253, 4294901760
        %v583 = vsub.f32 %v253, %v582
        %v584 = vand.u32 %v583, 4294901760
        %585 = vmatmul.mubr.f32.gmra.mxu0 %v584
        %v586 = vpop.f32.mrf.mxu0
        %v587 = vadd.f32 %v505, %v586
        %v588 = vpop.f32.mrf.mxu0
        %589 = vmatprep.mubr.f32.mxu0 0.0
        %v590 = vand.u32 %v256, 4294901760
        %v591 = vsub.f32 %v256, %v590
        %v592 = vand.u32 %v591, 4294901760
        %593 = vmatmul.mubr.f32.gmra.mxu0 %v592
        %v594 = vpop.f32.mrf.mxu0
        %v595 = vadd.f32 %v512, %v594
        %v596 = vpop.f32.mrf.mxu0
        %597 = vdwg.mxu0
        %598 = vmatprep.subr.mxu0 0.0
        %599 = vmatpush1.msra.mxu0 0.0
        %600 = vmatprep.subr.mxu0 0.0
        %601 = vmatpush1.msra.mxu0 0.0
        %602 = vmatprep.subr.mxu0 0.0
        %603 = vmatpush1.msra.mxu0 0.0
        %604 = vmatprep.subr.mxu0 0.0
        %605 = vmatpush1.msra.mxu0 0.0
        %606 = vmatprep.subr.mxu0 0.0
        %607 = vmatpush1.msra.mxu0 0.0
        %608 = vmatprep.subr.mxu0 0.0
        %609 = vmatpush1.msra.mxu0 0.0
        %610 = vmatprep.subr.mxu0 0.0
        %611 = vmatpush1.msra.mxu0 0.0
        %612 = vmatprep.subr.mxu0 0.0
        %613 = vmatpush1.msra.mxu0 0.0
        %614 = vmatprep.subr.mxu0 0.0
        %615 = vmatpush1.msra.mxu0 0.0
        %616 = vmatprep.subr.mxu0 0.0
        %617 = vmatpush1.msra.mxu0 0.0
        %618 = vmatprep.subr.mxu0 0.0
        %619 = vmatpush1.msra.mxu0 0.0
        %620 = vmatprep.subr.mxu0 0.0
        %621 = vmatpush1.msra.mxu0 0.0
        %622 = vmatprep.subr.mxu0 0.0
        %623 = vmatpush1.msra.mxu0 0.0
        %624 = vmatprep.subr.mxu0 0.0
        %625 = vmatpush1.msra.mxu0 0.0
        %626 = vmatprep.subr.mxu0 0.0
        %v627 = vand.u32 %v248, 4294901760
        %v628 = vsub.f32 %v248, %v627
        %v629 = vand.u32 %v628, 4294901760
        %630 = vmatpush1.msra.mxu0 %v629
        %631 = vmatprep.subr.mxu0 0.0
        %v632 = vand.u32 %v247, 4294901760
        %v633 = vsub.f32 %v247, %v632
        %v634 = vand.u32 %v633, 4294901760
        %635 = vmatpush1.msra.mxu0 %v634
        %636 = vmatprep.subr.mxu0 0.0
        %637 = vmatpush2.msra.mxu0 0.0
        %638 = vmatprep.subr.mxu0 0.0
        %639 = vmatpush2.msra.mxu0 0.0
        %640 = vmatprep.subr.mxu0 0.0
        %641 = vmatpush2.msra.mxu0 0.0
        %642 = vmatprep.subr.mxu0 0.0
        %643 = vmatpush2.msra.mxu0 0.0
        %644 = vmatprep.subr.mxu0 0.0
        %645 = vmatpush2.msra.mxu0 0.0
        %646 = vmatprep.subr.mxu0 0.0
        %647 = vmatpush2.msra.mxu0 0.0
        %648 = vmatprep.subr.mxu0 0.0
        %649 = vmatpush2.msra.mxu0 0.0
        %650 = vmatprep.subr.mxu0 0.0
        %651 = vmatpush2.msra.mxu0 0.0
        %652 = vmatprep.subr.mxu0 0.0
        %653 = vmatpush2.msra.mxu0 0.0
        %654 = vmatprep.subr.mxu0 0.0
        %655 = vmatpush2.msra.mxu0 0.0
        %656 = vmatprep.subr.mxu0 0.0
        %657 = vmatpush2.msra.mxu0 0.0
        %658 = vmatprep.subr.mxu0 0.0
        %659 = vmatpush2.msra.mxu0 0.0
        %660 = vmatprep.subr.mxu0 0.0
        %661 = vmatpush2.msra.mxu0 0.0
        %662 = vmatprep.subr.mxu0 0.0
        %663 = vmatpush2.msra.mxu0 0.0
        %664 = vmatprep.subr.mxu0 0.0
        %665 = vmatpush2.msra.mxu0 0.0
        %666 = vmatprep.subr.mxu0 0.0
        %667 = vmatpush2.msra.mxu0 0.0
        %668 = vmatprep.mubr.f32.mxu0 0.0
        %v669 = vand.u32 %v253, 4294901760
        %670 = vmatmul.mubr.f32.gmra.mxu0 %v669
        %v671 = vpop.f32.mrf.mxu0
        %v672 = vadd.f32 %v587, %v671
        %v673 = vpop.f32.mrf.mxu0
        %674 = vmatprep.mubr.f32.mxu0 0.0
        %v675 = vand.u32 %v256, 4294901760
        %676 = vmatmul.mubr.f32.gmra.mxu0 %v675
        %v677 = vpop.f32.mrf.mxu0
        %v678 = vadd.f32 %v595, %v677
        %v679 = vpop.f32.mrf.mxu0
        %680 = vdwg.mxu0
        %681 = vmatprep.subr.mxu0 0.0
        %682 = vmatpush1.msra.mxu0 0.0
        %683 = vmatprep.subr.mxu0 0.0
        %684 = vmatpush1.msra.mxu0 0.0
        %685 = vmatprep.subr.mxu0 0.0
        %686 = vmatpush1.msra.mxu0 0.0
        %687 = vmatprep.subr.mxu0 0.0
        %688 = vmatpush1.msra.mxu0 0.0
        %689 = vmatprep.subr.mxu0 0.0
        %690 = vmatpush1.msra.mxu0 0.0
        %691 = vmatprep.subr.mxu0 0.0
        %692 = vmatpush1.msra.mxu0 0.0
        %693 = vmatprep.subr.mxu0 0.0
        %694 = vmatpush1.msra.mxu0 0.0
        %695 = vmatprep.subr.mxu0 0.0
        %696 = vmatpush1.msra.mxu0 0.0
        %697 = vmatprep.subr.mxu0 0.0
        %698 = vmatpush1.msra.mxu0 0.0
        %699 = vmatprep.subr.mxu0 0.0
        %700 = vmatpush1.msra.mxu0 0.0
        %701 = vmatprep.subr.mxu0 0.0
        %702 = vmatpush1.msra.mxu0 0.0
        %703 = vmatprep.subr.mxu0 0.0
        %704 = vmatpush1.msra.mxu0 0.0
        %705 = vmatprep.subr.mxu0 0.0
        %706 = vmatpush1.msra.mxu0 0.0
        %707 = vmatprep.subr.mxu0 0.0
        %708 = vmatpush1.msra.mxu0 0.0
        %709 = vmatprep.subr.mxu0 0.0
        %v710 = vand.u32 %v248, 4294901760
        %711 = vmatpush1.msra.mxu0 %v710
        %712 = vmatprep.subr.mxu0 0.0
        %v713 = vand.u32 %v247, 4294901760
        %714 = vmatpush1.msra.mxu0 %v713
        %715 = vmatprep.subr.mxu0 0.0
        %716 = vmatpush2.msra.mxu0 0.0
        %717 = vmatprep.subr.mxu0 0.0
        %718 = vmatpush2.msra.mxu0 0.0
        %719 = vmatprep.subr.mxu0 0.0
        %720 = vmatpush2.msra.mxu0 0.0
        %721 = vmatprep.subr.mxu0 0.0
        %722 = vmatpush2.msra.mxu0 0.0
        %723 = vmatprep.subr.mxu0 0.0
        %724 = vmatpush2.msra.mxu0 0.0
        %725 = vmatprep.subr.mxu0 0.0
        %726 = vmatpush2.msra.mxu0 0.0
        %727 = vmatprep.subr.mxu0 0.0
        %728 = vmatpush2.msra.mxu0 0.0
        %729 = vmatprep.subr.mxu0 0.0
        %730 = vmatpush2.msra.mxu0 0.0
        %731 = vmatprep.subr.mxu0 0.0
        %732 = vmatpush2.msra.mxu0 0.0
        %733 = vmatprep.subr.mxu0 0.0
        %734 = vmatpush2.msra.mxu0 0.0
        %735 = vmatprep.subr.mxu0 0.0
        %736 = vmatpush2.msra.mxu0 0.0
        %737 = vmatprep.subr.mxu0 0.0
        %738 = vmatpush2.msra.mxu0 0.0
        %739 = vmatprep.subr.mxu0 0.0
        %740 = vmatpush2.msra.mxu0 0.0
        %741 = vmatprep.subr.mxu0 0.0
        %742 = vmatpush2.msra.mxu0 0.0
        %743 = vmatprep.subr.mxu0 0.0
        %744 = vmatpush2.msra.mxu0 0.0
        %745 = vmatprep.subr.mxu0 0.0
        %746 = vmatpush2.msra.mxu0 0.0
        %747 = vmatprep.mubr.f32.mxu0 0.0
        %v748 = vand.u32 %v253, 4294901760
        %749 = vmatmul.mubr.f32.gmra.mxu0 %v748
        %v750 = vpop.f32.mrf.mxu0
        %v751 = vadd.f32 %v672, %v750
        %v752 = vpop.f32.mrf.mxu0
        %753 = vmatprep.mubr.f32.mxu0 0.0
        %v754 = vand.u32 %v256, 4294901760
        %755 = vmatmul.mubr.f32.gmra.mxu0 %v754
        %v756 = vpop.f32.mrf.mxu0
        %v757 = vadd.f32 %v678, %v756
        %v758 = vpop.f32.mrf.mxu0
        %759 = vdwg.mxu0
        %v761 = vsel %vm251, %v241, 0
        %v764 = vsel %vm251, %v242, 0
        %766 = vmatprep.subr.mxu0 0.0
        %767 = vmatpush1.msra.mxu0 0.0
        %768 = vmatprep.subr.mxu0 0.0
        %769 = vmatpush1.msra.mxu0 0.0
        %770 = vmatprep.subr.mxu0 0.0
        %771 = vmatpush1.msra.mxu0 0.0
        %772 = vmatprep.subr.mxu0 0.0
        %773 = vmatpush1.msra.mxu0 0.0
        %774 = vmatprep.subr.mxu0 0.0
        %775 = vmatpush1.msra.mxu0 0.0
        %776 = vmatprep.subr.mxu0 0.0
        %777 = vmatpush1.msra.mxu0 0.0
        %778 = vmatprep.subr.mxu0 0.0
        %779 = vmatpush1.msra.mxu0 0.0
        %780 = vmatprep.subr.mxu0 0.0
        %781 = vmatpush1.msra.mxu0 0.0
        %782 = vmatprep.subr.mxu0 0.0
        %783 = vmatpush1.msra.mxu0 0.0
        %784 = vmatprep.subr.mxu0 0.0
        %785 = vmatpush1.msra.mxu0 0.0
        %786 = vmatprep.subr.mxu0 0.0
        %787 = vmatpush1.msra.mxu0 0.0
        %788 = vmatprep.subr.mxu0 0.0
        %789 = vmatpush1.msra.mxu0 0.0
        %790 = vmatprep.subr.mxu0 0.0
        %791 = vmatpush1.msra.mxu0 0.0
        %792 = vmatprep.subr.mxu0 0.0
        %793 = vmatpush1.msra.mxu0 0.0
        %794 = vmatprep.subr.mxu0 0.0
        %v795 = vand.u32 %v248, 4294901760
        %796 = vmatpush1.msra.mxu0 %v795
        %797 = vmatprep.subr.mxu0 0.0
        %v798 = vand.u32 %v247, 4294901760
        %799 = vmatpush1.msra.mxu0 %v798
        %800 = vmatprep.subr.mxu0 0.0
        %801 = vmatpush2.msra.mxu0 0.0
        %802 = vmatprep.subr.mxu0 0.0
        %803 = vmatpush2.msra.mxu0 0.0
        %804 = vmatprep.subr.mxu0 0.0
        %805 = vmatpush2.msra.mxu0 0.0
        %806 = vmatprep.subr.mxu0 0.0
        %807 = vmatpush2.msra.mxu0 0.0
        %808 = vmatprep.subr.mxu0 0.0
        %809 = vmatpush2.msra.mxu0 0.0
        %810 = vmatprep.subr.mxu0 0.0
        %811 = vmatpush2.msra.mxu0 0.0
        %812 = vmatprep.subr.mxu0 0.0
        %813 = vmatpush2.msra.mxu0 0.0
        %814 = vmatprep.subr.mxu0 0.0
        %815 = vmatpush2.msra.mxu0 0.0
        %816 = vmatprep.subr.mxu0 0.0
        %817 = vmatpush2.msra.mxu0 0.0
        %818 = vmatprep.subr.mxu0 0.0
        %819 = vmatpush2.msra.mxu0 0.0
        %820 = vmatprep.subr.mxu0 0.0
        %821 = vmatpush2.msra.mxu0 0.0
        %822 = vmatprep.subr.mxu0 0.0
        %823 = vmatpush2.msra.mxu0 0.0
        %824 = vmatprep.subr.mxu0 0.0
        %825 = vmatpush2.msra.mxu0 0.0
        %826 = vmatprep.subr.mxu0 0.0
        %827 = vmatpush2.msra.mxu0 0.0
        %828 = vmatprep.subr.mxu0 0.0
        %829 = vmatpush2.msra.mxu0 0.0
        %830 = vmatprep.subr.mxu0 0.0
        %831 = vmatpush2.msra.mxu0 0.0
        %832 = vmatprep.mubr.f32.mxu0 0.0
        %v833 = vand.u32 %v761, 4294901760
        %v834 = vsub.f32 %v761, %v833
        %v835 = vand.u32 %v834, 4294901760
        %v836 = vsub.f32 %v834, %v835
        %v837 = vand.u32 %v836, 4294901760
        %838 = vmatmul.mubr.f32.gmra.mxu0 %v837
        %v839 = vpop.f32.mrf.mxu0
        %v840 = vadd.f32 0.0, %v839
        %v841 = vpop.f32.mrf.mxu0
        %842 = vmatprep.mubr.f32.mxu0 0.0
        %v843 = vand.u32 %v764, 4294901760
        %v844 = vsub.f32 %v764, %v843
        %v845 = vand.u32 %v844, 4294901760
        %v846 = vsub.f32 %v844, %v845
        %v847 = vand.u32 %v846, 4294901760
        %848 = vmatmul.mubr.f32.gmra.mxu0 %v847
        %v849 = vpop.f32.mrf.mxu0
        %v850 = vadd.f32 0.0, %v849
        %v851 = vpop.f32.mrf.mxu0
        %852 = vdwg.mxu0
        %853 = vmatprep.subr.mxu0 0.0
        %854 = vmatpush1.msra.mxu0 0.0
        %855 = vmatprep.subr.mxu0 0.0
        %856 = vmatpush1.msra.mxu0 0.0
        %857 = vmatprep.subr.mxu0 0.0
        %858 = vmatpush1.msra.mxu0 0.0
        %859 = vmatprep.subr.mxu0 0.0
        %860 = vmatpush1.msra.mxu0 0.0
        %861 = vmatprep.subr.mxu0 0.0
        %862 = vmatpush1.msra.mxu0 0.0
        %863 = vmatprep.subr.mxu0 0.0
        %864 = vmatpush1.msra.mxu0 0.0
        %865 = vmatprep.subr.mxu0 0.0
        %866 = vmatpush1.msra.mxu0 0.0
        %867 = vmatprep.subr.mxu0 0.0
        %868 = vmatpush1.msra.mxu0 0.0
        %869 = vmatprep.subr.mxu0 0.0
        %870 = vmatpush1.msra.mxu0 0.0
        %871 = vmatprep.subr.mxu0 0.0
        %872 = vmatpush1.msra.mxu0 0.0
        %873 = vmatprep.subr.mxu0 0.0
        %874 = vmatpush1.msra.mxu0 0.0
        %875 = vmatprep.subr.mxu0 0.0
        %876 = vmatpush1.msra.mxu0 0.0
        %877 = vmatprep.subr.mxu0 0.0
        %878 = vmatpush1.msra.mxu0 0.0
        %879 = vmatprep.subr.mxu0 0.0
        %880 = vmatpush1.msra.mxu0 0.0
        %881 = vmatprep.subr.mxu0 0.0
        %v882 = vand.u32 %v248, 4294901760
        %v883 = vsub.f32 %v248, %v882
        %v884 = vand.u32 %v883, 4294901760
        %v885 = vsub.f32 %v883, %v884
        %v886 = vand.u32 %v885, 4294901760
        %887 = vmatpush1.msra.mxu0 %v886
        %888 = vmatprep.subr.mxu0 0.0
        %v889 = vand.u32 %v247, 4294901760
        %v890 = vsub.f32 %v247, %v889
        %v891 = vand.u32 %v890, 4294901760
        %v892 = vsub.f32 %v890, %v891
        %v893 = vand.u32 %v892, 4294901760
        %894 = vmatpush1.msra.mxu0 %v893
        %895 = vmatprep.subr.mxu0 0.0
        %896 = vmatpush2.msra.mxu0 0.0
        %897 = vmatprep.subr.mxu0 0.0
        %898 = vmatpush2.msra.mxu0 0.0
        %899 = vmatprep.subr.mxu0 0.0
        %900 = vmatpush2.msra.mxu0 0.0
        %901 = vmatprep.subr.mxu0 0.0
        %902 = vmatpush2.msra.mxu0 0.0
        %903 = vmatprep.subr.mxu0 0.0
        %904 = vmatpush2.msra.mxu0 0.0
        %905 = vmatprep.subr.mxu0 0.0
        %906 = vmatpush2.msra.mxu0 0.0
        %907 = vmatprep.subr.mxu0 0.0
        %908 = vmatpush2.msra.mxu0 0.0
        %909 = vmatprep.subr.mxu0 0.0
        %910 = vmatpush2.msra.mxu0 0.0
        %911 = vmatprep.subr.mxu0 0.0
        %912 = vmatpush2.msra.mxu0 0.0
        %913 = vmatprep.subr.mxu0 0.0
        %914 = vmatpush2.msra.mxu0 0.0
        %915 = vmatprep.subr.mxu0 0.0
        %916 = vmatpush2.msra.mxu0 0.0
        %917 = vmatprep.subr.mxu0 0.0
        %918 = vmatpush2.msra.mxu0 0.0
        %919 = vmatprep.subr.mxu0 0.0
        %920 = vmatpush2.msra.mxu0 0.0
        %921 = vmatprep.subr.mxu0 0.0
        %922 = vmatpush2.msra.mxu0 0.0
        %923 = vmatprep.subr.mxu0 0.0
        %924 = vmatpush2.msra.mxu0 0.0
        %925 = vmatprep.subr.mxu0 0.0
        %926 = vmatpush2.msra.mxu0 0.0
        %927 = vmatprep.mubr.f32.mxu0 0.0
        %v928 = vand.u32 %v761, 4294901760
        %929 = vmatmul.mubr.f32.gmra.mxu0 %v928
        %v930 = vpop.f32.mrf.mxu0
        %v931 = vadd.f32 %v840, %v930
        %v932 = vpop.f32.mrf.mxu0
        %933 = vmatprep.mubr.f32.mxu0 0.0
        %v934 = vand.u32 %v764, 4294901760
        %935 = vmatmul.mubr.f32.gmra.mxu0 %v934
        %v936 = vpop.f32.mrf.mxu0
        %v937 = vadd.f32 %v850, %v936
        %v938 = vpop.f32.mrf.mxu0
        %939 = vdwg.mxu0
        %940 = vmatprep.subr.mxu0 0.0
        %941 = vmatpush1.msra.mxu0 0.0
        %942 = vmatprep.subr.mxu0 0.0
        %943 = vmatpush1.msra.mxu0 0.0
        %944 = vmatprep.subr.mxu0 0.0
        %945 = vmatpush1.msra.mxu0 0.0
        %946 = vmatprep.subr.mxu0 0.0
        %947 = vmatpush1.msra.mxu0 0.0
        %948 = vmatprep.subr.mxu0 0.0
        %949 = vmatpush1.msra.mxu0 0.0
        %950 = vmatprep.subr.mxu0 0.0
        %951 = vmatpush1.msra.mxu0 0.0
        %952 = vmatprep.subr.mxu0 0.0
        %953 = vmatpush1.msra.mxu0 0.0
        %954 = vmatprep.subr.mxu0 0.0
        %955 = vmatpush1.msra.mxu0 0.0
        %956 = vmatprep.subr.mxu0 0.0
        %957 = vmatpush1.msra.mxu0 0.0
        %958 = vmatprep.subr.mxu0 0.0
        %959 = vmatpush1.msra.mxu0 0.0
        %960 = vmatprep.subr.mxu0 0.0
        %961 = vmatpush1.msra.mxu0 0.0
        %962 = vmatprep.subr.mxu0 0.0
        %963 = vmatpush1.msra.mxu0 0.0
        %964 = vmatprep.subr.mxu0 0.0
        %965 = vmatpush1.msra.mxu0 0.0
        %966 = vmatprep.subr.mxu0 0.0
        %967 = vmatpush1.msra.mxu0 0.0
        %968 = vmatprep.subr.mxu0 0.0
        %v969 = vand.u32 %v248, 4294901760
        %v970 = vsub.f32 %v248, %v969
        %971 = vmatpush1.msra.mxu0 %v970
        %972 = vmatprep.subr.mxu0 0.0
        %v973 = vand.u32 %v247, 4294901760
        %v974 = vsub.f32 %v247, %v973
        %975 = vmatpush1.msra.mxu0 %v974
        %976 = vmatprep.subr.mxu0 0.0
        %977 = vmatpush2.msra.mxu0 0.0
        %978 = vmatprep.subr.mxu0 0.0
        %979 = vmatpush2.msra.mxu0 0.0
        %980 = vmatprep.subr.mxu0 0.0
        %981 = vmatpush2.msra.mxu0 0.0
        %982 = vmatprep.subr.mxu0 0.0
        %983 = vmatpush2.msra.mxu0 0.0
        %984 = vmatprep.subr.mxu0 0.0
        %985 = vmatpush2.msra.mxu0 0.0
        %986 = vmatprep.subr.mxu0 0.0
        %987 = vmatpush2.msra.mxu0 0.0
        %988 = vmatprep.subr.mxu0 0.0
        %989 = vmatpush2.msra.mxu0 0.0
        %990 = vmatprep.subr.mxu0 0.0
        %991 = vmatpush2.msra.mxu0 0.0
        %992 = vmatprep.subr.mxu0 0.0
        %993 = vmatpush2.msra.mxu0 0.0
        %994 = vmatprep.subr.mxu0 0.0
        %995 = vmatpush2.msra.mxu0 0.0
        %996 = vmatprep.subr.mxu0 0.0
        %997 = vmatpush2.msra.mxu0 0.0
        %998 = vmatprep.subr.mxu0 0.0
        %999 = vmatpush2.msra.mxu0 0.0
        %1000 = vmatprep.subr.mxu0 0.0
        %1001 = vmatpush2.msra.mxu0 0.0
        %1002 = vmatprep.subr.mxu0 0.0
        %1003 = vmatpush2.msra.mxu0 0.0
        %1004 = vmatprep.subr.mxu0 0.0
        %1005 = vmatpush2.msra.mxu0 0.0
        %1006 = vmatprep.subr.mxu0 0.0
        %1007 = vmatpush2.msra.mxu0 0.0
        %1008 = vmatprep.mubr.f32.mxu0 0.0
        %v1009 = vand.u32 %v761, 4294901760
        %v1010 = vsub.f32 %v761, %v1009
        %1011 = vmatmul.mubr.f32.gmra.mxu0 %v1010
        %v1012 = vpop.f32.mrf.mxu0
        %v1013 = vadd.f32 %v931, %v1012
        %v1014 = vpop.f32.mrf.mxu0
        %1015 = vmatprep.mubr.f32.mxu0 0.0
        %v1016 = vand.u32 %v764, 4294901760
        %v1017 = vsub.f32 %v764, %v1016
        %1018 = vmatmul.mubr.f32.gmra.mxu0 %v1017
        %v1019 = vpop.f32.mrf.mxu0
        %v1020 = vadd.f32 %v937, %v1019
        %v1021 = vpop.f32.mrf.mxu0
        %1022 = vdwg.mxu0
        %1023 = vmatprep.subr.mxu0 0.0
        %1024 = vmatpush1.msra.mxu0 0.0
        %1025 = vmatprep.subr.mxu0 0.0
        %1026 = vmatpush1.msra.mxu0 0.0
        %1027 = vmatprep.subr.mxu0 0.0
        %1028 = vmatpush1.msra.mxu0 0.0
        %1029 = vmatprep.subr.mxu0 0.0
        %1030 = vmatpush1.msra.mxu0 0.0
        %1031 = vmatprep.subr.mxu0 0.0
        %1032 = vmatpush1.msra.mxu0 0.0
        %1033 = vmatprep.subr.mxu0 0.0
        %1034 = vmatpush1.msra.mxu0 0.0
        %1035 = vmatprep.subr.mxu0 0.0
        %1036 = vmatpush1.msra.mxu0 0.0
        %1037 = vmatprep.subr.mxu0 0.0
        %1038 = vmatpush1.msra.mxu0 0.0
        %1039 = vmatprep.subr.mxu0 0.0
        %1040 = vmatpush1.msra.mxu0 0.0
        %1041 = vmatprep.subr.mxu0 0.0
        %1042 = vmatpush1.msra.mxu0 0.0
        %1043 = vmatprep.subr.mxu0 0.0
        %1044 = vmatpush1.msra.mxu0 0.0
        %1045 = vmatprep.subr.mxu0 0.0
        %1046 = vmatpush1.msra.mxu0 0.0
        %1047 = vmatprep.subr.mxu0 0.0
        %1048 = vmatpush1.msra.mxu0 0.0
        %1049 = vmatprep.subr.mxu0 0.0
        %1050 = vmatpush1.msra.mxu0 0.0
        %1051 = vmatprep.subr.mxu0 0.0
        %v1052 = vand.u32 %v248, 4294901760
        %1053 = vmatpush1.msra.mxu0 %v1052
        %1054 = vmatprep.subr.mxu0 0.0
        %v1055 = vand.u32 %v247, 4294901760
        %1056 = vmatpush1.msra.mxu0 %v1055
        %1057 = vmatprep.subr.mxu0 0.0
        %1058 = vmatpush2.msra.mxu0 0.0
        %1059 = vmatprep.subr.mxu0 0.0
        %1060 = vmatpush2.msra.mxu0 0.0
        %1061 = vmatprep.subr.mxu0 0.0
        %1062 = vmatpush2.msra.mxu0 0.0
        %1063 = vmatprep.subr.mxu0 0.0
        %1064 = vmatpush2.msra.mxu0 0.0
        %1065 = vmatprep.subr.mxu0 0.0
        %1066 = vmatpush2.msra.mxu0 0.0
        %1067 = vmatprep.subr.mxu0 0.0
        %1068 = vmatpush2.msra.mxu0 0.0
        %1069 = vmatprep.subr.mxu0 0.0
        %1070 = vmatpush2.msra.mxu0 0.0
        %1071 = vmatprep.subr.mxu0 0.0
        %1072 = vmatpush2.msra.mxu0 0.0
        %1073 = vmatprep.subr.mxu0 0.0
        %1074 = vmatpush2.msra.mxu0 0.0
        %1075 = vmatprep.subr.mxu0 0.0
        %1076 = vmatpush2.msra.mxu0 0.0
        %1077 = vmatprep.subr.mxu0 0.0
        %1078 = vmatpush2.msra.mxu0 0.0
        %1079 = vmatprep.subr.mxu0 0.0
        %1080 = vmatpush2.msra.mxu0 0.0
        %1081 = vmatprep.subr.mxu0 0.0
        %1082 = vmatpush2.msra.mxu0 0.0
        %1083 = vmatprep.subr.mxu0 0.0
        %1084 = vmatpush2.msra.mxu0 0.0
        %1085 = vmatprep.subr.mxu0 0.0
        %1086 = vmatpush2.msra.mxu0 0.0
        %1087 = vmatprep.subr.mxu0 0.0
        %1088 = vmatpush2.msra.mxu0 0.0
        %1089 = vmatprep.mubr.f32.mxu0 0.0
        %v1090 = vand.u32 %v761, 4294901760
        %v1091 = vsub.f32 %v761, %v1090
        %v1092 = vand.u32 %v1091, 4294901760
        %1093 = vmatmul.mubr.f32.gmra.mxu0 %v1092
        %v1094 = vpop.f32.mrf.mxu0
        %v1095 = vadd.f32 %v1013, %v1094
        %v1096 = vpop.f32.mrf.mxu0
        %1097 = vmatprep.mubr.f32.mxu0 0.0
        %v1098 = vand.u32 %v764, 4294901760
        %v1099 = vsub.f32 %v764, %v1098
        %v1100 = vand.u32 %v1099, 4294901760
        %1101 = vmatmul.mubr.f32.gmra.mxu0 %v1100
        %v1102 = vpop.f32.mrf.mxu0
        %v1103 = vadd.f32 %v1020, %v1102
        %v1104 = vpop.f32.mrf.mxu0
        %1105 = vdwg.mxu0
        %1106 = vmatprep.subr.mxu0 0.0
        %1107 = vmatpush1.msra.mxu0 0.0
        %1108 = vmatprep.subr.mxu0 0.0
        %1109 = vmatpush1.msra.mxu0 0.0
        %1110 = vmatprep.subr.mxu0 0.0
        %1111 = vmatpush1.msra.mxu0 0.0
        %1112 = vmatprep.subr.mxu0 0.0
        %1113 = vmatpush1.msra.mxu0 0.0
        %1114 = vmatprep.subr.mxu0 0.0
        %1115 = vmatpush1.msra.mxu0 0.0
        %1116 = vmatprep.subr.mxu0 0.0
        %1117 = vmatpush1.msra.mxu0 0.0
        %1118 = vmatprep.subr.mxu0 0.0
        %1119 = vmatpush1.msra.mxu0 0.0
        %1120 = vmatprep.subr.mxu0 0.0
        %1121 = vmatpush1.msra.mxu0 0.0
        %1122 = vmatprep.subr.mxu0 0.0
        %1123 = vmatpush1.msra.mxu0 0.0
        %1124 = vmatprep.subr.mxu0 0.0
        %1125 = vmatpush1.msra.mxu0 0.0
        %1126 = vmatprep.subr.mxu0 0.0
        %1127 = vmatpush1.msra.mxu0 0.0
        %1128 = vmatprep.subr.mxu0 0.0
        %1129 = vmatpush1.msra.mxu0 0.0
        %1130 = vmatprep.subr.mxu0 0.0
        %1131 = vmatpush1.msra.mxu0 0.0
        %1132 = vmatprep.subr.mxu0 0.0
        %1133 = vmatpush1.msra.mxu0 0.0
        %1134 = vmatprep.subr.mxu0 0.0
        %v1135 = vand.u32 %v248, 4294901760
        %v1136 = vsub.f32 %v248, %v1135
        %v1137 = vand.u32 %v1136, 4294901760
        %1138 = vmatpush1.msra.mxu0 %v1137
        %1139 = vmatprep.subr.mxu0 0.0
        %v1140 = vand.u32 %v247, 4294901760
        %v1141 = vsub.f32 %v247, %v1140
        %v1142 = vand.u32 %v1141, 4294901760
        %1143 = vmatpush1.msra.mxu0 %v1142
        %1144 = vmatprep.subr.mxu0 0.0
        %1145 = vmatpush2.msra.mxu0 0.0
        %1146 = vmatprep.subr.mxu0 0.0
        %1147 = vmatpush2.msra.mxu0 0.0
        %1148 = vmatprep.subr.mxu0 0.0
        %1149 = vmatpush2.msra.mxu0 0.0
        %1150 = vmatprep.subr.mxu0 0.0
        %1151 = vmatpush2.msra.mxu0 0.0
        %1152 = vmatprep.subr.mxu0 0.0
        %1153 = vmatpush2.msra.mxu0 0.0
        %1154 = vmatprep.subr.mxu0 0.0
        %1155 = vmatpush2.msra.mxu0 0.0
        %1156 = vmatprep.subr.mxu0 0.0
        %1157 = vmatpush2.msra.mxu0 0.0
        %1158 = vmatprep.subr.mxu0 0.0
        %1159 = vmatpush2.msra.mxu0 0.0
        %1160 = vmatprep.subr.mxu0 0.0
        %1161 = vmatpush2.msra.mxu0 0.0
        %1162 = vmatprep.subr.mxu0 0.0
        %1163 = vmatpush2.msra.mxu0 0.0
        %1164 = vmatprep.subr.mxu0 0.0
        %1165 = vmatpush2.msra.mxu0 0.0
        %1166 = vmatprep.subr.mxu0 0.0
        %1167 = vmatpush2.msra.mxu0 0.0
        %1168 = vmatprep.subr.mxu0 0.0
        %1169 = vmatpush2.msra.mxu0 0.0
        %1170 = vmatprep.subr.mxu0 0.0
        %1171 = vmatpush2.msra.mxu0 0.0
        %1172 = vmatprep.subr.mxu0 0.0
        %1173 = vmatpush2.msra.mxu0 0.0
        %1174 = vmatprep.subr.mxu0 0.0
        %1175 = vmatpush2.msra.mxu0 0.0
        %1176 = vmatprep.mubr.f32.mxu0 0.0
        %v1177 = vand.u32 %v761, 4294901760
        %1178 = vmatmul.mubr.f32.gmra.mxu0 %v1177
        %v1179 = vpop.f32.mrf.mxu0
        %v1180 = vadd.f32 %v1095, %v1179
        %v1181 = vpop.f32.mrf.mxu0
        %1182 = vmatprep.mubr.f32.mxu0 0.0
        %v1183 = vand.u32 %v764, 4294901760
        %1184 = vmatmul.mubr.f32.gmra.mxu0 %v1183
        %v1185 = vpop.f32.mrf.mxu0
        %v1186 = vadd.f32 %v1103, %v1185
        %v1187 = vpop.f32.mrf.mxu0
        %1188 = vdwg.mxu0
        %1189 = vmatprep.subr.mxu0 0.0
        %1190 = vmatpush1.msra.mxu0 0.0
        %1191 = vmatprep.subr.mxu0 0.0
        %1192 = vmatpush1.msra.mxu0 0.0
        %1193 = vmatprep.subr.mxu0 0.0
        %1194 = vmatpush1.msra.mxu0 0.0
        %1195 = vmatprep.subr.mxu0 0.0
        %1196 = vmatpush1.msra.mxu0 0.0
        %1197 = vmatprep.subr.mxu0 0.0
        %1198 = vmatpush1.msra.mxu0 0.0
        %1199 = vmatprep.subr.mxu0 0.0
        %1200 = vmatpush1.msra.mxu0 0.0
        %1201 = vmatprep.subr.mxu0 0.0
        %1202 = vmatpush1.msra.mxu0 0.0
        %1203 = vmatprep.subr.mxu0 0.0
        %1204 = vmatpush1.msra.mxu0 0.0
        %1205 = vmatprep.subr.mxu0 0.0
        %1206 = vmatpush1.msra.mxu0 0.0
        %1207 = vmatprep.subr.mxu0 0.0
        %1208 = vmatpush1.msra.mxu0 0.0
        %1209 = vmatprep.subr.mxu0 0.0
        %1210 = vmatpush1.msra.mxu0 0.0
        %1211 = vmatprep.subr.mxu0 0.0
        %1212 = vmatpush1.msra.mxu0 0.0
        %1213 = vmatprep.subr.mxu0 0.0
        %1214 = vmatpush1.msra.mxu0 0.0
        %1215 = vmatprep.subr.mxu0 0.0
        %1216 = vmatpush1.msra.mxu0 0.0
        %1217 = vmatprep.subr.mxu0 0.0
        %v1218 = vand.u32 %v248, 4294901760
        %1219 = vmatpush1.msra.mxu0 %v1218
        %1220 = vmatprep.subr.mxu0 0.0
        %v1221 = vand.u32 %v247, 4294901760
        %1222 = vmatpush1.msra.mxu0 %v1221
        %1223 = vmatprep.subr.mxu0 0.0
        %1224 = vmatpush2.msra.mxu0 0.0
        %1225 = vmatprep.subr.mxu0 0.0
        %1226 = vmatpush2.msra.mxu0 0.0
        %1227 = vmatprep.subr.mxu0 0.0
        %1228 = vmatpush2.msra.mxu0 0.0
        %1229 = vmatprep.subr.mxu0 0.0
        %1230 = vmatpush2.msra.mxu0 0.0
        %1231 = vmatprep.subr.mxu0 0.0
        %1232 = vmatpush2.msra.mxu0 0.0
        %1233 = vmatprep.subr.mxu0 0.0
        %1234 = vmatpush2.msra.mxu0 0.0
        %1235 = vmatprep.subr.mxu0 0.0
        %1236 = vmatpush2.msra.mxu0 0.0
        %1237 = vmatprep.subr.mxu0 0.0
        %1238 = vmatpush2.msra.mxu0 0.0
        %1239 = vmatprep.subr.mxu0 0.0
        %1240 = vmatpush2.msra.mxu0 0.0
        %1241 = vmatprep.subr.mxu0 0.0
        %1242 = vmatpush2.msra.mxu0 0.0
        %1243 = vmatprep.subr.mxu0 0.0
        %1244 = vmatpush2.msra.mxu0 0.0
        %1245 = vmatprep.subr.mxu0 0.0
        %1246 = vmatpush2.msra.mxu0 0.0
        %1247 = vmatprep.subr.mxu0 0.0
        %1248 = vmatpush2.msra.mxu0 0.0
        %1249 = vmatprep.subr.mxu0 0.0
        %1250 = vmatpush2.msra.mxu0 0.0
        %1251 = vmatprep.subr.mxu0 0.0
        %1252 = vmatpush2.msra.mxu0 0.0
        %1253 = vmatprep.subr.mxu0 0.0
        %1254 = vmatpush2.msra.mxu0 0.0
        %1255 = vmatprep.mubr.f32.mxu0 0.0
        %v1256 = vand.u32 %v761, 4294901760
        %1257 = vmatmul.mubr.f32.gmra.mxu0 %v1256
        %v1258 = vpop.f32.mrf.mxu0
        %v1259 = vadd.f32 %v1180, %v1258
        %v1260 = vpop.f32.mrf.mxu0
        %1261 = vmatprep.mubr.f32.mxu0 0.0
        %v1262 = vand.u32 %v764, 4294901760
        %1263 = vmatmul.mubr.f32.gmra.mxu0 %v1262
        %v1264 = vpop.f32.mrf.mxu0
        %v1265 = vadd.f32 %v1186, %v1264
        %v1266 = vpop.f32.mrf.mxu0
        %1267 = vdwg.mxu0
        %v1269 = vsel %vm251, %v243, 0
        %v1272 = vsel %vm251, %v244, 0
        %1274 = vmatprep.subr.mxu0 0.0
        %1275 = vmatpush1.msra.mxu0 0.0
        %1276 = vmatprep.subr.mxu0 0.0
        %1277 = vmatpush1.msra.mxu0 0.0
        %1278 = vmatprep.subr.mxu0 0.0
        %1279 = vmatpush1.msra.mxu0 0.0
        %1280 = vmatprep.subr.mxu0 0.0
        %1281 = vmatpush1.msra.mxu0 0.0
        %1282 = vmatprep.subr.mxu0 0.0
        %1283 = vmatpush1.msra.mxu0 0.0
        %1284 = vmatprep.subr.mxu0 0.0
        %1285 = vmatpush1.msra.mxu0 0.0
        %1286 = vmatprep.subr.mxu0 0.0
        %1287 = vmatpush1.msra.mxu0 0.0
        %1288 = vmatprep.subr.mxu0 0.0
        %1289 = vmatpush1.msra.mxu0 0.0
        %1290 = vmatprep.subr.mxu0 0.0
        %1291 = vmatpush1.msra.mxu0 0.0
        %1292 = vmatprep.subr.mxu0 0.0
        %1293 = vmatpush1.msra.mxu0 0.0
        %1294 = vmatprep.subr.mxu0 0.0
        %1295 = vmatpush1.msra.mxu0 0.0
        %1296 = vmatprep.subr.mxu0 0.0
        %1297 = vmatpush1.msra.mxu0 0.0
        %1298 = vmatprep.subr.mxu0 0.0
        %1299 = vmatpush1.msra.mxu0 0.0
        %1300 = vmatprep.subr.mxu0 0.0
        %1301 = vmatpush1.msra.mxu0 0.0
        %1302 = vmatprep.subr.mxu0 0.0
        %v1303 = vand.u32 %v248, 4294901760
        %1304 = vmatpush1.msra.mxu0 %v1303
        %1305 = vmatprep.subr.mxu0 0.0
        %v1306 = vand.u32 %v247, 4294901760
        %1307 = vmatpush1.msra.mxu0 %v1306
        %1308 = vmatprep.subr.mxu0 0.0
        %1309 = vmatpush2.msra.mxu0 0.0
        %1310 = vmatprep.subr.mxu0 0.0
        %1311 = vmatpush2.msra.mxu0 0.0
        %1312 = vmatprep.subr.mxu0 0.0
        %1313 = vmatpush2.msra.mxu0 0.0
        %1314 = vmatprep.subr.mxu0 0.0
        %1315 = vmatpush2.msra.mxu0 0.0
        %1316 = vmatprep.subr.mxu0 0.0
        %1317 = vmatpush2.msra.mxu0 0.0
        %1318 = vmatprep.subr.mxu0 0.0
        %1319 = vmatpush2.msra.mxu0 0.0
        %1320 = vmatprep.subr.mxu0 0.0
        %1321 = vmatpush2.msra.mxu0 0.0
        %1322 = vmatprep.subr.mxu0 0.0
        %1323 = vmatpush2.msra.mxu0 0.0
        %1324 = vmatprep.subr.mxu0 0.0
        %1325 = vmatpush2.msra.mxu0 0.0
        %1326 = vmatprep.subr.mxu0 0.0
        %1327 = vmatpush2.msra.mxu0 0.0
        %1328 = vmatprep.subr.mxu0 0.0
        %1329 = vmatpush2.msra.mxu0 0.0
        %1330 = vmatprep.subr.mxu0 0.0
        %1331 = vmatpush2.msra.mxu0 0.0
        %1332 = vmatprep.subr.mxu0 0.0
        %1333 = vmatpush2.msra.mxu0 0.0
        %1334 = vmatprep.subr.mxu0 0.0
        %1335 = vmatpush2.msra.mxu0 0.0
        %1336 = vmatprep.subr.mxu0 0.0
        %1337 = vmatpush2.msra.mxu0 0.0
        %1338 = vmatprep.subr.mxu0 0.0
        %1339 = vmatpush2.msra.mxu0 0.0
        %1340 = vmatprep.mubr.f32.mxu0 0.0
        %v1341 = vand.u32 %v1269, 4294901760
        %v1342 = vsub.f32 %v1269, %v1341
        %v1343 = vand.u32 %v1342, 4294901760
        %v1344 = vsub.f32 %v1342, %v1343
        %v1345 = vand.u32 %v1344, 4294901760
        %1346 = vmatmul.mubr.f32.gmra.mxu0 %v1345
        %v1347 = vpop.f32.mrf.mxu0
        %v1348 = vadd.f32 0.0, %v1347
        %v1349 = vpop.f32.mrf.mxu0
        %1350 = vmatprep.mubr.f32.mxu0 0.0
        %v1351 = vand.u32 %v1272, 4294901760
        %v1352 = vsub.f32 %v1272, %v1351
        %v1353 = vand.u32 %v1352, 4294901760
        %v1354 = vsub.f32 %v1352, %v1353
        %v1355 = vand.u32 %v1354, 4294901760
        %1356 = vmatmul.mubr.f32.gmra.mxu0 %v1355
        %v1357 = vpop.f32.mrf.mxu0
        %v1358 = vadd.f32 0.0, %v1357
        %v1359 = vpop.f32.mrf.mxu0
        %1360 = vdwg.mxu0
        %1361 = vmatprep.subr.mxu0 0.0
        %1362 = vmatpush1.msra.mxu0 0.0
        %1363 = vmatprep.subr.mxu0 0.0
        %1364 = vmatpush1.msra.mxu0 0.0
        %1365 = vmatprep.subr.mxu0 0.0
        %1366 = vmatpush1.msra.mxu0 0.0
        %1367 = vmatprep.subr.mxu0 0.0
        %1368 = vmatpush1.msra.mxu0 0.0
        %1369 = vmatprep.subr.mxu0 0.0
        %1370 = vmatpush1.msra.mxu0 0.0
        %1371 = vmatprep.subr.mxu0 0.0
        %1372 = vmatpush1.msra.mxu0 0.0
        %1373 = vmatprep.subr.mxu0 0.0
        %1374 = vmatpush1.msra.mxu0 0.0
        %1375 = vmatprep.subr.mxu0 0.0
        %1376 = vmatpush1.msra.mxu0 0.0
        %1377 = vmatprep.subr.mxu0 0.0
        %1378 = vmatpush1.msra.mxu0 0.0
        %1379 = vmatprep.subr.mxu0 0.0
        %1380 = vmatpush1.msra.mxu0 0.0
        %1381 = vmatprep.subr.mxu0 0.0
        %1382 = vmatpush1.msra.mxu0 0.0
        %1383 = vmatprep.subr.mxu0 0.0
        %1384 = vmatpush1.msra.mxu0 0.0
        %1385 = vmatprep.subr.mxu0 0.0
        %1386 = vmatpush1.msra.mxu0 0.0
        %1387 = vmatprep.subr.mxu0 0.0
        %1388 = vmatpush1.msra.mxu0 0.0
        %1389 = vmatprep.subr.mxu0 0.0
        %v1390 = vand.u32 %v248, 4294901760
        %v1391 = vsub.f32 %v248, %v1390
        %v1392 = vand.u32 %v1391, 4294901760
        %v1393 = vsub.f32 %v1391, %v1392
        %v1394 = vand.u32 %v1393, 4294901760
        %1395 = vmatpush1.msra.mxu0 %v1394
        %1396 = vmatprep.subr.mxu0 0.0
        %v1397 = vand.u32 %v247, 4294901760
        %v1398 = vsub.f32 %v247, %v1397
        %v1399 = vand.u32 %v1398, 4294901760
        %v1400 = vsub.f32 %v1398, %v1399
        %v1401 = vand.u32 %v1400, 4294901760
        %1402 = vmatpush1.msra.mxu0 %v1401
        %1403 = vmatprep.subr.mxu0 0.0
        %1404 = vmatpush2.msra.mxu0 0.0
        %1405 = vmatprep.subr.mxu0 0.0
        %1406 = vmatpush2.msra.mxu0 0.0
        %1407 = vmatprep.subr.mxu0 0.0
        %1408 = vmatpush2.msra.mxu0 0.0
        %1409 = vmatprep.subr.mxu0 0.0
        %1410 = vmatpush2.msra.mxu0 0.0
        %1411 = vmatprep.subr.mxu0 0.0
        %1412 = vmatpush2.msra.mxu0 0.0
        %1413 = vmatprep.subr.mxu0 0.0
        %1414 = vmatpush2.msra.mxu0 0.0
        %1415 = vmatprep.subr.mxu0 0.0
        %1416 = vmatpush2.msra.mxu0 0.0
        %1417 = vmatprep.subr.mxu0 0.0
        %1418 = vmatpush2.msra.mxu0 0.0
        %1419 = vmatprep.subr.mxu0 0.0
        %1420 = vmatpush2.msra.mxu0 0.0
        %1421 = vmatprep.subr.mxu0 0.0
        %1422 = vmatpush2.msra.mxu0 0.0
        %1423 = vmatprep.subr.mxu0 0.0
        %1424 = vmatpush2.msra.mxu0 0.0
        %1425 = vmatprep.subr.mxu0 0.0
        %1426 = vmatpush2.msra.mxu0 0.0
        %1427 = vmatprep.subr.mxu0 0.0
        %1428 = vmatpush2.msra.mxu0 0.0
        %1429 = vmatprep.subr.mxu0 0.0
        %1430 = vmatpush2.msra.mxu0 0.0
        %1431 = vmatprep.subr.mxu0 0.0
        %1432 = vmatpush2.msra.mxu0 0.0
        %1433 = vmatprep.subr.mxu0 0.0
        %1434 = vmatpush2.msra.mxu0 0.0
        %1435 = vmatprep.mubr.f32.mxu0 0.0
        %v1436 = vand.u32 %v1269, 4294901760
        %1437 = vmatmul.mubr.f32.gmra.mxu0 %v1436
        %v1438 = vpop.f32.mrf.mxu0
        %v1439 = vadd.f32 %v1348, %v1438
        %v1440 = vpop.f32.mrf.mxu0
        %1441 = vmatprep.mubr.f32.mxu0 0.0
        %v1442 = vand.u32 %v1272, 4294901760
        %1443 = vmatmul.mubr.f32.gmra.mxu0 %v1442
        %v1444 = vpop.f32.mrf.mxu0
        %v1445 = vadd.f32 %v1358, %v1444
        %v1446 = vpop.f32.mrf.mxu0
        %1447 = vdwg.mxu0
        %1448 = vmatprep.subr.mxu0 0.0
        %1449 = vmatpush1.msra.mxu0 0.0
        %1450 = vmatprep.subr.mxu0 0.0
        %1451 = vmatpush1.msra.mxu0 0.0
        %1452 = vmatprep.subr.mxu0 0.0
        %1453 = vmatpush1.msra.mxu0 0.0
        %1454 = vmatprep.subr.mxu0 0.0
        %1455 = vmatpush1.msra.mxu0 0.0
        %1456 = vmatprep.subr.mxu0 0.0
        %1457 = vmatpush1.msra.mxu0 0.0
        %1458 = vmatprep.subr.mxu0 0.0
        %1459 = vmatpush1.msra.mxu0 0.0
        %1460 = vmatprep.subr.mxu0 0.0
        %1461 = vmatpush1.msra.mxu0 0.0
        %1462 = vmatprep.subr.mxu0 0.0
        %1463 = vmatpush1.msra.mxu0 0.0
        %1464 = vmatprep.subr.mxu0 0.0
        %1465 = vmatpush1.msra.mxu0 0.0
        %1466 = vmatprep.subr.mxu0 0.0
        %1467 = vmatpush1.msra.mxu0 0.0
        %1468 = vmatprep.subr.mxu0 0.0
        %1469 = vmatpush1.msra.mxu0 0.0
        %1470 = vmatprep.subr.mxu0 0.0
        %1471 = vmatpush1.msra.mxu0 0.0
        %1472 = vmatprep.subr.mxu0 0.0
        %1473 = vmatpush1.msra.mxu0 0.0
        %1474 = vmatprep.subr.mxu0 0.0
        %1475 = vmatpush1.msra.mxu0 0.0
        %1476 = vmatprep.subr.mxu0 0.0
        %v1477 = vand.u32 %v248, 4294901760
        %v1478 = vsub.f32 %v248, %v1477
        %1479 = vmatpush1.msra.mxu0 %v1478
        %1480 = vmatprep.subr.mxu0 0.0
        %v1481 = vand.u32 %v247, 4294901760
        %v1482 = vsub.f32 %v247, %v1481
        %1483 = vmatpush1.msra.mxu0 %v1482
        %1484 = vmatprep.subr.mxu0 0.0
        %1485 = vmatpush2.msra.mxu0 0.0
        %1486 = vmatprep.subr.mxu0 0.0
        %1487 = vmatpush2.msra.mxu0 0.0
        %1488 = vmatprep.subr.mxu0 0.0
        %1489 = vmatpush2.msra.mxu0 0.0
        %1490 = vmatprep.subr.mxu0 0.0
        %1491 = vmatpush2.msra.mxu0 0.0
        %1492 = vmatprep.subr.mxu0 0.0
        %1493 = vmatpush2.msra.mxu0 0.0
        %1494 = vmatprep.subr.mxu0 0.0
        %1495 = vmatpush2.msra.mxu0 0.0
        %1496 = vmatprep.subr.mxu0 0.0
        %1497 = vmatpush2.msra.mxu0 0.0
        %1498 = vmatprep.subr.mxu0 0.0
        %1499 = vmatpush2.msra.mxu0 0.0
        %1500 = vmatprep.subr.mxu0 0.0
        %1501 = vmatpush2.msra.mxu0 0.0
        %1502 = vmatprep.subr.mxu0 0.0
        %1503 = vmatpush2.msra.mxu0 0.0
        %1504 = vmatprep.subr.mxu0 0.0
        %1505 = vmatpush2.msra.mxu0 0.0
        %1506 = vmatprep.subr.mxu0 0.0
        %1507 = vmatpush2.msra.mxu0 0.0
        %1508 = vmatprep.subr.mxu0 0.0
        %1509 = vmatpush2.msra.mxu0 0.0
        %1510 = vmatprep.subr.mxu0 0.0
        %1511 = vmatpush2.msra.mxu0 0.0
        %1512 = vmatprep.subr.mxu0 0.0
        %1513 = vmatpush2.msra.mxu0 0.0
        %1514 = vmatprep.subr.mxu0 0.0
        %1515 = vmatpush2.msra.mxu0 0.0
        %1516 = vmatprep.mubr.f32.mxu0 0.0
        %v1517 = vand.u32 %v1269, 4294901760
        %v1518 = vsub.f32 %v1269, %v1517
        %1519 = vmatmul.mubr.f32.gmra.mxu0 %v1518
        %v1520 = vpop.f32.mrf.mxu0
        %v1521 = vadd.f32 %v1439, %v1520
        %v1522 = vpop.f32.mrf.mxu0
        %1523 = vmatprep.mubr.f32.mxu0 0.0
        %v1524 = vand.u32 %v1272, 4294901760
        %v1525 = vsub.f32 %v1272, %v1524
        %1526 = vmatmul.mubr.f32.gmra.mxu0 %v1525
        %v1527 = vpop.f32.mrf.mxu0
        %v1528 = vadd.f32 %v1445, %v1527
        %v1529 = vpop.f32.mrf.mxu0
        %1530 = vdwg.mxu0
        %1531 = vmatprep.subr.mxu0 0.0
        %1532 = vmatpush1.msra.mxu0 0.0
        %1533 = vmatprep.subr.mxu0 0.0
        %1534 = vmatpush1.msra.mxu0 0.0
        %1535 = vmatprep.subr.mxu0 0.0
        %1536 = vmatpush1.msra.mxu0 0.0
        %1537 = vmatprep.subr.mxu0 0.0
        %1538 = vmatpush1.msra.mxu0 0.0
        %1539 = vmatprep.subr.mxu0 0.0
        %1540 = vmatpush1.msra.mxu0 0.0
        %1541 = vmatprep.subr.mxu0 0.0
        %1542 = vmatpush1.msra.mxu0 0.0
        %1543 = vmatprep.subr.mxu0 0.0
        %1544 = vmatpush1.msra.mxu0 0.0
        %1545 = vmatprep.subr.mxu0 0.0
        %1546 = vmatpush1.msra.mxu0 0.0
        %1547 = vmatprep.subr.mxu0 0.0
        %1548 = vmatpush1.msra.mxu0 0.0
        %1549 = vmatprep.subr.mxu0 0.0
        %1550 = vmatpush1.msra.mxu0 0.0
        %1551 = vmatprep.subr.mxu0 0.0
        %1552 = vmatpush1.msra.mxu0 0.0
        %1553 = vmatprep.subr.mxu0 0.0
        %1554 = vmatpush1.msra.mxu0 0.0
        %1555 = vmatprep.subr.mxu0 0.0
        %1556 = vmatpush1.msra.mxu0 0.0
        %1557 = vmatprep.subr.mxu0 0.0
        %1558 = vmatpush1.msra.mxu0 0.0
        %1559 = vmatprep.subr.mxu0 0.0
        %v1560 = vand.u32 %v248, 4294901760
        %1561 = vmatpush1.msra.mxu0 %v1560
        %1562 = vmatprep.subr.mxu0 0.0
        %v1563 = vand.u32 %v247, 4294901760
        %1564 = vmatpush1.msra.mxu0 %v1563
        %1565 = vmatprep.subr.mxu0 0.0
        %1566 = vmatpush2.msra.mxu0 0.0
        %1567 = vmatprep.subr.mxu0 0.0
        %1568 = vmatpush2.msra.mxu0 0.0
        %1569 = vmatprep.subr.mxu0 0.0
        %1570 = vmatpush2.msra.mxu0 0.0
        %1571 = vmatprep.subr.mxu0 0.0
        %1572 = vmatpush2.msra.mxu0 0.0
        %1573 = vmatprep.subr.mxu0 0.0
        %1574 = vmatpush2.msra.mxu0 0.0
        %1575 = vmatprep.subr.mxu0 0.0
        %1576 = vmatpush2.msra.mxu0 0.0
        %1577 = vmatprep.subr.mxu0 0.0
        %1578 = vmatpush2.msra.mxu0 0.0
        %1579 = vmatprep.subr.mxu0 0.0
        %1580 = vmatpush2.msra.mxu0 0.0
        %1581 = vmatprep.subr.mxu0 0.0
        %1582 = vmatpush2.msra.mxu0 0.0
        %1583 = vmatprep.subr.mxu0 0.0
        %1584 = vmatpush2.msra.mxu0 0.0
        %1585 = vmatprep.subr.mxu0 0.0
        %1586 = vmatpush2.msra.mxu0 0.0
        %1587 = vmatprep.subr.mxu0 0.0
        %1588 = vmatpush2.msra.mxu0 0.0
        %1589 = vmatprep.subr.mxu0 0.0
        %1590 = vmatpush2.msra.mxu0 0.0
        %1591 = vmatprep.subr.mxu0 0.0
        %1592 = vmatpush2.msra.mxu0 0.0
        %1593 = vmatprep.subr.mxu0 0.0
        %1594 = vmatpush2.msra.mxu0 0.0
        %1595 = vmatprep.subr.mxu0 0.0
        %1596 = vmatpush2.msra.mxu0 0.0
        %1597 = vmatprep.mubr.f32.mxu0 0.0
        %v1598 = vand.u32 %v1269, 4294901760
        %v1599 = vsub.f32 %v1269, %v1598
        %v1600 = vand.u32 %v1599, 4294901760
        %1601 = vmatmul.mubr.f32.gmra.mxu0 %v1600
        %v1602 = vpop.f32.mrf.mxu0
        %v1603 = vadd.f32 %v1521, %v1602
        %v1604 = vpop.f32.mrf.mxu0
        %1605 = vmatprep.mubr.f32.mxu0 0.0
        %v1606 = vand.u32 %v1272, 4294901760
        %v1607 = vsub.f32 %v1272, %v1606
        %v1608 = vand.u32 %v1607, 4294901760
        %1609 = vmatmul.mubr.f32.gmra.mxu0 %v1608
        %v1610 = vpop.f32.mrf.mxu0
        %v1611 = vadd.f32 %v1528, %v1610
        %v1612 = vpop.f32.mrf.mxu0
        %1613 = vdwg.mxu0
        %1614 = vmatprep.subr.mxu0 0.0
        %1615 = vmatpush1.msra.mxu0 0.0
        %1616 = vmatprep.subr.mxu0 0.0
        %1617 = vmatpush1.msra.mxu0 0.0
        %1618 = vmatprep.subr.mxu0 0.0
        %1619 = vmatpush1.msra.mxu0 0.0
        %1620 = vmatprep.subr.mxu0 0.0
        %1621 = vmatpush1.msra.mxu0 0.0
        %1622 = vmatprep.subr.mxu0 0.0
        %1623 = vmatpush1.msra.mxu0 0.0
        %1624 = vmatprep.subr.mxu0 0.0
        %1625 = vmatpush1.msra.mxu0 0.0
        %1626 = vmatprep.subr.mxu0 0.0
        %1627 = vmatpush1.msra.mxu0 0.0
        %1628 = vmatprep.subr.mxu0 0.0
        %1629 = vmatpush1.msra.mxu0 0.0
        %1630 = vmatprep.subr.mxu0 0.0
        %1631 = vmatpush1.msra.mxu0 0.0
        %1632 = vmatprep.subr.mxu0 0.0
        %1633 = vmatpush1.msra.mxu0 0.0
        %1634 = vmatprep.subr.mxu0 0.0
        %1635 = vmatpush1.msra.mxu0 0.0
        %1636 = vmatprep.subr.mxu0 0.0
        %1637 = vmatpush1.msra.mxu0 0.0
        %1638 = vmatprep.subr.mxu0 0.0
        %1639 = vmatpush1.msra.mxu0 0.0
        %1640 = vmatprep.subr.mxu0 0.0
        %1641 = vmatpush1.msra.mxu0 0.0
        %1642 = vmatprep.subr.mxu0 0.0
        %v1643 = vand.u32 %v248, 4294901760
        %v1644 = vsub.f32 %v248, %v1643
        %v1645 = vand.u32 %v1644, 4294901760
        %1646 = vmatpush1.msra.mxu0 %v1645
        %1647 = vmatprep.subr.mxu0 0.0
        %v1648 = vand.u32 %v247, 4294901760
        %v1649 = vsub.f32 %v247, %v1648
        %v1650 = vand.u32 %v1649, 4294901760
        %1651 = vmatpush1.msra.mxu0 %v1650
        %1652 = vmatprep.subr.mxu0 0.0
        %1653 = vmatpush2.msra.mxu0 0.0
        %1654 = vmatprep.subr.mxu0 0.0
        %1655 = vmatpush2.msra.mxu0 0.0
        %1656 = vmatprep.subr.mxu0 0.0
        %1657 = vmatpush2.msra.mxu0 0.0
        %1658 = vmatprep.subr.mxu0 0.0
        %1659 = vmatpush2.msra.mxu0 0.0
        %1660 = vmatprep.subr.mxu0 0.0
        %1661 = vmatpush2.msra.mxu0 0.0
        %1662 = vmatprep.subr.mxu0 0.0
        %1663 = vmatpush2.msra.mxu0 0.0
        %1664 = vmatprep.subr.mxu0 0.0
        %1665 = vmatpush2.msra.mxu0 0.0
        %1666 = vmatprep.subr.mxu0 0.0
        %1667 = vmatpush2.msra.mxu0 0.0
        %1668 = vmatprep.subr.mxu0 0.0
        %1669 = vmatpush2.msra.mxu0 0.0
        %1670 = vmatprep.subr.mxu0 0.0
        %1671 = vmatpush2.msra.mxu0 0.0
        %1672 = vmatprep.subr.mxu0 0.0
        %1673 = vmatpush2.msra.mxu0 0.0
        %1674 = vmatprep.subr.mxu0 0.0
        %1675 = vmatpush2.msra.mxu0 0.0
        %1676 = vmatprep.subr.mxu0 0.0
        %1677 = vmatpush2.msra.mxu0 0.0
        %1678 = vmatprep.subr.mxu0 0.0
        %1679 = vmatpush2.msra.mxu0 0.0
        %1680 = vmatprep.subr.mxu0 0.0
        %1681 = vmatpush2.msra.mxu0 0.0
        %1682 = vmatprep.subr.mxu0 0.0
        %1683 = vmatpush2.msra.mxu0 0.0
        %1684 = vmatprep.mubr.f32.mxu0 0.0
        %v1685 = vand.u32 %v1269, 4294901760
        %1686 = vmatmul.mubr.f32.gmra.mxu0 %v1685
        %v1687 = vpop.f32.mrf.mxu0
        %v1688 = vadd.f32 %v1603, %v1687
        %v1689 = vpop.f32.mrf.mxu0
        %1690 = vmatprep.mubr.f32.mxu0 0.0
        %v1691 = vand.u32 %v1272, 4294901760
        %1692 = vmatmul.mubr.f32.gmra.mxu0 %v1691
        %v1693 = vpop.f32.mrf.mxu0
        %v1694 = vadd.f32 %v1611, %v1693
        %v1695 = vpop.f32.mrf.mxu0
        %1696 = vdwg.mxu0
        %1697 = vmatprep.subr.mxu0 0.0
        %1698 = vmatpush1.msra.mxu0 0.0
        %1699 = vmatprep.subr.mxu0 0.0
        %1700 = vmatpush1.msra.mxu0 0.0
        %1701 = vmatprep.subr.mxu0 0.0
        %1702 = vmatpush1.msra.mxu0 0.0
        %1703 = vmatprep.subr.mxu0 0.0
        %1704 = vmatpush1.msra.mxu0 0.0
        %1705 = vmatprep.subr.mxu0 0.0
        %1706 = vmatpush1.msra.mxu0 0.0
        %1707 = vmatprep.subr.mxu0 0.0
        %1708 = vmatpush1.msra.mxu0 0.0
        %1709 = vmatprep.subr.mxu0 0.0
        %1710 = vmatpush1.msra.mxu0 0.0
        %1711 = vmatprep.subr.mxu0 0.0
        %1712 = vmatpush1.msra.mxu0 0.0
        %1713 = vmatprep.subr.mxu0 0.0
        %1714 = vmatpush1.msra.mxu0 0.0
        %1715 = vmatprep.subr.mxu0 0.0
        %1716 = vmatpush1.msra.mxu0 0.0
        %1717 = vmatprep.subr.mxu0 0.0
        %1718 = vmatpush1.msra.mxu0 0.0
        %1719 = vmatprep.subr.mxu0 0.0
        %1720 = vmatpush1.msra.mxu0 0.0
        %1721 = vmatprep.subr.mxu0 0.0
        %1722 = vmatpush1.msra.mxu0 0.0
        %1723 = vmatprep.subr.mxu0 0.0
        %1724 = vmatpush1.msra.mxu0 0.0
        %1725 = vmatprep.subr.mxu0 0.0
        %v1726 = vand.u32 %v248, 4294901760
        %1727 = vmatpush1.msra.mxu0 %v1726
        %1728 = vmatprep.subr.mxu0 0.0
        %v1729 = vand.u32 %v247, 4294901760
        %1730 = vmatpush1.msra.mxu0 %v1729
        %1731 = vmatprep.subr.mxu0 0.0
        %1732 = vmatpush2.msra.mxu0 0.0
        %1733 = vmatprep.subr.mxu0 0.0
        %1734 = vmatpush2.msra.mxu0 0.0
        %1735 = vmatprep.subr.mxu0 0.0
        %1736 = vmatpush2.msra.mxu0 0.0
        %1737 = vmatprep.subr.mxu0 0.0
        %1738 = vmatpush2.msra.mxu0 0.0
        %1739 = vmatprep.subr.mxu0 0.0
        %1740 = vmatpush2.msra.mxu0 0.0
        %1741 = vmatprep.subr.mxu0 0.0
        %1742 = vmatpush2.msra.mxu0 0.0
        %1743 = vmatprep.subr.mxu0 0.0
        %1744 = vmatpush2.msra.mxu0 0.0
        %1745 = vmatprep.subr.mxu0 0.0
        %1746 = vmatpush2.msra.mxu0 0.0
        %1747 = vmatprep.subr.mxu0 0.0
        %1748 = vmatpush2.msra.mxu0 0.0
        %1749 = vmatprep.subr.mxu0 0.0
        %1750 = vmatpush2.msra.mxu0 0.0
        %1751 = vmatprep.subr.mxu0 0.0
        %1752 = vmatpush2.msra.mxu0 0.0
        %1753 = vmatprep.subr.mxu0 0.0
        %1754 = vmatpush2.msra.mxu0 0.0
        %1755 = vmatprep.subr.mxu0 0.0
        %1756 = vmatpush2.msra.mxu0 0.0
        %1757 = vmatprep.subr.mxu0 0.0
        %1758 = vmatpush2.msra.mxu0 0.0
        %1759 = vmatprep.subr.mxu0 0.0
        %1760 = vmatpush2.msra.mxu0 0.0
        %1761 = vmatprep.subr.mxu0 0.0
        %1762 = vmatpush2.msra.mxu0 0.0
        %1763 = vmatprep.mubr.f32.mxu0 0.0
        %v1764 = vand.u32 %v1269, 4294901760
        %1765 = vmatmul.mubr.f32.gmra.mxu0 %v1764
        %v1766 = vpop.f32.mrf.mxu0
        %v1767 = vadd.f32 %v1688, %v1766
        %v1768 = vpop.f32.mrf.mxu0
        %1769 = vmatprep.mubr.f32.mxu0 0.0
        %v1770 = vand.u32 %v1272, 4294901760
        %1771 = vmatmul.mubr.f32.gmra.mxu0 %v1770
        %v1772 = vpop.f32.mrf.mxu0
        %v1773 = vadd.f32 %v1694, %v1772
        %v1774 = vpop.f32.mrf.mxu0
        %1775 = vdwg.mxu0
        %v1777 = vsel %vm251, %v245, 0
        %v1780 = vsel %vm251, %v246, 0
        %1782 = vmatprep.subr.mxu0 0.0
        %1783 = vmatpush1.msra.mxu0 0.0
        %1784 = vmatprep.subr.mxu0 0.0
        %1785 = vmatpush1.msra.mxu0 0.0
        %1786 = vmatprep.subr.mxu0 0.0
        %1787 = vmatpush1.msra.mxu0 0.0
        %1788 = vmatprep.subr.mxu0 0.0
        %1789 = vmatpush1.msra.mxu0 0.0
        %1790 = vmatprep.subr.mxu0 0.0
        %1791 = vmatpush1.msra.mxu0 0.0
        %1792 = vmatprep.subr.mxu0 0.0
        %1793 = vmatpush1.msra.mxu0 0.0
        %1794 = vmatprep.subr.mxu0 0.0
        %1795 = vmatpush1.msra.mxu0 0.0
        %1796 = vmatprep.subr.mxu0 0.0
        %1797 = vmatpush1.msra.mxu0 0.0
        %1798 = vmatprep.subr.mxu0 0.0
        %1799 = vmatpush1.msra.mxu0 0.0
        %1800 = vmatprep.subr.mxu0 0.0
        %1801 = vmatpush1.msra.mxu0 0.0
        %1802 = vmatprep.subr.mxu0 0.0
        %1803 = vmatpush1.msra.mxu0 0.0
        %1804 = vmatprep.subr.mxu0 0.0
        %1805 = vmatpush1.msra.mxu0 0.0
        %1806 = vmatprep.subr.mxu0 0.0
        %1807 = vmatpush1.msra.mxu0 0.0
        %1808 = vmatprep.subr.mxu0 0.0
        %1809 = vmatpush1.msra.mxu0 0.0
        %1810 = vmatprep.subr.mxu0 0.0
        %v1811 = vand.u32 %v248, 4294901760
        %1812 = vmatpush1.msra.mxu0 %v1811
        %1813 = vmatprep.subr.mxu0 0.0
        %v1814 = vand.u32 %v247, 4294901760
        %1815 = vmatpush1.msra.mxu0 %v1814
        %1816 = vmatprep.subr.mxu0 0.0
        %1817 = vmatpush2.msra.mxu0 0.0
        %1818 = vmatprep.subr.mxu0 0.0
        %1819 = vmatpush2.msra.mxu0 0.0
        %1820 = vmatprep.subr.mxu0 0.0
        %1821 = vmatpush2.msra.mxu0 0.0
        %1822 = vmatprep.subr.mxu0 0.0
        %1823 = vmatpush2.msra.mxu0 0.0
        %1824 = vmatprep.subr.mxu0 0.0
        %1825 = vmatpush2.msra.mxu0 0.0
        %1826 = vmatprep.subr.mxu0 0.0
        %1827 = vmatpush2.msra.mxu0 0.0
        %1828 = vmatprep.subr.mxu0 0.0
        %1829 = vmatpush2.msra.mxu0 0.0
        %1830 = vmatprep.subr.mxu0 0.0
        %1831 = vmatpush2.msra.mxu0 0.0
        %1832 = vmatprep.subr.mxu0 0.0
        %1833 = vmatpush2.msra.mxu0 0.0
        %1834 = vmatprep.subr.mxu0 0.0
        %1835 = vmatpush2.msra.mxu0 0.0
        %1836 = vmatprep.subr.mxu0 0.0
        %1837 = vmatpush2.msra.mxu0 0.0
        %1838 = vmatprep.subr.mxu0 0.0
        %1839 = vmatpush2.msra.mxu0 0.0
        %1840 = vmatprep.subr.mxu0 0.0
        %1841 = vmatpush2.msra.mxu0 0.0
        %1842 = vmatprep.subr.mxu0 0.0
        %1843 = vmatpush2.msra.mxu0 0.0
        %1844 = vmatprep.subr.mxu0 0.0
        %1845 = vmatpush2.msra.mxu0 0.0
        %1846 = vmatprep.subr.mxu0 0.0
        %1847 = vmatpush2.msra.mxu0 0.0
        %1848 = vmatprep.mubr.f32.mxu0 0.0
        %v1849 = vand.u32 %v1777, 4294901760
        %v1850 = vsub.f32 %v1777, %v1849
        %v1851 = vand.u32 %v1850, 4294901760
        %v1852 = vsub.f32 %v1850, %v1851
        %v1853 = vand.u32 %v1852, 4294901760
        %1854 = vmatmul.mubr.f32.gmra.mxu0 %v1853
        %v1855 = vpop.f32.mrf.mxu0
        %v1856 = vadd.f32 0.0, %v1855
        %v1857 = vpop.f32.mrf.mxu0
        %1858 = vmatprep.mubr.f32.mxu0 0.0
        %v1859 = vand.u32 %v1780, 4294901760
        %v1860 = vsub.f32 %v1780, %v1859
        %v1861 = vand.u32 %v1860, 4294901760
        %v1862 = vsub.f32 %v1860, %v1861
        %v1863 = vand.u32 %v1862, 4294901760
        %1864 = vmatmul.mubr.f32.gmra.mxu0 %v1863
        %v1865 = vpop.f32.mrf.mxu0
        %v1866 = vadd.f32 0.0, %v1865
        %v1867 = vpop.f32.mrf.mxu0
        %1868 = vdwg.mxu0
        %1869 = vmatprep.subr.mxu0 0.0
        %1870 = vmatpush1.msra.mxu0 0.0
        %1871 = vmatprep.subr.mxu0 0.0
        %1872 = vmatpush1.msra.mxu0 0.0
        %1873 = vmatprep.subr.mxu0 0.0
        %1874 = vmatpush1.msra.mxu0 0.0
        %1875 = vmatprep.subr.mxu0 0.0
        %1876 = vmatpush1.msra.mxu0 0.0
        %1877 = vmatprep.subr.mxu0 0.0
        %1878 = vmatpush1.msra.mxu0 0.0
        %1879 = vmatprep.subr.mxu0 0.0
        %1880 = vmatpush1.msra.mxu0 0.0
        %1881 = vmatprep.subr.mxu0 0.0
        %1882 = vmatpush1.msra.mxu0 0.0
        %1883 = vmatprep.subr.mxu0 0.0
        %1884 = vmatpush1.msra.mxu0 0.0
        %1885 = vmatprep.subr.mxu0 0.0
        %1886 = vmatpush1.msra.mxu0 0.0
        %1887 = vmatprep.subr.mxu0 0.0
        %1888 = vmatpush1.msra.mxu0 0.0
        %1889 = vmatprep.subr.mxu0 0.0
        %1890 = vmatpush1.msra.mxu0 0.0
        %1891 = vmatprep.subr.mxu0 0.0
        %1892 = vmatpush1.msra.mxu0 0.0
        %1893 = vmatprep.subr.mxu0 0.0
        %1894 = vmatpush1.msra.mxu0 0.0
        %1895 = vmatprep.subr.mxu0 0.0
        %1896 = vmatpush1.msra.mxu0 0.0
        %1897 = vmatprep.subr.mxu0 0.0
        %v1898 = vand.u32 %v248, 4294901760
        %v1899 = vsub.f32 %v248, %v1898
        %v1900 = vand.u32 %v1899, 4294901760
        %v1901 = vsub.f32 %v1899, %v1900
        %v1902 = vand.u32 %v1901, 4294901760
        %1903 = vmatpush1.msra.mxu0 %v1902
        %1904 = vmatprep.subr.mxu0 0.0
        %v1905 = vand.u32 %v247, 4294901760
        %v1906 = vsub.f32 %v247, %v1905
        %v1907 = vand.u32 %v1906, 4294901760
        %v1908 = vsub.f32 %v1906, %v1907
        %v1909 = vand.u32 %v1908, 4294901760
        %1910 = vmatpush1.msra.mxu0 %v1909
        %1911 = vmatprep.subr.mxu0 0.0
        %1912 = vmatpush2.msra.mxu0 0.0
        %1913 = vmatprep.subr.mxu0 0.0
        %1914 = vmatpush2.msra.mxu0 0.0
        %1915 = vmatprep.subr.mxu0 0.0
        %1916 = vmatpush2.msra.mxu0 0.0
        %1917 = vmatprep.subr.mxu0 0.0
        %1918 = vmatpush2.msra.mxu0 0.0
        %1919 = vmatprep.subr.mxu0 0.0
        %1920 = vmatpush2.msra.mxu0 0.0
        %1921 = vmatprep.subr.mxu0 0.0
        %1922 = vmatpush2.msra.mxu0 0.0
        %1923 = vmatprep.subr.mxu0 0.0
        %1924 = vmatpush2.msra.mxu0 0.0
        %1925 = vmatprep.subr.mxu0 0.0
        %1926 = vmatpush2.msra.mxu0 0.0
        %1927 = vmatprep.subr.mxu0 0.0
        %1928 = vmatpush2.msra.mxu0 0.0
        %1929 = vmatprep.subr.mxu0 0.0
        %1930 = vmatpush2.msra.mxu0 0.0
        %1931 = vmatprep.subr.mxu0 0.0
        %1932 = vmatpush2.msra.mxu0 0.0
        %1933 = vmatprep.subr.mxu0 0.0
        %1934 = vmatpush2.msra.mxu0 0.0
        %1935 = vmatprep.subr.mxu0 0.0
        %1936 = vmatpush2.msra.mxu0 0.0
        %1937 = vmatprep.subr.mxu0 0.0
        %1938 = vmatpush2.msra.mxu0 0.0
        %1939 = vmatprep.subr.mxu0 0.0
        %1940 = vmatpush2.msra.mxu0 0.0
        %1941 = vmatprep.subr.mxu0 0.0
        %1942 = vmatpush2.msra.mxu0 0.0
        %1943 = vmatprep.mubr.f32.mxu0 0.0
        %v1944 = vand.u32 %v1777, 4294901760
        %1945 = vmatmul.mubr.f32.gmra.mxu0 %v1944
        %v1946 = vpop.f32.mrf.mxu0
        %v1947 = vadd.f32 %v1856, %v1946
        %v1948 = vpop.f32.mrf.mxu0
        %1949 = vmatprep.mubr.f32.mxu0 0.0
        %v1950 = vand.u32 %v1780, 4294901760
        %1951 = vmatmul.mubr.f32.gmra.mxu0 %v1950
        %v1952 = vpop.f32.mrf.mxu0
        %v1953 = vadd.f32 %v1866, %v1952
        %v1954 = vpop.f32.mrf.mxu0
        %1955 = vdwg.mxu0
        %1956 = vmatprep.subr.mxu0 0.0
        %1957 = vmatpush1.msra.mxu0 0.0
        %1958 = vmatprep.subr.mxu0 0.0
        %1959 = vmatpush1.msra.mxu0 0.0
        %1960 = vmatprep.subr.mxu0 0.0
        %1961 = vmatpush1.msra.mxu0 0.0
        %1962 = vmatprep.subr.mxu0 0.0
        %1963 = vmatpush1.msra.mxu0 0.0
        %1964 = vmatprep.subr.mxu0 0.0
        %1965 = vmatpush1.msra.mxu0 0.0
        %1966 = vmatprep.subr.mxu0 0.0
        %1967 = vmatpush1.msra.mxu0 0.0
        %1968 = vmatprep.subr.mxu0 0.0
        %1969 = vmatpush1.msra.mxu0 0.0
        %1970 = vmatprep.subr.mxu0 0.0
        %1971 = vmatpush1.msra.mxu0 0.0
        %1972 = vmatprep.subr.mxu0 0.0
        %1973 = vmatpush1.msra.mxu0 0.0
        %1974 = vmatprep.subr.mxu0 0.0
        %1975 = vmatpush1.msra.mxu0 0.0
        %1976 = vmatprep.subr.mxu0 0.0
        %1977 = vmatpush1.msra.mxu0 0.0
        %1978 = vmatprep.subr.mxu0 0.0
        %1979 = vmatpush1.msra.mxu0 0.0
        %1980 = vmatprep.subr.mxu0 0.0
        %1981 = vmatpush1.msra.mxu0 0.0
        %1982 = vmatprep.subr.mxu0 0.0
        %1983 = vmatpush1.msra.mxu0 0.0
        %1984 = vmatprep.subr.mxu0 0.0
        %v1985 = vand.u32 %v248, 4294901760
        %v1986 = vsub.f32 %v248, %v1985
        %1987 = vmatpush1.msra.mxu0 %v1986
        %1988 = vmatprep.subr.mxu0 0.0
        %v1989 = vand.u32 %v247, 4294901760
        %v1990 = vsub.f32 %v247, %v1989
        %1991 = vmatpush1.msra.mxu0 %v1990
        %1992 = vmatprep.subr.mxu0 0.0
        %1993 = vmatpush2.msra.mxu0 0.0
        %1994 = vmatprep.subr.mxu0 0.0
        %1995 = vmatpush2.msra.mxu0 0.0
        %1996 = vmatprep.subr.mxu0 0.0
        %1997 = vmatpush2.msra.mxu0 0.0
        %1998 = vmatprep.subr.mxu0 0.0
        %1999 = vmatpush2.msra.mxu0 0.0
        %2000 = vmatprep.subr.mxu0 0.0
        %2001 = vmatpush2.msra.mxu0 0.0
        %2002 = vmatprep.subr.mxu0 0.0
        %2003 = vmatpush2.msra.mxu0 0.0
        %2004 = vmatprep.subr.mxu0 0.0
        %2005 = vmatpush2.msra.mxu0 0.0
        %2006 = vmatprep.subr.mxu0 0.0
        %2007 = vmatpush2.msra.mxu0 0.0
        %2008 = vmatprep.subr.mxu0 0.0
        %2009 = vmatpush2.msra.mxu0 0.0
        %2010 = vmatprep.subr.mxu0 0.0
        %2011 = vmatpush2.msra.mxu0 0.0
        %2012 = vmatprep.subr.mxu0 0.0
        %2013 = vmatpush2.msra.mxu0 0.0
        %2014 = vmatprep.subr.mxu0 0.0
        %2015 = vmatpush2.msra.mxu0 0.0
        %2016 = vmatprep.subr.mxu0 0.0
        %2017 = vmatpush2.msra.mxu0 0.0
        %2018 = vmatprep.subr.mxu0 0.0
        %2019 = vmatpush2.msra.mxu0 0.0
        %2020 = vmatprep.subr.mxu0 0.0
        %2021 = vmatpush2.msra.mxu0 0.0
        %2022 = vmatprep.subr.mxu0 0.0
        %2023 = vmatpush2.msra.mxu0 0.0
        %2024 = vmatprep.mubr.f32.mxu0 0.0
        %v2025 = vand.u32 %v1777, 4294901760
        %v2026 = vsub.f32 %v1777, %v2025
        %2027 = vmatmul.mubr.f32.gmra.mxu0 %v2026
        %v2028 = vpop.f32.mrf.mxu0
        %v2029 = vadd.f32 %v1947, %v2028
        %v2030 = vpop.f32.mrf.mxu0
        %2031 = vmatprep.mubr.f32.mxu0 0.0
        %v2032 = vand.u32 %v1780, 4294901760
        %v2033 = vsub.f32 %v1780, %v2032
        %2034 = vmatmul.mubr.f32.gmra.mxu0 %v2033
        %v2035 = vpop.f32.mrf.mxu0
        %v2036 = vadd.f32 %v1953, %v2035
        %v2037 = vpop.f32.mrf.mxu0
        %2038 = vdwg.mxu0
        %2039 = vmatprep.subr.mxu0 0.0
        %2040 = vmatpush1.msra.mxu0 0.0
        %2041 = vmatprep.subr.mxu0 0.0
        %2042 = vmatpush1.msra.mxu0 0.0
        %2043 = vmatprep.subr.mxu0 0.0
        %2044 = vmatpush1.msra.mxu0 0.0
        %2045 = vmatprep.subr.mxu0 0.0
        %2046 = vmatpush1.msra.mxu0 0.0
        %2047 = vmatprep.subr.mxu0 0.0
        %2048 = vmatpush1.msra.mxu0 0.0
        %2049 = vmatprep.subr.mxu0 0.0
        %2050 = vmatpush1.msra.mxu0 0.0
        %2051 = vmatprep.subr.mxu0 0.0
        %2052 = vmatpush1.msra.mxu0 0.0
        %2053 = vmatprep.subr.mxu0 0.0
        %2054 = vmatpush1.msra.mxu0 0.0
        %2055 = vmatprep.subr.mxu0 0.0
        %2056 = vmatpush1.msra.mxu0 0.0
        %2057 = vmatprep.subr.mxu0 0.0
        %2058 = vmatpush1.msra.mxu0 0.0
        %2059 = vmatprep.subr.mxu0 0.0
        %2060 = vmatpush1.msra.mxu0 0.0
        %2061 = vmatprep.subr.mxu0 0.0
        %2062 = vmatpush1.msra.mxu0 0.0
        %2063 = vmatprep.subr.mxu0 0.0
        %2064 = vmatpush1.msra.mxu0 0.0
        %2065 = vmatprep.subr.mxu0 0.0
        %2066 = vmatpush1.msra.mxu0 0.0
        %2067 = vmatprep.subr.mxu0 0.0
        %v2068 = vand.u32 %v248, 4294901760
        %2069 = vmatpush1.msra.mxu0 %v2068
        %2070 = vmatprep.subr.mxu0 0.0
        %v2071 = vand.u32 %v247, 4294901760
        %2072 = vmatpush1.msra.mxu0 %v2071
        %2073 = vmatprep.subr.mxu0 0.0
        %2074 = vmatpush2.msra.mxu0 0.0
        %2075 = vmatprep.subr.mxu0 0.0
        %2076 = vmatpush2.msra.mxu0 0.0
        %2077 = vmatprep.subr.mxu0 0.0
        %2078 = vmatpush2.msra.mxu0 0.0
        %2079 = vmatprep.subr.mxu0 0.0
        %2080 = vmatpush2.msra.mxu0 0.0
        %2081 = vmatprep.subr.mxu0 0.0
        %2082 = vmatpush2.msra.mxu0 0.0
        %2083 = vmatprep.subr.mxu0 0.0
        %2084 = vmatpush2.msra.mxu0 0.0
        %2085 = vmatprep.subr.mxu0 0.0
        %2086 = vmatpush2.msra.mxu0 0.0
        %2087 = vmatprep.subr.mxu0 0.0
        %2088 = vmatpush2.msra.mxu0 0.0
        %2089 = vmatprep.subr.mxu0 0.0
        %2090 = vmatpush2.msra.mxu0 0.0
        %2091 = vmatprep.subr.mxu0 0.0
        %2092 = vmatpush2.msra.mxu0 0.0
        %2093 = vmatprep.subr.mxu0 0.0
        %2094 = vmatpush2.msra.mxu0 0.0
        %2095 = vmatprep.subr.mxu0 0.0
        %2096 = vmatpush2.msra.mxu0 0.0
        %2097 = vmatprep.subr.mxu0 0.0
        %2098 = vmatpush2.msra.mxu0 0.0
        %2099 = vmatprep.subr.mxu0 0.0
        %2100 = vmatpush2.msra.mxu0 0.0
        %2101 = vmatprep.subr.mxu0 0.0
        %2102 = vmatpush2.msra.mxu0 0.0
        %2103 = vmatprep.subr.mxu0 0.0
        %2104 = vmatpush2.msra.mxu0 0.0
        %2105 = vmatprep.mubr.f32.mxu0 0.0
        %v2106 = vand.u32 %v1777, 4294901760
        %v2107 = vsub.f32 %v1777, %v2106
        %v2108 = vand.u32 %v2107, 4294901760
        %2109 = vmatmul.mubr.f32.gmra.mxu0 %v2108
        %v2110 = vpop.f32.mrf.mxu0
        %v2111 = vadd.f32 %v2029, %v2110
        %v2112 = vpop.f32.mrf.mxu0
        %2113 = vmatprep.mubr.f32.mxu0 0.0
        %v2114 = vand.u32 %v1780, 4294901760
        %v2115 = vsub.f32 %v1780, %v2114
        %v2116 = vand.u32 %v2115, 4294901760
        %2117 = vmatmul.mubr.f32.gmra.mxu0 %v2116
        %v2118 = vpop.f32.mrf.mxu0
        %v2119 = vadd.f32 %v2036, %v2118
        %v2120 = vpop.f32.mrf.mxu0
        %2121 = vdwg.mxu0
        %2122 = vmatprep.subr.mxu0 0.0
        %2123 = vmatpush1.msra.mxu0 0.0
        %2124 = vmatprep.subr.mxu0 0.0
        %2125 = vmatpush1.msra.mxu0 0.0
        %2126 = vmatprep.subr.mxu0 0.0
        %2127 = vmatpush1.msra.mxu0 0.0
        %2128 = vmatprep.subr.mxu0 0.0
        %2129 = vmatpush1.msra.mxu0 0.0
        %2130 = vmatprep.subr.mxu0 0.0
        %2131 = vmatpush1.msra.mxu0 0.0
        %2132 = vmatprep.subr.mxu0 0.0
        %2133 = vmatpush1.msra.mxu0 0.0
        %2134 = vmatprep.subr.mxu0 0.0
        %2135 = vmatpush1.msra.mxu0 0.0
        %2136 = vmatprep.subr.mxu0 0.0
        %2137 = vmatpush1.msra.mxu0 0.0
        %2138 = vmatprep.subr.mxu0 0.0
        %2139 = vmatpush1.msra.mxu0 0.0
        %2140 = vmatprep.subr.mxu0 0.0
        %2141 = vmatpush1.msra.mxu0 0.0
        %2142 = vmatprep.subr.mxu0 0.0
        %2143 = vmatpush1.msra.mxu0 0.0
        %2144 = vmatprep.subr.mxu0 0.0
        %2145 = vmatpush1.msra.mxu0 0.0
        %2146 = vmatprep.subr.mxu0 0.0
        %2147 = vmatpush1.msra.mxu0 0.0
        %2148 = vmatprep.subr.mxu0 0.0
        %2149 = vmatpush1.msra.mxu0 0.0
        %2150 = vmatprep.subr.mxu0 0.0
        %v2151 = vand.u32 %v248, 4294901760
        %v2152 = vsub.f32 %v248, %v2151
        %v2153 = vand.u32 %v2152, 4294901760
        %2154 = vmatpush1.msra.mxu0 %v2153
        %2155 = vmatprep.subr.mxu0 0.0
        %v2156 = vand.u32 %v247, 4294901760
        %v2157 = vsub.f32 %v247, %v2156
        %v2158 = vand.u32 %v2157, 4294901760
        %2159 = vmatpush1.msra.mxu0 %v2158
        %2160 = vmatprep.subr.mxu0 0.0
        %2161 = vmatpush2.msra.mxu0 0.0
        %2162 = vmatprep.subr.mxu0 0.0
        %2163 = vmatpush2.msra.mxu0 0.0
        %2164 = vmatprep.subr.mxu0 0.0
        %2165 = vmatpush2.msra.mxu0 0.0
        %2166 = vmatprep.subr.mxu0 0.0
        %2167 = vmatpush2.msra.mxu0 0.0
        %2168 = vmatprep.subr.mxu0 0.0
        %2169 = vmatpush2.msra.mxu0 0.0
        %2170 = vmatprep.subr.mxu0 0.0
        %2171 = vmatpush2.msra.mxu0 0.0
        %2172 = vmatprep.subr.mxu0 0.0
        %2173 = vmatpush2.msra.mxu0 0.0
        %2174 = vmatprep.subr.mxu0 0.0
        %2175 = vmatpush2.msra.mxu0 0.0
        %2176 = vmatprep.subr.mxu0 0.0
        %2177 = vmatpush2.msra.mxu0 0.0
        %2178 = vmatprep.subr.mxu0 0.0
        %2179 = vmatpush2.msra.mxu0 0.0
        %2180 = vmatprep.subr.mxu0 0.0
        %2181 = vmatpush2.msra.mxu0 0.0
        %2182 = vmatprep.subr.mxu0 0.0
        %2183 = vmatpush2.msra.mxu0 0.0
        %2184 = vmatprep.subr.mxu0 0.0
        %2185 = vmatpush2.msra.mxu0 0.0
        %2186 = vmatprep.subr.mxu0 0.0
        %2187 = vmatpush2.msra.mxu0 0.0
        %2188 = vmatprep.subr.mxu0 0.0
        %2189 = vmatpush2.msra.mxu0 0.0
        %2190 = vmatprep.subr.mxu0 0.0
        %2191 = vmatpush2.msra.mxu0 0.0
        %2192 = vmatprep.mubr.f32.mxu0 0.0
        %v2193 = vand.u32 %v1777, 4294901760
        %2194 = vmatmul.mubr.f32.gmra.mxu0 %v2193
        %v2195 = vpop.f32.mrf.mxu0
        %v2196 = vadd.f32 %v2111, %v2195
        %v2197 = vpop.f32.mrf.mxu0
        %2198 = vmatprep.mubr.f32.mxu0 0.0
        %v2199 = vand.u32 %v1780, 4294901760
        %2200 = vmatmul.mubr.f32.gmra.mxu0 %v2199
        %v2201 = vpop.f32.mrf.mxu0
        %v2202 = vadd.f32 %v2119, %v2201
        %v2203 = vpop.f32.mrf.mxu0
        %2204 = vdwg.mxu0
        %2205 = vmatprep.subr.mxu0 0.0
        %2206 = vmatpush1.msra.mxu0 0.0
        %2207 = vmatprep.subr.mxu0 0.0
        %2208 = vmatpush1.msra.mxu0 0.0
        %2209 = vmatprep.subr.mxu0 0.0
        %2210 = vmatpush1.msra.mxu0 0.0
        %2211 = vmatprep.subr.mxu0 0.0
        %2212 = vmatpush1.msra.mxu0 0.0
        %2213 = vmatprep.subr.mxu0 0.0
        %2214 = vmatpush1.msra.mxu0 0.0
        %2215 = vmatprep.subr.mxu0 0.0
        %2216 = vmatpush1.msra.mxu0 0.0
        %2217 = vmatprep.subr.mxu0 0.0
        %2218 = vmatpush1.msra.mxu0 0.0
        %2219 = vmatprep.subr.mxu0 0.0
        %2220 = vmatpush1.msra.mxu0 0.0
        %2221 = vmatprep.subr.mxu0 0.0
        %2222 = vmatpush1.msra.mxu0 0.0
        %2223 = vmatprep.subr.mxu0 0.0
        %2224 = vmatpush1.msra.mxu0 0.0
        %2225 = vmatprep.subr.mxu0 0.0
        %2226 = vmatpush1.msra.mxu0 0.0
        %2227 = vmatprep.subr.mxu0 0.0
        %2228 = vmatpush1.msra.mxu0 0.0
        %2229 = vmatprep.subr.mxu0 0.0
        %2230 = vmatpush1.msra.mxu0 0.0
        %2231 = vmatprep.subr.mxu0 0.0
        %2232 = vmatpush1.msra.mxu0 0.0
        %2233 = vmatprep.subr.mxu0 0.0
        %v2234 = vand.u32 %v248, 4294901760
        %2235 = vmatpush1.msra.mxu0 %v2234
        %2236 = vmatprep.subr.mxu0 0.0
        %v2237 = vand.u32 %v247, 4294901760
        %2238 = vmatpush1.msra.mxu0 %v2237
        %2239 = vmatprep.subr.mxu0 0.0
        %2240 = vmatpush2.msra.mxu0 0.0
        %2241 = vmatprep.subr.mxu0 0.0
        %2242 = vmatpush2.msra.mxu0 0.0
        %2243 = vmatprep.subr.mxu0 0.0
        %2244 = vmatpush2.msra.mxu0 0.0
        %2245 = vmatprep.subr.mxu0 0.0
        %2246 = vmatpush2.msra.mxu0 0.0
        %2247 = vmatprep.subr.mxu0 0.0
        %2248 = vmatpush2.msra.mxu0 0.0
        %2249 = vmatprep.subr.mxu0 0.0
        %2250 = vmatpush2.msra.mxu0 0.0
        %2251 = vmatprep.subr.mxu0 0.0
        %2252 = vmatpush2.msra.mxu0 0.0
        %2253 = vmatprep.subr.mxu0 0.0
        %2254 = vmatpush2.msra.mxu0 0.0
        %2255 = vmatprep.subr.mxu0 0.0
        %2256 = vmatpush2.msra.mxu0 0.0
        %2257 = vmatprep.subr.mxu0 0.0
        %2258 = vmatpush2.msra.mxu0 0.0
        %2259 = vmatprep.subr.mxu0 0.0
        %2260 = vmatpush2.msra.mxu0 0.0
        %2261 = vmatprep.subr.mxu0 0.0
        %2262 = vmatpush2.msra.mxu0 0.0
        %2263 = vmatprep.subr.mxu0 0.0
        %2264 = vmatpush2.msra.mxu0 0.0
        %2265 = vmatprep.subr.mxu0 0.0
        %2266 = vmatpush2.msra.mxu0 0.0
        %2267 = vmatprep.subr.mxu0 0.0
        %2268 = vmatpush2.msra.mxu0 0.0
        %2269 = vmatprep.subr.mxu0 0.0
        %2270 = vmatpush2.msra.mxu0 0.0
        %2271 = vmatprep.mubr.f32.mxu0 0.0
        %v2272 = vand.u32 %v1777, 4294901760
        %2273 = vmatmul.mubr.f32.gmra.mxu0 %v2272
        %v2274 = vpop.f32.mrf.mxu0
        %v2275 = vadd.f32 %v2196, %v2274
        %v2276 = vpop.f32.mrf.mxu0
        %2277 = vmatprep.mubr.f32.mxu0 0.0
        %v2278 = vand.u32 %v1780, 4294901760
        %2279 = vmatmul.mubr.f32.gmra.mxu0 %v2278
        %v2280 = vpop.f32.mrf.mxu0
        %v2281 = vadd.f32 %v2202, %v2280
        %v2282 = vpop.f32.mrf.mxu0
        %2283 = vdwg.mxu0
        %v2285 = vsel %vm251, %v249, 0
        %v2288 = vsel %vm251, %v250, 0
        %2290 = vmatprep.subr.mxu0 0.0
        %2291 = vmatpush1.msra.mxu0 0.0
        %2292 = vmatprep.subr.mxu0 0.0
        %2293 = vmatpush1.msra.mxu0 0.0
        %2294 = vmatprep.subr.mxu0 0.0
        %2295 = vmatpush1.msra.mxu0 0.0
        %2296 = vmatprep.subr.mxu0 0.0
        %2297 = vmatpush1.msra.mxu0 0.0
        %2298 = vmatprep.subr.mxu0 0.0
        %2299 = vmatpush1.msra.mxu0 0.0
        %2300 = vmatprep.subr.mxu0 0.0
        %2301 = vmatpush1.msra.mxu0 0.0
        %2302 = vmatprep.subr.mxu0 0.0
        %2303 = vmatpush1.msra.mxu0 0.0
        %2304 = vmatprep.subr.mxu0 0.0
        %2305 = vmatpush1.msra.mxu0 0.0
        %2306 = vmatprep.subr.mxu0 0.0
        %2307 = vmatpush1.msra.mxu0 0.0
        %2308 = vmatprep.subr.mxu0 0.0
        %2309 = vmatpush1.msra.mxu0 0.0
        %2310 = vmatprep.subr.mxu0 0.0
        %2311 = vmatpush1.msra.mxu0 0.0
        %2312 = vmatprep.subr.mxu0 0.0
        %2313 = vmatpush1.msra.mxu0 0.0
        %2314 = vmatprep.subr.mxu0 0.0
        %2315 = vmatpush1.msra.mxu0 0.0
        %2316 = vmatprep.subr.mxu0 0.0
        %2317 = vmatpush1.msra.mxu0 0.0
        %2318 = vmatprep.subr.mxu0 0.0
        %v2319 = vand.u32 %v757, 4294901760
        %2320 = vmatpush1.msra.mxu0 %v2319
        %2321 = vmatprep.subr.mxu0 0.0
        %v2322 = vand.u32 %v751, 4294901760
        %2323 = vmatpush1.msra.mxu0 %v2322
        %2324 = vmatprep.subr.mxu0 0.0
        %2325 = vmatpush2.msra.mxu0 0.0
        %2326 = vmatprep.subr.mxu0 0.0
        %2327 = vmatpush2.msra.mxu0 0.0
        %2328 = vmatprep.subr.mxu0 0.0
        %2329 = vmatpush2.msra.mxu0 0.0
        %2330 = vmatprep.subr.mxu0 0.0
        %2331 = vmatpush2.msra.mxu0 0.0
        %2332 = vmatprep.subr.mxu0 0.0
        %2333 = vmatpush2.msra.mxu0 0.0
        %2334 = vmatprep.subr.mxu0 0.0
        %2335 = vmatpush2.msra.mxu0 0.0
        %2336 = vmatprep.subr.mxu0 0.0
        %2337 = vmatpush2.msra.mxu0 0.0
        %2338 = vmatprep.subr.mxu0 0.0
        %2339 = vmatpush2.msra.mxu0 0.0
        %2340 = vmatprep.subr.mxu0 0.0
        %2341 = vmatpush2.msra.mxu0 0.0
        %2342 = vmatprep.subr.mxu0 0.0
        %2343 = vmatpush2.msra.mxu0 0.0
        %2344 = vmatprep.subr.mxu0 0.0
        %2345 = vmatpush2.msra.mxu0 0.0
        %2346 = vmatprep.subr.mxu0 0.0
        %2347 = vmatpush2.msra.mxu0 0.0
        %2348 = vmatprep.subr.mxu0 0.0
        %2349 = vmatpush2.msra.mxu0 0.0
        %2350 = vmatprep.subr.mxu0 0.0
        %2351 = vmatpush2.msra.mxu0 0.0
        %2352 = vmatprep.subr.mxu0 0.0
        %2353 = vmatpush2.msra.mxu0 0.0
        %2354 = vmatprep.subr.mxu0 0.0
        %2355 = vmatpush2.msra.mxu0 0.0
        %2356 = vmatprep.mubr.f32.mxu0 0.0
        %v2357 = vand.u32 %v2285, 4294901760
        %v2358 = vsub.f32 %v2285, %v2357
        %v2359 = vand.u32 %v2358, 4294901760
        %v2360 = vsub.f32 %v2358, %v2359
        %v2361 = vand.u32 %v2360, 4294901760
        %2362 = vmatmul.mubr.f32.gmra.mxu0 %v2361
        %v2363 = vpop.f32.mrf.mxu0
        %v2364 = vadd.f32 0.0, %v2363
        %v2365 = vpop.f32.mrf.mxu0
        %2366 = vmatprep.mubr.f32.mxu0 0.0
        %v2367 = vand.u32 %v2288, 4294901760
        %v2368 = vsub.f32 %v2288, %v2367
        %v2369 = vand.u32 %v2368, 4294901760
        %v2370 = vsub.f32 %v2368, %v2369
        %v2371 = vand.u32 %v2370, 4294901760
        %2372 = vmatmul.mubr.f32.gmra.mxu0 %v2371
        %v2373 = vpop.f32.mrf.mxu0
        %v2374 = vadd.f32 0.0, %v2373
        %v2375 = vpop.f32.mrf.mxu0
        %2376 = vdwg.mxu0
        %2377 = vmatprep.subr.mxu0 0.0
        %2378 = vmatpush1.msra.mxu0 0.0
        %2379 = vmatprep.subr.mxu0 0.0
        %2380 = vmatpush1.msra.mxu0 0.0
        %2381 = vmatprep.subr.mxu0 0.0
        %2382 = vmatpush1.msra.mxu0 0.0
        %2383 = vmatprep.subr.mxu0 0.0
        %2384 = vmatpush1.msra.mxu0 0.0
        %2385 = vmatprep.subr.mxu0 0.0
        %2386 = vmatpush1.msra.mxu0 0.0
        %2387 = vmatprep.subr.mxu0 0.0
        %2388 = vmatpush1.msra.mxu0 0.0
        %2389 = vmatprep.subr.mxu0 0.0
        %2390 = vmatpush1.msra.mxu0 0.0
        %2391 = vmatprep.subr.mxu0 0.0
        %2392 = vmatpush1.msra.mxu0 0.0
        %2393 = vmatprep.subr.mxu0 0.0
        %2394 = vmatpush1.msra.mxu0 0.0
        %2395 = vmatprep.subr.mxu0 0.0
        %2396 = vmatpush1.msra.mxu0 0.0
        %2397 = vmatprep.subr.mxu0 0.0
        %2398 = vmatpush1.msra.mxu0 0.0
        %2399 = vmatprep.subr.mxu0 0.0
        %2400 = vmatpush1.msra.mxu0 0.0
        %2401 = vmatprep.subr.mxu0 0.0
        %2402 = vmatpush1.msra.mxu0 0.0
        %2403 = vmatprep.subr.mxu0 0.0
        %2404 = vmatpush1.msra.mxu0 0.0
        %2405 = vmatprep.subr.mxu0 0.0
        %v2406 = vand.u32 %v757, 4294901760
        %v2407 = vsub.f32 %v757, %v2406
        %v2408 = vand.u32 %v2407, 4294901760
        %v2409 = vsub.f32 %v2407, %v2408
        %v2410 = vand.u32 %v2409, 4294901760
        %2411 = vmatpush1.msra.mxu0 %v2410
        %2412 = vmatprep.subr.mxu0 0.0
        %v2413 = vand.u32 %v751, 4294901760
        %v2414 = vsub.f32 %v751, %v2413
        %v2415 = vand.u32 %v2414, 4294901760
        %v2416 = vsub.f32 %v2414, %v2415
        %v2417 = vand.u32 %v2416, 4294901760
        %2418 = vmatpush1.msra.mxu0 %v2417
        %2419 = vmatprep.subr.mxu0 0.0
        %2420 = vmatpush2.msra.mxu0 0.0
        %2421 = vmatprep.subr.mxu0 0.0
        %2422 = vmatpush2.msra.mxu0 0.0
        %2423 = vmatprep.subr.mxu0 0.0
        %2424 = vmatpush2.msra.mxu0 0.0
        %2425 = vmatprep.subr.mxu0 0.0
        %2426 = vmatpush2.msra.mxu0 0.0
        %2427 = vmatprep.subr.mxu0 0.0
        %2428 = vmatpush2.msra.mxu0 0.0
        %2429 = vmatprep.subr.mxu0 0.0
        %2430 = vmatpush2.msra.mxu0 0.0
        %2431 = vmatprep.subr.mxu0 0.0
        %2432 = vmatpush2.msra.mxu0 0.0
        %2433 = vmatprep.subr.mxu0 0.0
        %2434 = vmatpush2.msra.mxu0 0.0
        %2435 = vmatprep.subr.mxu0 0.0
        %2436 = vmatpush2.msra.mxu0 0.0
        %2437 = vmatprep.subr.mxu0 0.0
        %2438 = vmatpush2.msra.mxu0 0.0
        %2439 = vmatprep.subr.mxu0 0.0
        %2440 = vmatpush2.msra.mxu0 0.0
        %2441 = vmatprep.subr.mxu0 0.0
        %2442 = vmatpush2.msra.mxu0 0.0
        %2443 = vmatprep.subr.mxu0 0.0
        %2444 = vmatpush2.msra.mxu0 0.0
        %2445 = vmatprep.subr.mxu0 0.0
        %2446 = vmatpush2.msra.mxu0 0.0
        %2447 = vmatprep.subr.mxu0 0.0
        %2448 = vmatpush2.msra.mxu0 0.0
        %2449 = vmatprep.subr.mxu0 0.0
        %2450 = vmatpush2.msra.mxu0 0.0
        %2451 = vmatprep.mubr.f32.mxu0 0.0
        %v2452 = vand.u32 %v2285, 4294901760
        %2453 = vmatmul.mubr.f32.gmra.mxu0 %v2452
        %v2454 = vpop.f32.mrf.mxu0
        %v2455 = vadd.f32 %v2364, %v2454
        %v2456 = vpop.f32.mrf.mxu0
        %2457 = vmatprep.mubr.f32.mxu0 0.0
        %v2458 = vand.u32 %v2288, 4294901760
        %2459 = vmatmul.mubr.f32.gmra.mxu0 %v2458
        %v2460 = vpop.f32.mrf.mxu0
        %v2461 = vadd.f32 %v2374, %v2460
        %v2462 = vpop.f32.mrf.mxu0
        %2463 = vdwg.mxu0
        %2464 = vmatprep.subr.mxu0 0.0
        %2465 = vmatpush1.msra.mxu0 0.0
        %2466 = vmatprep.subr.mxu0 0.0
        %2467 = vmatpush1.msra.mxu0 0.0
        %2468 = vmatprep.subr.mxu0 0.0
        %2469 = vmatpush1.msra.mxu0 0.0
        %2470 = vmatprep.subr.mxu0 0.0
        %2471 = vmatpush1.msra.mxu0 0.0
        %2472 = vmatprep.subr.mxu0 0.0
        %2473 = vmatpush1.msra.mxu0 0.0
        %2474 = vmatprep.subr.mxu0 0.0
        %2475 = vmatpush1.msra.mxu0 0.0
        %2476 = vmatprep.subr.mxu0 0.0
        %2477 = vmatpush1.msra.mxu0 0.0
        %2478 = vmatprep.subr.mxu0 0.0
        %2479 = vmatpush1.msra.mxu0 0.0
        %2480 = vmatprep.subr.mxu0 0.0
        %2481 = vmatpush1.msra.mxu0 0.0
        %2482 = vmatprep.subr.mxu0 0.0
        %2483 = vmatpush1.msra.mxu0 0.0
        %2484 = vmatprep.subr.mxu0 0.0
        %2485 = vmatpush1.msra.mxu0 0.0
        %2486 = vmatprep.subr.mxu0 0.0
        %2487 = vmatpush1.msra.mxu0 0.0
        %2488 = vmatprep.subr.mxu0 0.0
        %2489 = vmatpush1.msra.mxu0 0.0
        %2490 = vmatprep.subr.mxu0 0.0
        %2491 = vmatpush1.msra.mxu0 0.0
        %2492 = vmatprep.subr.mxu0 0.0
        %v2493 = vand.u32 %v757, 4294901760
        %v2494 = vsub.f32 %v757, %v2493
        %2495 = vmatpush1.msra.mxu0 %v2494
        %2496 = vmatprep.subr.mxu0 0.0
        %v2497 = vand.u32 %v751, 4294901760
        %v2498 = vsub.f32 %v751, %v2497
        %2499 = vmatpush1.msra.mxu0 %v2498
        %2500 = vmatprep.subr.mxu0 0.0
        %2501 = vmatpush2.msra.mxu0 0.0
        %2502 = vmatprep.subr.mxu0 0.0
        %2503 = vmatpush2.msra.mxu0 0.0
        %2504 = vmatprep.subr.mxu0 0.0
        %2505 = vmatpush2.msra.mxu0 0.0
        %2506 = vmatprep.subr.mxu0 0.0
        %2507 = vmatpush2.msra.mxu0 0.0
        %2508 = vmatprep.subr.mxu0 0.0
        %2509 = vmatpush2.msra.mxu0 0.0
        %2510 = vmatprep.subr.mxu0 0.0
        %2511 = vmatpush2.msra.mxu0 0.0
        %2512 = vmatprep.subr.mxu0 0.0
        %2513 = vmatpush2.msra.mxu0 0.0
        %2514 = vmatprep.subr.mxu0 0.0
        %2515 = vmatpush2.msra.mxu0 0.0
        %2516 = vmatprep.subr.mxu0 0.0
        %2517 = vmatpush2.msra.mxu0 0.0
        %2518 = vmatprep.subr.mxu0 0.0
        %2519 = vmatpush2.msra.mxu0 0.0
        %2520 = vmatprep.subr.mxu0 0.0
        %2521 = vmatpush2.msra.mxu0 0.0
        %2522 = vmatprep.subr.mxu0 0.0
        %2523 = vmatpush2.msra.mxu0 0.0
        %2524 = vmatprep.subr.mxu0 0.0
        %2525 = vmatpush2.msra.mxu0 0.0
        %2526 = vmatprep.subr.mxu0 0.0
        %2527 = vmatpush2.msra.mxu0 0.0
        %2528 = vmatprep.subr.mxu0 0.0
        %2529 = vmatpush2.msra.mxu0 0.0
        %2530 = vmatprep.subr.mxu0 0.0
        %2531 = vmatpush2.msra.mxu0 0.0
        %2532 = vmatprep.mubr.f32.mxu0 0.0
        %v2533 = vand.u32 %v2285, 4294901760
        %v2534 = vsub.f32 %v2285, %v2533
        %2535 = vmatmul.mubr.f32.gmra.mxu0 %v2534
        %v2536 = vpop.f32.mrf.mxu0
        %v2537 = vadd.f32 %v2455, %v2536
        %v2538 = vpop.f32.mrf.mxu0
        %2539 = vmatprep.mubr.f32.mxu0 0.0
        %v2540 = vand.u32 %v2288, 4294901760
        %v2541 = vsub.f32 %v2288, %v2540
        %2542 = vmatmul.mubr.f32.gmra.mxu0 %v2541
        %v2543 = vpop.f32.mrf.mxu0
        %v2544 = vadd.f32 %v2461, %v2543
        %v2545 = vpop.f32.mrf.mxu0
        %2546 = vdwg.mxu0
        %2547 = vmatprep.subr.mxu0 0.0
        %2548 = vmatpush1.msra.mxu0 0.0
        %2549 = vmatprep.subr.mxu0 0.0
        %2550 = vmatpush1.msra.mxu0 0.0
        %2551 = vmatprep.subr.mxu0 0.0
        %2552 = vmatpush1.msra.mxu0 0.0
        %2553 = vmatprep.subr.mxu0 0.0
        %2554 = vmatpush1.msra.mxu0 0.0
        %2555 = vmatprep.subr.mxu0 0.0
        %2556 = vmatpush1.msra.mxu0 0.0
        %2557 = vmatprep.subr.mxu0 0.0
        %2558 = vmatpush1.msra.mxu0 0.0
        %2559 = vmatprep.subr.mxu0 0.0
        %2560 = vmatpush1.msra.mxu0 0.0
        %2561 = vmatprep.subr.mxu0 0.0
        %2562 = vmatpush1.msra.mxu0 0.0
        %2563 = vmatprep.subr.mxu0 0.0
        %2564 = vmatpush1.msra.mxu0 0.0
        %2565 = vmatprep.subr.mxu0 0.0
        %2566 = vmatpush1.msra.mxu0 0.0
        %2567 = vmatprep.subr.mxu0 0.0
        %2568 = vmatpush1.msra.mxu0 0.0
        %2569 = vmatprep.subr.mxu0 0.0
        %2570 = vmatpush1.msra.mxu0 0.0
        %2571 = vmatprep.subr.mxu0 0.0
        %2572 = vmatpush1.msra.mxu0 0.0
        %2573 = vmatprep.subr.mxu0 0.0
        %2574 = vmatpush1.msra.mxu0 0.0
        %2575 = vmatprep.subr.mxu0 0.0
        %v2576 = vand.u32 %v757, 4294901760
        %2577 = vmatpush1.msra.mxu0 %v2576
        %2578 = vmatprep.subr.mxu0 0.0
        %v2579 = vand.u32 %v751, 4294901760
        %2580 = vmatpush1.msra.mxu0 %v2579
        %2581 = vmatprep.subr.mxu0 0.0
        %2582 = vmatpush2.msra.mxu0 0.0
        %2583 = vmatprep.subr.mxu0 0.0
        %2584 = vmatpush2.msra.mxu0 0.0
        %2585 = vmatprep.subr.mxu0 0.0
        %2586 = vmatpush2.msra.mxu0 0.0
        %2587 = vmatprep.subr.mxu0 0.0
        %2588 = vmatpush2.msra.mxu0 0.0
        %2589 = vmatprep.subr.mxu0 0.0
        %2590 = vmatpush2.msra.mxu0 0.0
        %2591 = vmatprep.subr.mxu0 0.0
        %2592 = vmatpush2.msra.mxu0 0.0
        %2593 = vmatprep.subr.mxu0 0.0
        %2594 = vmatpush2.msra.mxu0 0.0
        %2595 = vmatprep.subr.mxu0 0.0
        %2596 = vmatpush2.msra.mxu0 0.0
        %2597 = vmatprep.subr.mxu0 0.0
        %2598 = vmatpush2.msra.mxu0 0.0
        %2599 = vmatprep.subr.mxu0 0.0
        %2600 = vmatpush2.msra.mxu0 0.0
        %2601 = vmatprep.subr.mxu0 0.0
        %2602 = vmatpush2.msra.mxu0 0.0
        %2603 = vmatprep.subr.mxu0 0.0
        %2604 = vmatpush2.msra.mxu0 0.0
        %2605 = vmatprep.subr.mxu0 0.0
        %2606 = vmatpush2.msra.mxu0 0.0
        %2607 = vmatprep.subr.mxu0 0.0
        %2608 = vmatpush2.msra.mxu0 0.0
        %2609 = vmatprep.subr.mxu0 0.0
        %2610 = vmatpush2.msra.mxu0 0.0
        %2611 = vmatprep.subr.mxu0 0.0
        %2612 = vmatpush2.msra.mxu0 0.0
        %2613 = vmatprep.mubr.f32.mxu0 0.0
        %v2614 = vand.u32 %v2285, 4294901760
        %v2615 = vsub.f32 %v2285, %v2614
        %v2616 = vand.u32 %v2615, 4294901760
        %2617 = vmatmul.mubr.f32.gmra.mxu0 %v2616
        %v2618 = vpop.f32.mrf.mxu0
        %v2619 = vadd.f32 %v2537, %v2618
        %v2620 = vpop.f32.mrf.mxu0
        %2621 = vmatprep.mubr.f32.mxu0 0.0
        %v2622 = vand.u32 %v2288, 4294901760
        %v2623 = vsub.f32 %v2288, %v2622
        %v2624 = vand.u32 %v2623, 4294901760
        %2625 = vmatmul.mubr.f32.gmra.mxu0 %v2624
        %v2626 = vpop.f32.mrf.mxu0
        %v2627 = vadd.f32 %v2544, %v2626
        %v2628 = vpop.f32.mrf.mxu0
        %2629 = vdwg.mxu0
        %2630 = vmatprep.subr.mxu0 0.0
        %2631 = vmatpush1.msra.mxu0 0.0
        %2632 = vmatprep.subr.mxu0 0.0
        %2633 = vmatpush1.msra.mxu0 0.0
        %2634 = vmatprep.subr.mxu0 0.0
        %2635 = vmatpush1.msra.mxu0 0.0
        %2636 = vmatprep.subr.mxu0 0.0
        %2637 = vmatpush1.msra.mxu0 0.0
        %2638 = vmatprep.subr.mxu0 0.0
        %2639 = vmatpush1.msra.mxu0 0.0
        %2640 = vmatprep.subr.mxu0 0.0
        %2641 = vmatpush1.msra.mxu0 0.0
        %2642 = vmatprep.subr.mxu0 0.0
        %2643 = vmatpush1.msra.mxu0 0.0
        %2644 = vmatprep.subr.mxu0 0.0
        %2645 = vmatpush1.msra.mxu0 0.0
        %2646 = vmatprep.subr.mxu0 0.0
        %2647 = vmatpush1.msra.mxu0 0.0
        %2648 = vmatprep.subr.mxu0 0.0
        %2649 = vmatpush1.msra.mxu0 0.0
        %2650 = vmatprep.subr.mxu0 0.0
        %2651 = vmatpush1.msra.mxu0 0.0
        %2652 = vmatprep.subr.mxu0 0.0
        %2653 = vmatpush1.msra.mxu0 0.0
        %2654 = vmatprep.subr.mxu0 0.0
        %2655 = vmatpush1.msra.mxu0 0.0
        %2656 = vmatprep.subr.mxu0 0.0
        %2657 = vmatpush1.msra.mxu0 0.0
        %2658 = vmatprep.subr.mxu0 0.0
        %v2659 = vand.u32 %v757, 4294901760
        %v2660 = vsub.f32 %v757, %v2659
        %v2661 = vand.u32 %v2660, 4294901760
        %2662 = vmatpush1.msra.mxu0 %v2661
        %2663 = vmatprep.subr.mxu0 0.0
        %v2664 = vand.u32 %v751, 4294901760
        %v2665 = vsub.f32 %v751, %v2664
        %v2666 = vand.u32 %v2665, 4294901760
        %2667 = vmatpush1.msra.mxu0 %v2666
        %2668 = vmatprep.subr.mxu0 0.0
        %2669 = vmatpush2.msra.mxu0 0.0
        %2670 = vmatprep.subr.mxu0 0.0
        %2671 = vmatpush2.msra.mxu0 0.0
        %2672 = vmatprep.subr.mxu0 0.0
        %2673 = vmatpush2.msra.mxu0 0.0
        %2674 = vmatprep.subr.mxu0 0.0
        %2675 = vmatpush2.msra.mxu0 0.0
        %2676 = vmatprep.subr.mxu0 0.0
        %2677 = vmatpush2.msra.mxu0 0.0
        %2678 = vmatprep.subr.mxu0 0.0
        %2679 = vmatpush2.msra.mxu0 0.0
        %2680 = vmatprep.subr.mxu0 0.0
        %2681 = vmatpush2.msra.mxu0 0.0
        %2682 = vmatprep.subr.mxu0 0.0
        %2683 = vmatpush2.msra.mxu0 0.0
        %2684 = vmatprep.subr.mxu0 0.0
        %2685 = vmatpush2.msra.mxu0 0.0
        %2686 = vmatprep.subr.mxu0 0.0
        %2687 = vmatpush2.msra.mxu0 0.0
        %2688 = vmatprep.subr.mxu0 0.0
        %2689 = vmatpush2.msra.mxu0 0.0
        %2690 = vmatprep.subr.mxu0 0.0
        %2691 = vmatpush2.msra.mxu0 0.0
        %2692 = vmatprep.subr.mxu0 0.0
        %2693 = vmatpush2.msra.mxu0 0.0
        %2694 = vmatprep.subr.mxu0 0.0
        %2695 = vmatpush2.msra.mxu0 0.0
        %2696 = vmatprep.subr.mxu0 0.0
        %2697 = vmatpush2.msra.mxu0 0.0
        %2698 = vmatprep.subr.mxu0 0.0
        %2699 = vmatpush2.msra.mxu0 0.0
        %2700 = vmatprep.mubr.f32.mxu0 0.0
        %v2701 = vand.u32 %v2285, 4294901760
        %2702 = vmatmul.mubr.f32.gmra.mxu0 %v2701
        %v2703 = vpop.f32.mrf.mxu0
        %v2704 = vadd.f32 %v2619, %v2703
        %v2705 = vpop.f32.mrf.mxu0
        %2706 = vmatprep.mubr.f32.mxu0 0.0
        %v2707 = vand.u32 %v2288, 4294901760
        %2708 = vmatmul.mubr.f32.gmra.mxu0 %v2707
        %v2709 = vpop.f32.mrf.mxu0
        %v2710 = vadd.f32 %v2627, %v2709
        %v2711 = vpop.f32.mrf.mxu0
        %2712 = vdwg.mxu0
        %2713 = vmatprep.subr.mxu0 0.0
        %2714 = vmatpush1.msra.mxu0 0.0
        %2715 = vmatprep.subr.mxu0 0.0
        %2716 = vmatpush1.msra.mxu0 0.0
        %2717 = vmatprep.subr.mxu0 0.0
        %2718 = vmatpush1.msra.mxu0 0.0
        %2719 = vmatprep.subr.mxu0 0.0
        %2720 = vmatpush1.msra.mxu0 0.0
        %2721 = vmatprep.subr.mxu0 0.0
        %2722 = vmatpush1.msra.mxu0 0.0
        %2723 = vmatprep.subr.mxu0 0.0
        %2724 = vmatpush1.msra.mxu0 0.0
        %2725 = vmatprep.subr.mxu0 0.0
        %2726 = vmatpush1.msra.mxu0 0.0
        %2727 = vmatprep.subr.mxu0 0.0
        %2728 = vmatpush1.msra.mxu0 0.0
        %2729 = vmatprep.subr.mxu0 0.0
        %2730 = vmatpush1.msra.mxu0 0.0
        %2731 = vmatprep.subr.mxu0 0.0
        %2732 = vmatpush1.msra.mxu0 0.0
        %2733 = vmatprep.subr.mxu0 0.0
        %2734 = vmatpush1.msra.mxu0 0.0
        %2735 = vmatprep.subr.mxu0 0.0
        %2736 = vmatpush1.msra.mxu0 0.0
        %2737 = vmatprep.subr.mxu0 0.0
        %2738 = vmatpush1.msra.mxu0 0.0
        %2739 = vmatprep.subr.mxu0 0.0
        %2740 = vmatpush1.msra.mxu0 0.0
        %2741 = vmatprep.subr.mxu0 0.0
        %v2742 = vand.u32 %v757, 4294901760
        %2743 = vmatpush1.msra.mxu0 %v2742
        %2744 = vmatprep.subr.mxu0 0.0
        %v2745 = vand.u32 %v751, 4294901760
        %2746 = vmatpush1.msra.mxu0 %v2745
        %2747 = vmatprep.subr.mxu0 0.0
        %2748 = vmatpush2.msra.mxu0 0.0
        %2749 = vmatprep.subr.mxu0 0.0
        %2750 = vmatpush2.msra.mxu0 0.0
        %2751 = vmatprep.subr.mxu0 0.0
        %2752 = vmatpush2.msra.mxu0 0.0
        %2753 = vmatprep.subr.mxu0 0.0
        %2754 = vmatpush2.msra.mxu0 0.0
        %2755 = vmatprep.subr.mxu0 0.0
        %2756 = vmatpush2.msra.mxu0 0.0
        %2757 = vmatprep.subr.mxu0 0.0
        %2758 = vmatpush2.msra.mxu0 0.0
        %2759 = vmatprep.subr.mxu0 0.0
        %2760 = vmatpush2.msra.mxu0 0.0
        %2761 = vmatprep.subr.mxu0 0.0
        %2762 = vmatpush2.msra.mxu0 0.0
        %2763 = vmatprep.subr.mxu0 0.0
        %2764 = vmatpush2.msra.mxu0 0.0
        %2765 = vmatprep.subr.mxu0 0.0
        %2766 = vmatpush2.msra.mxu0 0.0
        %2767 = vmatprep.subr.mxu0 0.0
        %2768 = vmatpush2.msra.mxu0 0.0
        %2769 = vmatprep.subr.mxu0 0.0
        %2770 = vmatpush2.msra.mxu0 0.0
        %2771 = vmatprep.subr.mxu0 0.0
        %2772 = vmatpush2.msra.mxu0 0.0
        %2773 = vmatprep.subr.mxu0 0.0
        %2774 = vmatpush2.msra.mxu0 0.0
        %2775 = vmatprep.subr.mxu0 0.0
        %2776 = vmatpush2.msra.mxu0 0.0
        %2777 = vmatprep.subr.mxu0 0.0
        %2778 = vmatpush2.msra.mxu0 0.0
        %2779 = vmatprep.mubr.f32.mxu0 0.0
        %v2780 = vand.u32 %v2285, 4294901760
        %2781 = vmatmul.mubr.f32.gmra.mxu0 %v2780
        %v2782 = vpop.f32.mrf.mxu0
        %v2783 = vadd.f32 %v2704, %v2782
        %v2784 = vpop.f32.mrf.mxu0
        %2785 = vmatprep.mubr.f32.mxu0 0.0
        %v2786 = vand.u32 %v2288, 4294901760
        %2787 = vmatmul.mubr.f32.gmra.mxu0 %v2786
        %v2788 = vpop.f32.mrf.mxu0
        %v2789 = vadd.f32 %v2710, %v2788
        %v2790 = vpop.f32.mrf.mxu0
        %2791 = vdwg.mxu0
        %2792 = vmatprep.subr.mxu0 0.0
        %2793 = vmatpush1.msra.mxu0 0.0
        %2794 = vmatprep.subr.mxu0 0.0
        %2795 = vmatpush1.msra.mxu0 0.0
        %2796 = vmatprep.subr.mxu0 0.0
        %2797 = vmatpush1.msra.mxu0 0.0
        %2798 = vmatprep.subr.mxu0 0.0
        %2799 = vmatpush1.msra.mxu0 0.0
        %2800 = vmatprep.subr.mxu0 0.0
        %2801 = vmatpush1.msra.mxu0 0.0
        %2802 = vmatprep.subr.mxu0 0.0
        %2803 = vmatpush1.msra.mxu0 0.0
        %2804 = vmatprep.subr.mxu0 0.0
        %2805 = vmatpush1.msra.mxu0 0.0
        %2806 = vmatprep.subr.mxu0 0.0
        %2807 = vmatpush1.msra.mxu0 0.0
        %2808 = vmatprep.subr.mxu0 0.0
        %2809 = vmatpush1.msra.mxu0 0.0
        %2810 = vmatprep.subr.mxu0 0.0
        %2811 = vmatpush1.msra.mxu0 0.0
        %2812 = vmatprep.subr.mxu0 0.0
        %2813 = vmatpush1.msra.mxu0 0.0
        %2814 = vmatprep.subr.mxu0 0.0
        %2815 = vmatpush1.msra.mxu0 0.0
        %2816 = vmatprep.subr.mxu0 0.0
        %2817 = vmatpush1.msra.mxu0 0.0
        %2818 = vmatprep.subr.mxu0 0.0
        %2819 = vmatpush1.msra.mxu0 0.0
        %2820 = vmatprep.subr.mxu0 0.0
        %v2821 = vand.u32 %v1265, 4294901760
        %2822 = vmatpush1.msra.mxu0 %v2821
        %2823 = vmatprep.subr.mxu0 0.0
        %v2824 = vand.u32 %v1259, 4294901760
        %2825 = vmatpush1.msra.mxu0 %v2824
        %2826 = vmatprep.subr.mxu0 0.0
        %2827 = vmatpush2.msra.mxu0 0.0
        %2828 = vmatprep.subr.mxu0 0.0
        %2829 = vmatpush2.msra.mxu0 0.0
        %2830 = vmatprep.subr.mxu0 0.0
        %2831 = vmatpush2.msra.mxu0 0.0
        %2832 = vmatprep.subr.mxu0 0.0
        %2833 = vmatpush2.msra.mxu0 0.0
        %2834 = vmatprep.subr.mxu0 0.0
        %2835 = vmatpush2.msra.mxu0 0.0
        %2836 = vmatprep.subr.mxu0 0.0
        %2837 = vmatpush2.msra.mxu0 0.0
        %2838 = vmatprep.subr.mxu0 0.0
        %2839 = vmatpush2.msra.mxu0 0.0
        %2840 = vmatprep.subr.mxu0 0.0
        %2841 = vmatpush2.msra.mxu0 0.0
        %2842 = vmatprep.subr.mxu0 0.0
        %2843 = vmatpush2.msra.mxu0 0.0
        %2844 = vmatprep.subr.mxu0 0.0
        %2845 = vmatpush2.msra.mxu0 0.0
        %2846 = vmatprep.subr.mxu0 0.0
        %2847 = vmatpush2.msra.mxu0 0.0
        %2848 = vmatprep.subr.mxu0 0.0
        %2849 = vmatpush2.msra.mxu0 0.0
        %2850 = vmatprep.subr.mxu0 0.0
        %2851 = vmatpush2.msra.mxu0 0.0
        %2852 = vmatprep.subr.mxu0 0.0
        %2853 = vmatpush2.msra.mxu0 0.0
        %2854 = vmatprep.subr.mxu0 0.0
        %2855 = vmatpush2.msra.mxu0 0.0
        %2856 = vmatprep.subr.mxu0 0.0
        %2857 = vmatpush2.msra.mxu0 0.0
        %2858 = vmatprep.mubr.f32.mxu0 0.0
        %v2859 = vand.u32 %v2285, 4294901760
        %v2860 = vsub.f32 %v2285, %v2859
        %v2861 = vand.u32 %v2860, 4294901760
        %v2862 = vsub.f32 %v2860, %v2861
        %v2863 = vand.u32 %v2862, 4294901760
        %2864 = vmatmul.mubr.f32.gmra.mxu0 %v2863
        %v2865 = vpop.f32.mrf.mxu0
        %v2866 = vadd.f32 0.0, %v2865
        %v2867 = vpop.f32.mrf.mxu0
        %2868 = vmatprep.mubr.f32.mxu0 0.0
        %v2869 = vand.u32 %v2288, 4294901760
        %v2870 = vsub.f32 %v2288, %v2869
        %v2871 = vand.u32 %v2870, 4294901760
        %v2872 = vsub.f32 %v2870, %v2871
        %v2873 = vand.u32 %v2872, 4294901760
        %2874 = vmatmul.mubr.f32.gmra.mxu0 %v2873
        %v2875 = vpop.f32.mrf.mxu0
        %v2876 = vadd.f32 0.0, %v2875
        %v2877 = vpop.f32.mrf.mxu0
        %2878 = vdwg.mxu0
        %2879 = vmatprep.subr.mxu0 0.0
        %2880 = vmatpush1.msra.mxu0 0.0
        %2881 = vmatprep.subr.mxu0 0.0
        %2882 = vmatpush1.msra.mxu0 0.0
        %2883 = vmatprep.subr.mxu0 0.0
        %2884 = vmatpush1.msra.mxu0 0.0
        %2885 = vmatprep.subr.mxu0 0.0
        %2886 = vmatpush1.msra.mxu0 0.0
        %2887 = vmatprep.subr.mxu0 0.0
        %2888 = vmatpush1.msra.mxu0 0.0
        %2889 = vmatprep.subr.mxu0 0.0
        %2890 = vmatpush1.msra.mxu0 0.0
        %2891 = vmatprep.subr.mxu0 0.0
        %2892 = vmatpush1.msra.mxu0 0.0
        %2893 = vmatprep.subr.mxu0 0.0
        %2894 = vmatpush1.msra.mxu0 0.0
        %2895 = vmatprep.subr.mxu0 0.0
        %2896 = vmatpush1.msra.mxu0 0.0
        %2897 = vmatprep.subr.mxu0 0.0
        %2898 = vmatpush1.msra.mxu0 0.0
        %2899 = vmatprep.subr.mxu0 0.0
        %2900 = vmatpush1.msra.mxu0 0.0
        %2901 = vmatprep.subr.mxu0 0.0
        %2902 = vmatpush1.msra.mxu0 0.0
        %2903 = vmatprep.subr.mxu0 0.0
        %2904 = vmatpush1.msra.mxu0 0.0
        %2905 = vmatprep.subr.mxu0 0.0
        %2906 = vmatpush1.msra.mxu0 0.0
        %2907 = vmatprep.subr.mxu0 0.0
        %v2908 = vand.u32 %v1265, 4294901760
        %v2909 = vsub.f32 %v1265, %v2908
        %v2910 = vand.u32 %v2909, 4294901760
        %v2911 = vsub.f32 %v2909, %v2910
        %v2912 = vand.u32 %v2911, 4294901760
        %2913 = vmatpush1.msra.mxu0 %v2912
        %2914 = vmatprep.subr.mxu0 0.0
        %v2915 = vand.u32 %v1259, 4294901760
        %v2916 = vsub.f32 %v1259, %v2915
        %v2917 = vand.u32 %v2916, 4294901760
        %v2918 = vsub.f32 %v2916, %v2917
        %v2919 = vand.u32 %v2918, 4294901760
        %2920 = vmatpush1.msra.mxu0 %v2919
        %2921 = vmatprep.subr.mxu0 0.0
        %2922 = vmatpush2.msra.mxu0 0.0
        %2923 = vmatprep.subr.mxu0 0.0
        %2924 = vmatpush2.msra.mxu0 0.0
        %2925 = vmatprep.subr.mxu0 0.0
        %2926 = vmatpush2.msra.mxu0 0.0
        %2927 = vmatprep.subr.mxu0 0.0
        %2928 = vmatpush2.msra.mxu0 0.0
        %2929 = vmatprep.subr.mxu0 0.0
        %2930 = vmatpush2.msra.mxu0 0.0
        %2931 = vmatprep.subr.mxu0 0.0
        %2932 = vmatpush2.msra.mxu0 0.0
        %2933 = vmatprep.subr.mxu0 0.0
        %2934 = vmatpush2.msra.mxu0 0.0
        %2935 = vmatprep.subr.mxu0 0.0
        %2936 = vmatpush2.msra.mxu0 0.0
        %2937 = vmatprep.subr.mxu0 0.0
        %2938 = vmatpush2.msra.mxu0 0.0
        %2939 = vmatprep.subr.mxu0 0.0
        %2940 = vmatpush2.msra.mxu0 0.0
        %2941 = vmatprep.subr.mxu0 0.0
        %2942 = vmatpush2.msra.mxu0 0.0
        %2943 = vmatprep.subr.mxu0 0.0
        %2944 = vmatpush2.msra.mxu0 0.0
        %2945 = vmatprep.subr.mxu0 0.0
        %2946 = vmatpush2.msra.mxu0 0.0
        %2947 = vmatprep.subr.mxu0 0.0
        %2948 = vmatpush2.msra.mxu0 0.0
        %2949 = vmatprep.subr.mxu0 0.0
        %2950 = vmatpush2.msra.mxu0 0.0
        %2951 = vmatprep.subr.mxu0 0.0
        %2952 = vmatpush2.msra.mxu0 0.0
        %2953 = vmatprep.mubr.f32.mxu0 0.0
        %v2954 = vand.u32 %v2285, 4294901760
        %2955 = vmatmul.mubr.f32.gmra.mxu0 %v2954
        %v2956 = vpop.f32.mrf.mxu0
        %v2957 = vadd.f32 %v2866, %v2956
        %v2958 = vpop.f32.mrf.mxu0
        %2959 = vmatprep.mubr.f32.mxu0 0.0
        %v2960 = vand.u32 %v2288, 4294901760
        %2961 = vmatmul.mubr.f32.gmra.mxu0 %v2960
        %v2962 = vpop.f32.mrf.mxu0
        %v2963 = vadd.f32 %v2876, %v2962
        %v2964 = vpop.f32.mrf.mxu0
        %2965 = vdwg.mxu0
        %2966 = vmatprep.subr.mxu0 0.0
        %2967 = vmatpush1.msra.mxu0 0.0
        %2968 = vmatprep.subr.mxu0 0.0
        %2969 = vmatpush1.msra.mxu0 0.0
        %2970 = vmatprep.subr.mxu0 0.0
        %2971 = vmatpush1.msra.mxu0 0.0
        %2972 = vmatprep.subr.mxu0 0.0
        %2973 = vmatpush1.msra.mxu0 0.0
        %2974 = vmatprep.subr.mxu0 0.0
        %2975 = vmatpush1.msra.mxu0 0.0
        %2976 = vmatprep.subr.mxu0 0.0
        %2977 = vmatpush1.msra.mxu0 0.0
        %2978 = vmatprep.subr.mxu0 0.0
        %2979 = vmatpush1.msra.mxu0 0.0
        %2980 = vmatprep.subr.mxu0 0.0
        %2981 = vmatpush1.msra.mxu0 0.0
        %2982 = vmatprep.subr.mxu0 0.0
        %2983 = vmatpush1.msra.mxu0 0.0
        %2984 = vmatprep.subr.mxu0 0.0
        %2985 = vmatpush1.msra.mxu0 0.0
        %2986 = vmatprep.subr.mxu0 0.0
        %2987 = vmatpush1.msra.mxu0 0.0
        %2988 = vmatprep.subr.mxu0 0.0
        %2989 = vmatpush1.msra.mxu0 0.0
        %2990 = vmatprep.subr.mxu0 0.0
        %2991 = vmatpush1.msra.mxu0 0.0
        %2992 = vmatprep.subr.mxu0 0.0
        %2993 = vmatpush1.msra.mxu0 0.0
        %2994 = vmatprep.subr.mxu0 0.0
        %v2995 = vand.u32 %v1265, 4294901760
        %v2996 = vsub.f32 %v1265, %v2995
        %2997 = vmatpush1.msra.mxu0 %v2996
        %2998 = vmatprep.subr.mxu0 0.0
        %v2999 = vand.u32 %v1259, 4294901760
        %v3000 = vsub.f32 %v1259, %v2999
        %3001 = vmatpush1.msra.mxu0 %v3000
        %3002 = vmatprep.subr.mxu0 0.0
        %3003 = vmatpush2.msra.mxu0 0.0
        %3004 = vmatprep.subr.mxu0 0.0
        %3005 = vmatpush2.msra.mxu0 0.0
        %3006 = vmatprep.subr.mxu0 0.0
        %3007 = vmatpush2.msra.mxu0 0.0
        %3008 = vmatprep.subr.mxu0 0.0
        %3009 = vmatpush2.msra.mxu0 0.0
        %3010 = vmatprep.subr.mxu0 0.0
        %3011 = vmatpush2.msra.mxu0 0.0
        %3012 = vmatprep.subr.mxu0 0.0
        %3013 = vmatpush2.msra.mxu0 0.0
        %3014 = vmatprep.subr.mxu0 0.0
        %3015 = vmatpush2.msra.mxu0 0.0
        %3016 = vmatprep.subr.mxu0 0.0
        %3017 = vmatpush2.msra.mxu0 0.0
        %3018 = vmatprep.subr.mxu0 0.0
        %3019 = vmatpush2.msra.mxu0 0.0
        %3020 = vmatprep.subr.mxu0 0.0
        %3021 = vmatpush2.msra.mxu0 0.0
        %3022 = vmatprep.subr.mxu0 0.0
        %3023 = vmatpush2.msra.mxu0 0.0
        %3024 = vmatprep.subr.mxu0 0.0
        %3025 = vmatpush2.msra.mxu0 0.0
        %3026 = vmatprep.subr.mxu0 0.0
        %3027 = vmatpush2.msra.mxu0 0.0
        %3028 = vmatprep.subr.mxu0 0.0
        %3029 = vmatpush2.msra.mxu0 0.0
        %3030 = vmatprep.subr.mxu0 0.0
        %3031 = vmatpush2.msra.mxu0 0.0
        %3032 = vmatprep.subr.mxu0 0.0
        %3033 = vmatpush2.msra.mxu0 0.0
        %3034 = vmatprep.mubr.f32.mxu0 0.0
        %v3035 = vand.u32 %v2285, 4294901760
        %v3036 = vsub.f32 %v2285, %v3035
        %3037 = vmatmul.mubr.f32.gmra.mxu0 %v3036
        %v3038 = vpop.f32.mrf.mxu0
        %v3039 = vadd.f32 %v2957, %v3038
        %v3040 = vpop.f32.mrf.mxu0
        %3041 = vmatprep.mubr.f32.mxu0 0.0
        %v3042 = vand.u32 %v2288, 4294901760
        %v3043 = vsub.f32 %v2288, %v3042
        %3044 = vmatmul.mubr.f32.gmra.mxu0 %v3043
        %v3045 = vpop.f32.mrf.mxu0
        %v3046 = vadd.f32 %v2963, %v3045
        %v3047 = vpop.f32.mrf.mxu0
        %3048 = vdwg.mxu0
        %3049 = vmatprep.subr.mxu0 0.0
        %3050 = vmatpush1.msra.mxu0 0.0
        %3051 = vmatprep.subr.mxu0 0.0
        %3052 = vmatpush1.msra.mxu0 0.0
        %3053 = vmatprep.subr.mxu0 0.0
        %3054 = vmatpush1.msra.mxu0 0.0
        %3055 = vmatprep.subr.mxu0 0.0
        %3056 = vmatpush1.msra.mxu0 0.0
        %3057 = vmatprep.subr.mxu0 0.0
        %3058 = vmatpush1.msra.mxu0 0.0
        %3059 = vmatprep.subr.mxu0 0.0
        %3060 = vmatpush1.msra.mxu0 0.0
        %3061 = vmatprep.subr.mxu0 0.0
        %3062 = vmatpush1.msra.mxu0 0.0
        %3063 = vmatprep.subr.mxu0 0.0
        %3064 = vmatpush1.msra.mxu0 0.0
        %3065 = vmatprep.subr.mxu0 0.0
        %3066 = vmatpush1.msra.mxu0 0.0
        %3067 = vmatprep.subr.mxu0 0.0
        %3068 = vmatpush1.msra.mxu0 0.0
        %3069 = vmatprep.subr.mxu0 0.0
        %3070 = vmatpush1.msra.mxu0 0.0
        %3071 = vmatprep.subr.mxu0 0.0
        %3072 = vmatpush1.msra.mxu0 0.0
        %3073 = vmatprep.subr.mxu0 0.0
        %3074 = vmatpush1.msra.mxu0 0.0
        %3075 = vmatprep.subr.mxu0 0.0
        %3076 = vmatpush1.msra.mxu0 0.0
        %3077 = vmatprep.subr.mxu0 0.0
        %v3078 = vand.u32 %v1265, 4294901760
        %3079 = vmatpush1.msra.mxu0 %v3078
        %3080 = vmatprep.subr.mxu0 0.0
        %v3081 = vand.u32 %v1259, 4294901760
        %3082 = vmatpush1.msra.mxu0 %v3081
        %3083 = vmatprep.subr.mxu0 0.0
        %3084 = vmatpush2.msra.mxu0 0.0
        %3085 = vmatprep.subr.mxu0 0.0
        %3086 = vmatpush2.msra.mxu0 0.0
        %3087 = vmatprep.subr.mxu0 0.0
        %3088 = vmatpush2.msra.mxu0 0.0
        %3089 = vmatprep.subr.mxu0 0.0
        %3090 = vmatpush2.msra.mxu0 0.0
        %3091 = vmatprep.subr.mxu0 0.0
        %3092 = vmatpush2.msra.mxu0 0.0
        %3093 = vmatprep.subr.mxu0 0.0
        %3094 = vmatpush2.msra.mxu0 0.0
        %3095 = vmatprep.subr.mxu0 0.0
        %3096 = vmatpush2.msra.mxu0 0.0
        %3097 = vmatprep.subr.mxu0 0.0
        %3098 = vmatpush2.msra.mxu0 0.0
        %3099 = vmatprep.subr.mxu0 0.0
        %3100 = vmatpush2.msra.mxu0 0.0
        %3101 = vmatprep.subr.mxu0 0.0
        %3102 = vmatpush2.msra.mxu0 0.0
        %3103 = vmatprep.subr.mxu0 0.0
        %3104 = vmatpush2.msra.mxu0 0.0
        %3105 = vmatprep.subr.mxu0 0.0
        %3106 = vmatpush2.msra.mxu0 0.0
        %3107 = vmatprep.subr.mxu0 0.0
        %3108 = vmatpush2.msra.mxu0 0.0
        %3109 = vmatprep.subr.mxu0 0.0
        %3110 = vmatpush2.msra.mxu0 0.0
        %3111 = vmatprep.subr.mxu0 0.0
        %3112 = vmatpush2.msra.mxu0 0.0
        %3113 = vmatprep.subr.mxu0 0.0
        %3114 = vmatpush2.msra.mxu0 0.0
        %3115 = vmatprep.mubr.f32.mxu0 0.0
        %v3116 = vand.u32 %v2285, 4294901760
        %v3117 = vsub.f32 %v2285, %v3116
        %v3118 = vand.u32 %v3117, 4294901760
        %3119 = vmatmul.mubr.f32.gmra.mxu0 %v3118
        %v3120 = vpop.f32.mrf.mxu0
        %v3121 = vadd.f32 %v3039, %v3120
        %v3122 = vpop.f32.mrf.mxu0
        %3123 = vmatprep.mubr.f32.mxu0 0.0
        %v3124 = vand.u32 %v2288, 4294901760
        %v3125 = vsub.f32 %v2288, %v3124
        %v3126 = vand.u32 %v3125, 4294901760
        %3127 = vmatmul.mubr.f32.gmra.mxu0 %v3126
        %v3128 = vpop.f32.mrf.mxu0
        %v3129 = vadd.f32 %v3046, %v3128
        %v3130 = vpop.f32.mrf.mxu0
        %3131 = vdwg.mxu0
        %3132 = vmatprep.subr.mxu0 0.0
        %3133 = vmatpush1.msra.mxu0 0.0
        %3134 = vmatprep.subr.mxu0 0.0
        %3135 = vmatpush1.msra.mxu0 0.0
        %3136 = vmatprep.subr.mxu0 0.0
        %3137 = vmatpush1.msra.mxu0 0.0
        %3138 = vmatprep.subr.mxu0 0.0
        %3139 = vmatpush1.msra.mxu0 0.0
        %3140 = vmatprep.subr.mxu0 0.0
        %3141 = vmatpush1.msra.mxu0 0.0
        %3142 = vmatprep.subr.mxu0 0.0
        %3143 = vmatpush1.msra.mxu0 0.0
        %3144 = vmatprep.subr.mxu0 0.0
        %3145 = vmatpush1.msra.mxu0 0.0
        %3146 = vmatprep.subr.mxu0 0.0
        %3147 = vmatpush1.msra.mxu0 0.0
        %3148 = vmatprep.subr.mxu0 0.0
        %3149 = vmatpush1.msra.mxu0 0.0
        %3150 = vmatprep.subr.mxu0 0.0
        %3151 = vmatpush1.msra.mxu0 0.0
        %3152 = vmatprep.subr.mxu0 0.0
        %3153 = vmatpush1.msra.mxu0 0.0
        %3154 = vmatprep.subr.mxu0 0.0
        %3155 = vmatpush1.msra.mxu0 0.0
        %3156 = vmatprep.subr.mxu0 0.0
        %3157 = vmatpush1.msra.mxu0 0.0
        %3158 = vmatprep.subr.mxu0 0.0
        %3159 = vmatpush1.msra.mxu0 0.0
        %3160 = vmatprep.subr.mxu0 0.0
        %v3161 = vand.u32 %v1265, 4294901760
        %v3162 = vsub.f32 %v1265, %v3161
        %v3163 = vand.u32 %v3162, 4294901760
        %3164 = vmatpush1.msra.mxu0 %v3163
        %3165 = vmatprep.subr.mxu0 0.0
        %v3166 = vand.u32 %v1259, 4294901760
        %v3167 = vsub.f32 %v1259, %v3166
        %v3168 = vand.u32 %v3167, 4294901760
        %3169 = vmatpush1.msra.mxu0 %v3168
        %3170 = vmatprep.subr.mxu0 0.0
        %3171 = vmatpush2.msra.mxu0 0.0
        %3172 = vmatprep.subr.mxu0 0.0
        %3173 = vmatpush2.msra.mxu0 0.0
        %3174 = vmatprep.subr.mxu0 0.0
        %3175 = vmatpush2.msra.mxu0 0.0
        %3176 = vmatprep.subr.mxu0 0.0
        %3177 = vmatpush2.msra.mxu0 0.0
        %3178 = vmatprep.subr.mxu0 0.0
        %3179 = vmatpush2.msra.mxu0 0.0
        %3180 = vmatprep.subr.mxu0 0.0
        %3181 = vmatpush2.msra.mxu0 0.0
        %3182 = vmatprep.subr.mxu0 0.0
        %3183 = vmatpush2.msra.mxu0 0.0
        %3184 = vmatprep.subr.mxu0 0.0
        %3185 = vmatpush2.msra.mxu0 0.0
        %3186 = vmatprep.subr.mxu0 0.0
        %3187 = vmatpush2.msra.mxu0 0.0
        %3188 = vmatprep.subr.mxu0 0.0
        %3189 = vmatpush2.msra.mxu0 0.0
        %3190 = vmatprep.subr.mxu0 0.0
        %3191 = vmatpush2.msra.mxu0 0.0
        %3192 = vmatprep.subr.mxu0 0.0
        %3193 = vmatpush2.msra.mxu0 0.0
        %3194 = vmatprep.subr.mxu0 0.0
        %3195 = vmatpush2.msra.mxu0 0.0
        %3196 = vmatprep.subr.mxu0 0.0
        %3197 = vmatpush2.msra.mxu0 0.0
        %3198 = vmatprep.subr.mxu0 0.0
        %3199 = vmatpush2.msra.mxu0 0.0
        %3200 = vmatprep.subr.mxu0 0.0
        %3201 = vmatpush2.msra.mxu0 0.0
        %3202 = vmatprep.mubr.f32.mxu0 0.0
        %v3203 = vand.u32 %v2285, 4294901760
        %3204 = vmatmul.mubr.f32.gmra.mxu0 %v3203
        %v3205 = vpop.f32.mrf.mxu0
        %v3206 = vadd.f32 %v3121, %v3205
        %v3207 = vpop.f32.mrf.mxu0
        %3208 = vmatprep.mubr.f32.mxu0 0.0
        %v3209 = vand.u32 %v2288, 4294901760
        %3210 = vmatmul.mubr.f32.gmra.mxu0 %v3209
        %v3211 = vpop.f32.mrf.mxu0
        %v3212 = vadd.f32 %v3129, %v3211
        %v3213 = vpop.f32.mrf.mxu0
        %3214 = vdwg.mxu0
        %3215 = vmatprep.subr.mxu0 0.0
        %3216 = vmatpush1.msra.mxu0 0.0
        %3217 = vmatprep.subr.mxu0 0.0
        %3218 = vmatpush1.msra.mxu0 0.0
        %3219 = vmatprep.subr.mxu0 0.0
        %3220 = vmatpush1.msra.mxu0 0.0
        %3221 = vmatprep.subr.mxu0 0.0
        %3222 = vmatpush1.msra.mxu0 0.0
        %3223 = vmatprep.subr.mxu0 0.0
        %3224 = vmatpush1.msra.mxu0 0.0
        %3225 = vmatprep.subr.mxu0 0.0
        %3226 = vmatpush1.msra.mxu0 0.0
        %3227 = vmatprep.subr.mxu0 0.0
        %3228 = vmatpush1.msra.mxu0 0.0
        %3229 = vmatprep.subr.mxu0 0.0
        %3230 = vmatpush1.msra.mxu0 0.0
        %3231 = vmatprep.subr.mxu0 0.0
        %3232 = vmatpush1.msra.mxu0 0.0
        %3233 = vmatprep.subr.mxu0 0.0
        %3234 = vmatpush1.msra.mxu0 0.0
        %3235 = vmatprep.subr.mxu0 0.0
        %3236 = vmatpush1.msra.mxu0 0.0
        %3237 = vmatprep.subr.mxu0 0.0
        %3238 = vmatpush1.msra.mxu0 0.0
        %3239 = vmatprep.subr.mxu0 0.0
        %3240 = vmatpush1.msra.mxu0 0.0
        %3241 = vmatprep.subr.mxu0 0.0
        %3242 = vmatpush1.msra.mxu0 0.0
        %3243 = vmatprep.subr.mxu0 0.0
        %v3244 = vand.u32 %v1265, 4294901760
        %3245 = vmatpush1.msra.mxu0 %v3244
        %3246 = vmatprep.subr.mxu0 0.0
        %v3247 = vand.u32 %v1259, 4294901760
        %3248 = vmatpush1.msra.mxu0 %v3247
        %3249 = vmatprep.subr.mxu0 0.0
        %3250 = vmatpush2.msra.mxu0 0.0
        %3251 = vmatprep.subr.mxu0 0.0
        %3252 = vmatpush2.msra.mxu0 0.0
        %3253 = vmatprep.subr.mxu0 0.0
        %3254 = vmatpush2.msra.mxu0 0.0
        %3255 = vmatprep.subr.mxu0 0.0
        %3256 = vmatpush2.msra.mxu0 0.0
        %3257 = vmatprep.subr.mxu0 0.0
        %3258 = vmatpush2.msra.mxu0 0.0
        %3259 = vmatprep.subr.mxu0 0.0
        %3260 = vmatpush2.msra.mxu0 0.0
        %3261 = vmatprep.subr.mxu0 0.0
        %3262 = vmatpush2.msra.mxu0 0.0
        %3263 = vmatprep.subr.mxu0 0.0
        %3264 = vmatpush2.msra.mxu0 0.0
        %3265 = vmatprep.subr.mxu0 0.0
        %3266 = vmatpush2.msra.mxu0 0.0
        %3267 = vmatprep.subr.mxu0 0.0
        %3268 = vmatpush2.msra.mxu0 0.0
        %3269 = vmatprep.subr.mxu0 0.0
        %3270 = vmatpush2.msra.mxu0 0.0
        %3271 = vmatprep.subr.mxu0 0.0
        %3272 = vmatpush2.msra.mxu0 0.0
        %3273 = vmatprep.subr.mxu0 0.0
        %3274 = vmatpush2.msra.mxu0 0.0
        %3275 = vmatprep.subr.mxu0 0.0
        %3276 = vmatpush2.msra.mxu0 0.0
        %3277 = vmatprep.subr.mxu0 0.0
        %3278 = vmatpush2.msra.mxu0 0.0
        %3279 = vmatprep.subr.mxu0 0.0
        %3280 = vmatpush2.msra.mxu0 0.0
        %3281 = vmatprep.mubr.f32.mxu0 0.0
        %v3282 = vand.u32 %v2285, 4294901760
        %3283 = vmatmul.mubr.f32.gmra.mxu0 %v3282
        %v3284 = vpop.f32.mrf.mxu0
        %v3285 = vadd.f32 %v3206, %v3284
        %v3286 = vpop.f32.mrf.mxu0
        %3287 = vmatprep.mubr.f32.mxu0 0.0
        %v3288 = vand.u32 %v2288, 4294901760
        %3289 = vmatmul.mubr.f32.gmra.mxu0 %v3288
        %v3290 = vpop.f32.mrf.mxu0
        %v3291 = vadd.f32 %v3212, %v3290
        %v3292 = vpop.f32.mrf.mxu0
        %3293 = vdwg.mxu0
        %3294 = vmatprep.subr.mxu0 0.0
        %3295 = vmatpush1.msra.mxu0 0.0
        %3296 = vmatprep.subr.mxu0 0.0
        %3297 = vmatpush1.msra.mxu0 0.0
        %3298 = vmatprep.subr.mxu0 0.0
        %3299 = vmatpush1.msra.mxu0 0.0
        %3300 = vmatprep.subr.mxu0 0.0
        %3301 = vmatpush1.msra.mxu0 0.0
        %3302 = vmatprep.subr.mxu0 0.0
        %3303 = vmatpush1.msra.mxu0 0.0
        %3304 = vmatprep.subr.mxu0 0.0
        %3305 = vmatpush1.msra.mxu0 0.0
        %3306 = vmatprep.subr.mxu0 0.0
        %3307 = vmatpush1.msra.mxu0 0.0
        %3308 = vmatprep.subr.mxu0 0.0
        %3309 = vmatpush1.msra.mxu0 0.0
        %3310 = vmatprep.subr.mxu0 0.0
        %3311 = vmatpush1.msra.mxu0 0.0
        %3312 = vmatprep.subr.mxu0 0.0
        %3313 = vmatpush1.msra.mxu0 0.0
        %3314 = vmatprep.subr.mxu0 0.0
        %3315 = vmatpush1.msra.mxu0 0.0
        %3316 = vmatprep.subr.mxu0 0.0
        %3317 = vmatpush1.msra.mxu0 0.0
        %3318 = vmatprep.subr.mxu0 0.0
        %3319 = vmatpush1.msra.mxu0 0.0
        %3320 = vmatprep.subr.mxu0 0.0
        %3321 = vmatpush1.msra.mxu0 0.0
        %3322 = vmatprep.subr.mxu0 0.0
        %v3323 = vand.u32 %v1773, 4294901760
        %3324 = vmatpush1.msra.mxu0 %v3323
        %3325 = vmatprep.subr.mxu0 0.0
        %v3326 = vand.u32 %v1767, 4294901760
        %3327 = vmatpush1.msra.mxu0 %v3326
        %3328 = vmatprep.subr.mxu0 0.0
        %3329 = vmatpush2.msra.mxu0 0.0
        %3330 = vmatprep.subr.mxu0 0.0
        %3331 = vmatpush2.msra.mxu0 0.0
        %3332 = vmatprep.subr.mxu0 0.0
        %3333 = vmatpush2.msra.mxu0 0.0
        %3334 = vmatprep.subr.mxu0 0.0
        %3335 = vmatpush2.msra.mxu0 0.0
        %3336 = vmatprep.subr.mxu0 0.0
        %3337 = vmatpush2.msra.mxu0 0.0
        %3338 = vmatprep.subr.mxu0 0.0
        %3339 = vmatpush2.msra.mxu0 0.0
        %3340 = vmatprep.subr.mxu0 0.0
        %3341 = vmatpush2.msra.mxu0 0.0
        %3342 = vmatprep.subr.mxu0 0.0
        %3343 = vmatpush2.msra.mxu0 0.0
        %3344 = vmatprep.subr.mxu0 0.0
        %3345 = vmatpush2.msra.mxu0 0.0
        %3346 = vmatprep.subr.mxu0 0.0
        %3347 = vmatpush2.msra.mxu0 0.0
        %3348 = vmatprep.subr.mxu0 0.0
        %3349 = vmatpush2.msra.mxu0 0.0
        %3350 = vmatprep.subr.mxu0 0.0
        %3351 = vmatpush2.msra.mxu0 0.0
        %3352 = vmatprep.subr.mxu0 0.0
        %3353 = vmatpush2.msra.mxu0 0.0
        %3354 = vmatprep.subr.mxu0 0.0
        %3355 = vmatpush2.msra.mxu0 0.0
        %3356 = vmatprep.subr.mxu0 0.0
        %3357 = vmatpush2.msra.mxu0 0.0
        %3358 = vmatprep.subr.mxu0 0.0
        %3359 = vmatpush2.msra.mxu0 0.0
        %3360 = vmatprep.mubr.f32.mxu0 0.0
        %v3361 = vand.u32 %v2285, 4294901760
        %v3362 = vsub.f32 %v2285, %v3361
        %v3363 = vand.u32 %v3362, 4294901760
        %v3364 = vsub.f32 %v3362, %v3363
        %v3365 = vand.u32 %v3364, 4294901760
        %3366 = vmatmul.mubr.f32.gmra.mxu0 %v3365
        %v3367 = vpop.f32.mrf.mxu0
        %v3368 = vadd.f32 0.0, %v3367
        %v3369 = vpop.f32.mrf.mxu0
        %3370 = vmatprep.mubr.f32.mxu0 0.0
        %v3371 = vand.u32 %v2288, 4294901760
        %v3372 = vsub.f32 %v2288, %v3371
        %v3373 = vand.u32 %v3372, 4294901760
        %v3374 = vsub.f32 %v3372, %v3373
        %v3375 = vand.u32 %v3374, 4294901760
        %3376 = vmatmul.mubr.f32.gmra.mxu0 %v3375
        %v3377 = vpop.f32.mrf.mxu0
        %v3378 = vadd.f32 0.0, %v3377
        %v3379 = vpop.f32.mrf.mxu0
        %3380 = vdwg.mxu0
        %3381 = vmatprep.subr.mxu0 0.0
        %3382 = vmatpush1.msra.mxu0 0.0
        %3383 = vmatprep.subr.mxu0 0.0
        %3384 = vmatpush1.msra.mxu0 0.0
        %3385 = vmatprep.subr.mxu0 0.0
        %3386 = vmatpush1.msra.mxu0 0.0
        %3387 = vmatprep.subr.mxu0 0.0
        %3388 = vmatpush1.msra.mxu0 0.0
        %3389 = vmatprep.subr.mxu0 0.0
        %3390 = vmatpush1.msra.mxu0 0.0
        %3391 = vmatprep.subr.mxu0 0.0
        %3392 = vmatpush1.msra.mxu0 0.0
        %3393 = vmatprep.subr.mxu0 0.0
        %3394 = vmatpush1.msra.mxu0 0.0
        %3395 = vmatprep.subr.mxu0 0.0
        %3396 = vmatpush1.msra.mxu0 0.0
        %3397 = vmatprep.subr.mxu0 0.0
        %3398 = vmatpush1.msra.mxu0 0.0
        %3399 = vmatprep.subr.mxu0 0.0
        %3400 = vmatpush1.msra.mxu0 0.0
        %3401 = vmatprep.subr.mxu0 0.0
        %3402 = vmatpush1.msra.mxu0 0.0
        %3403 = vmatprep.subr.mxu0 0.0
        %3404 = vmatpush1.msra.mxu0 0.0
        %3405 = vmatprep.subr.mxu0 0.0
        %3406 = vmatpush1.msra.mxu0 0.0
        %3407 = vmatprep.subr.mxu0 0.0
        %3408 = vmatpush1.msra.mxu0 0.0
        %3409 = vmatprep.subr.mxu0 0.0
        %v3410 = vand.u32 %v1773, 4294901760
        %v3411 = vsub.f32 %v1773, %v3410
        %v3412 = vand.u32 %v3411, 4294901760
        %v3413 = vsub.f32 %v3411, %v3412
        %v3414 = vand.u32 %v3413, 4294901760
        %3415 = vmatpush1.msra.mxu0 %v3414
        %3416 = vmatprep.subr.mxu0 0.0
        %v3417 = vand.u32 %v1767, 4294901760
        %v3418 = vsub.f32 %v1767, %v3417
        %v3419 = vand.u32 %v3418, 4294901760
        %v3420 = vsub.f32 %v3418, %v3419
        %v3421 = vand.u32 %v3420, 4294901760
        %3422 = vmatpush1.msra.mxu0 %v3421
        %3423 = vmatprep.subr.mxu0 0.0
        %3424 = vmatpush2.msra.mxu0 0.0
        %3425 = vmatprep.subr.mxu0 0.0
        %3426 = vmatpush2.msra.mxu0 0.0
        %3427 = vmatprep.subr.mxu0 0.0
        %3428 = vmatpush2.msra.mxu0 0.0
        %3429 = vmatprep.subr.mxu0 0.0
        %3430 = vmatpush2.msra.mxu0 0.0
        %3431 = vmatprep.subr.mxu0 0.0
        %3432 = vmatpush2.msra.mxu0 0.0
        %3433 = vmatprep.subr.mxu0 0.0
        %3434 = vmatpush2.msra.mxu0 0.0
        %3435 = vmatprep.subr.mxu0 0.0
        %3436 = vmatpush2.msra.mxu0 0.0
        %3437 = vmatprep.subr.mxu0 0.0
        %3438 = vmatpush2.msra.mxu0 0.0
        %3439 = vmatprep.subr.mxu0 0.0
        %3440 = vmatpush2.msra.mxu0 0.0
        %3441 = vmatprep.subr.mxu0 0.0
        %3442 = vmatpush2.msra.mxu0 0.0
        %3443 = vmatprep.subr.mxu0 0.0
        %3444 = vmatpush2.msra.mxu0 0.0
        %3445 = vmatprep.subr.mxu0 0.0
        %3446 = vmatpush2.msra.mxu0 0.0
        %3447 = vmatprep.subr.mxu0 0.0
        %3448 = vmatpush2.msra.mxu0 0.0
        %3449 = vmatprep.subr.mxu0 0.0
        %3450 = vmatpush2.msra.mxu0 0.0
        %3451 = vmatprep.subr.mxu0 0.0
        %3452 = vmatpush2.msra.mxu0 0.0
        %3453 = vmatprep.subr.mxu0 0.0
        %3454 = vmatpush2.msra.mxu0 0.0
        %3455 = vmatprep.mubr.f32.mxu0 0.0
        %v3456 = vand.u32 %v2285, 4294901760
        %3457 = vmatmul.mubr.f32.gmra.mxu0 %v3456
        %v3458 = vpop.f32.mrf.mxu0
        %v3459 = vadd.f32 %v3368, %v3458
        %v3460 = vpop.f32.mrf.mxu0
        %3461 = vmatprep.mubr.f32.mxu0 0.0
        %v3462 = vand.u32 %v2288, 4294901760
        %3463 = vmatmul.mubr.f32.gmra.mxu0 %v3462
        %v3464 = vpop.f32.mrf.mxu0
        %v3465 = vadd.f32 %v3378, %v3464
        %v3466 = vpop.f32.mrf.mxu0
        %3467 = vdwg.mxu0
        %3468 = vmatprep.subr.mxu0 0.0
        %3469 = vmatpush1.msra.mxu0 0.0
        %3470 = vmatprep.subr.mxu0 0.0
        %3471 = vmatpush1.msra.mxu0 0.0
        %3472 = vmatprep.subr.mxu0 0.0
        %3473 = vmatpush1.msra.mxu0 0.0
        %3474 = vmatprep.subr.mxu0 0.0
        %3475 = vmatpush1.msra.mxu0 0.0
        %3476 = vmatprep.subr.mxu0 0.0
        %3477 = vmatpush1.msra.mxu0 0.0
        %3478 = vmatprep.subr.mxu0 0.0
        %3479 = vmatpush1.msra.mxu0 0.0
        %3480 = vmatprep.subr.mxu0 0.0
        %3481 = vmatpush1.msra.mxu0 0.0
        %3482 = vmatprep.subr.mxu0 0.0
        %3483 = vmatpush1.msra.mxu0 0.0
        %3484 = vmatprep.subr.mxu0 0.0
        %3485 = vmatpush1.msra.mxu0 0.0
        %3486 = vmatprep.subr.mxu0 0.0
        %3487 = vmatpush1.msra.mxu0 0.0
        %3488 = vmatprep.subr.mxu0 0.0
        %3489 = vmatpush1.msra.mxu0 0.0
        %3490 = vmatprep.subr.mxu0 0.0
        %3491 = vmatpush1.msra.mxu0 0.0
        %3492 = vmatprep.subr.mxu0 0.0
        %3493 = vmatpush1.msra.mxu0 0.0
        %3494 = vmatprep.subr.mxu0 0.0
        %3495 = vmatpush1.msra.mxu0 0.0
        %3496 = vmatprep.subr.mxu0 0.0
        %v3497 = vand.u32 %v1773, 4294901760
        %v3498 = vsub.f32 %v1773, %v3497
        %3499 = vmatpush1.msra.mxu0 %v3498
        %3500 = vmatprep.subr.mxu0 0.0
        %v3501 = vand.u32 %v1767, 4294901760
        %v3502 = vsub.f32 %v1767, %v3501
        %3503 = vmatpush1.msra.mxu0 %v3502
        %3504 = vmatprep.subr.mxu0 0.0
        %3505 = vmatpush2.msra.mxu0 0.0
        %3506 = vmatprep.subr.mxu0 0.0
        %3507 = vmatpush2.msra.mxu0 0.0
        %3508 = vmatprep.subr.mxu0 0.0
        %3509 = vmatpush2.msra.mxu0 0.0
        %3510 = vmatprep.subr.mxu0 0.0
        %3511 = vmatpush2.msra.mxu0 0.0
        %3512 = vmatprep.subr.mxu0 0.0
        %3513 = vmatpush2.msra.mxu0 0.0
        %3514 = vmatprep.subr.mxu0 0.0
        %3515 = vmatpush2.msra.mxu0 0.0
        %3516 = vmatprep.subr.mxu0 0.0
        %3517 = vmatpush2.msra.mxu0 0.0
        %3518 = vmatprep.subr.mxu0 0.0
        %3519 = vmatpush2.msra.mxu0 0.0
        %3520 = vmatprep.subr.mxu0 0.0
        %3521 = vmatpush2.msra.mxu0 0.0
        %3522 = vmatprep.subr.mxu0 0.0
        %3523 = vmatpush2.msra.mxu0 0.0
        %3524 = vmatprep.subr.mxu0 0.0
        %3525 = vmatpush2.msra.mxu0 0.0
        %3526 = vmatprep.subr.mxu0 0.0
        %3527 = vmatpush2.msra.mxu0 0.0
        %3528 = vmatprep.subr.mxu0 0.0
        %3529 = vmatpush2.msra.mxu0 0.0
        %3530 = vmatprep.subr.mxu0 0.0
        %3531 = vmatpush2.msra.mxu0 0.0
        %3532 = vmatprep.subr.mxu0 0.0
        %3533 = vmatpush2.msra.mxu0 0.0
        %3534 = vmatprep.subr.mxu0 0.0
        %3535 = vmatpush2.msra.mxu0 0.0
        %3536 = vmatprep.mubr.f32.mxu0 0.0
        %v3537 = vand.u32 %v2285, 4294901760
        %v3538 = vsub.f32 %v2285, %v3537
        %3539 = vmatmul.mubr.f32.gmra.mxu0 %v3538
        %v3540 = vpop.f32.mrf.mxu0
        %v3541 = vadd.f32 %v3459, %v3540
        %v3542 = vpop.f32.mrf.mxu0
        %3543 = vmatprep.mubr.f32.mxu0 0.0
        %v3544 = vand.u32 %v2288, 4294901760
        %v3545 = vsub.f32 %v2288, %v3544
        %3546 = vmatmul.mubr.f32.gmra.mxu0 %v3545
        %v3547 = vpop.f32.mrf.mxu0
        %v3548 = vadd.f32 %v3465, %v3547
        %v3549 = vpop.f32.mrf.mxu0
        %3550 = vdwg.mxu0
        %3551 = vmatprep.subr.mxu0 0.0
        %3552 = vmatpush1.msra.mxu0 0.0
        %3553 = vmatprep.subr.mxu0 0.0
        %3554 = vmatpush1.msra.mxu0 0.0
        %3555 = vmatprep.subr.mxu0 0.0
        %3556 = vmatpush1.msra.mxu0 0.0
        %3557 = vmatprep.subr.mxu0 0.0
        %3558 = vmatpush1.msra.mxu0 0.0
        %3559 = vmatprep.subr.mxu0 0.0
        %3560 = vmatpush1.msra.mxu0 0.0
        %3561 = vmatprep.subr.mxu0 0.0
        %3562 = vmatpush1.msra.mxu0 0.0
        %3563 = vmatprep.subr.mxu0 0.0
        %3564 = vmatpush1.msra.mxu0 0.0
        %3565 = vmatprep.subr.mxu0 0.0
        %3566 = vmatpush1.msra.mxu0 0.0
        %3567 = vmatprep.subr.mxu0 0.0
        %3568 = vmatpush1.msra.mxu0 0.0
        %3569 = vmatprep.subr.mxu0 0.0
        %3570 = vmatpush1.msra.mxu0 0.0
        %3571 = vmatprep.subr.mxu0 0.0
        %3572 = vmatpush1.msra.mxu0 0.0
        %3573 = vmatprep.subr.mxu0 0.0
        %3574 = vmatpush1.msra.mxu0 0.0
        %3575 = vmatprep.subr.mxu0 0.0
        %3576 = vmatpush1.msra.mxu0 0.0
        %3577 = vmatprep.subr.mxu0 0.0
        %3578 = vmatpush1.msra.mxu0 0.0
        %3579 = vmatprep.subr.mxu0 0.0
        %v3580 = vand.u32 %v1773, 4294901760
        %3581 = vmatpush1.msra.mxu0 %v3580
        %3582 = vmatprep.subr.mxu0 0.0
        %v3583 = vand.u32 %v1767, 4294901760
        %3584 = vmatpush1.msra.mxu0 %v3583
        %3585 = vmatprep.subr.mxu0 0.0
        %3586 = vmatpush2.msra.mxu0 0.0
        %3587 = vmatprep.subr.mxu0 0.0
        %3588 = vmatpush2.msra.mxu0 0.0
        %3589 = vmatprep.subr.mxu0 0.0
        %3590 = vmatpush2.msra.mxu0 0.0
        %3591 = vmatprep.subr.mxu0 0.0
        %3592 = vmatpush2.msra.mxu0 0.0
        %3593 = vmatprep.subr.mxu0 0.0
        %3594 = vmatpush2.msra.mxu0 0.0
        %3595 = vmatprep.subr.mxu0 0.0
        %3596 = vmatpush2.msra.mxu0 0.0
        %3597 = vmatprep.subr.mxu0 0.0
        %3598 = vmatpush2.msra.mxu0 0.0
        %3599 = vmatprep.subr.mxu0 0.0
        %3600 = vmatpush2.msra.mxu0 0.0
        %3601 = vmatprep.subr.mxu0 0.0
        %3602 = vmatpush2.msra.mxu0 0.0
        %3603 = vmatprep.subr.mxu0 0.0
        %3604 = vmatpush2.msra.mxu0 0.0
        %3605 = vmatprep.subr.mxu0 0.0
        %3606 = vmatpush2.msra.mxu0 0.0
        %3607 = vmatprep.subr.mxu0 0.0
        %3608 = vmatpush2.msra.mxu0 0.0
        %3609 = vmatprep.subr.mxu0 0.0
        %3610 = vmatpush2.msra.mxu0 0.0
        %3611 = vmatprep.subr.mxu0 0.0
        %3612 = vmatpush2.msra.mxu0 0.0
        %3613 = vmatprep.subr.mxu0 0.0
        %3614 = vmatpush2.msra.mxu0 0.0
        %3615 = vmatprep.subr.mxu0 0.0
        %3616 = vmatpush2.msra.mxu0 0.0
        %3617 = vmatprep.mubr.f32.mxu0 0.0
        %v3618 = vand.u32 %v2285, 4294901760
        %v3619 = vsub.f32 %v2285, %v3618
        %v3620 = vand.u32 %v3619, 4294901760
        %3621 = vmatmul.mubr.f32.gmra.mxu0 %v3620
        %v3622 = vpop.f32.mrf.mxu0
        %v3623 = vadd.f32 %v3541, %v3622
        %v3624 = vpop.f32.mrf.mxu0
        %3625 = vmatprep.mubr.f32.mxu0 0.0
        %v3626 = vand.u32 %v2288, 4294901760
        %v3627 = vsub.f32 %v2288, %v3626
        %v3628 = vand.u32 %v3627, 4294901760
        %3629 = vmatmul.mubr.f32.gmra.mxu0 %v3628
        %v3630 = vpop.f32.mrf.mxu0
        %v3631 = vadd.f32 %v3548, %v3630
        %v3632 = vpop.f32.mrf.mxu0
        %3633 = vdwg.mxu0
        %3634 = vmatprep.subr.mxu0 0.0
        %3635 = vmatpush1.msra.mxu0 0.0
        %3636 = vmatprep.subr.mxu0 0.0
        %3637 = vmatpush1.msra.mxu0 0.0
        %3638 = vmatprep.subr.mxu0 0.0
        %3639 = vmatpush1.msra.mxu0 0.0
        %3640 = vmatprep.subr.mxu0 0.0
        %3641 = vmatpush1.msra.mxu0 0.0
        %3642 = vmatprep.subr.mxu0 0.0
        %3643 = vmatpush1.msra.mxu0 0.0
        %3644 = vmatprep.subr.mxu0 0.0
        %3645 = vmatpush1.msra.mxu0 0.0
        %3646 = vmatprep.subr.mxu0 0.0
        %3647 = vmatpush1.msra.mxu0 0.0
        %3648 = vmatprep.subr.mxu0 0.0
        %3649 = vmatpush1.msra.mxu0 0.0
        %3650 = vmatprep.subr.mxu0 0.0
        %3651 = vmatpush1.msra.mxu0 0.0
        %3652 = vmatprep.subr.mxu0 0.0
        %3653 = vmatpush1.msra.mxu0 0.0
        %3654 = vmatprep.subr.mxu0 0.0
        %3655 = vmatpush1.msra.mxu0 0.0
        %3656 = vmatprep.subr.mxu0 0.0
        %3657 = vmatpush1.msra.mxu0 0.0
        %3658 = vmatprep.subr.mxu0 0.0
        %3659 = vmatpush1.msra.mxu0 0.0
        %3660 = vmatprep.subr.mxu0 0.0
        %3661 = vmatpush1.msra.mxu0 0.0
        %3662 = vmatprep.subr.mxu0 0.0
        %v3663 = vand.u32 %v1773, 4294901760
        %v3664 = vsub.f32 %v1773, %v3663
        %v3665 = vand.u32 %v3664, 4294901760
        %3666 = vmatpush1.msra.mxu0 %v3665
        %3667 = vmatprep.subr.mxu0 0.0
        %v3668 = vand.u32 %v1767, 4294901760
        %v3669 = vsub.f32 %v1767, %v3668
        %v3670 = vand.u32 %v3669, 4294901760
        %3671 = vmatpush1.msra.mxu0 %v3670
        %3672 = vmatprep.subr.mxu0 0.0
        %3673 = vmatpush2.msra.mxu0 0.0
        %3674 = vmatprep.subr.mxu0 0.0
        %3675 = vmatpush2.msra.mxu0 0.0
        %3676 = vmatprep.subr.mxu0 0.0
        %3677 = vmatpush2.msra.mxu0 0.0
        %3678 = vmatprep.subr.mxu0 0.0
        %3679 = vmatpush2.msra.mxu0 0.0
        %3680 = vmatprep.subr.mxu0 0.0
        %3681 = vmatpush2.msra.mxu0 0.0
        %3682 = vmatprep.subr.mxu0 0.0
        %3683 = vmatpush2.msra.mxu0 0.0
        %3684 = vmatprep.subr.mxu0 0.0
        %3685 = vmatpush2.msra.mxu0 0.0
        %3686 = vmatprep.subr.mxu0 0.0
        %3687 = vmatpush2.msra.mxu0 0.0
        %3688 = vmatprep.subr.mxu0 0.0
        %3689 = vmatpush2.msra.mxu0 0.0
        %3690 = vmatprep.subr.mxu0 0.0
        %3691 = vmatpush2.msra.mxu0 0.0
        %3692 = vmatprep.subr.mxu0 0.0
        %3693 = vmatpush2.msra.mxu0 0.0
        %3694 = vmatprep.subr.mxu0 0.0
        %3695 = vmatpush2.msra.mxu0 0.0
        %3696 = vmatprep.subr.mxu0 0.0
        %3697 = vmatpush2.msra.mxu0 0.0
        %3698 = vmatprep.subr.mxu0 0.0
        %3699 = vmatpush2.msra.mxu0 0.0
        %3700 = vmatprep.subr.mxu0 0.0
        %3701 = vmatpush2.msra.mxu0 0.0
        %3702 = vmatprep.subr.mxu0 0.0
        %3703 = vmatpush2.msra.mxu0 0.0
        %3704 = vmatprep.mubr.f32.mxu0 0.0
        %v3705 = vand.u32 %v2285, 4294901760
        %3706 = vmatmul.mubr.f32.gmra.mxu0 %v3705
        %v3707 = vpop.f32.mrf.mxu0
        %v3708 = vadd.f32 %v3623, %v3707
        %v3709 = vpop.f32.mrf.mxu0
        %3710 = vmatprep.mubr.f32.mxu0 0.0
        %v3711 = vand.u32 %v2288, 4294901760
        %3712 = vmatmul.mubr.f32.gmra.mxu0 %v3711
        %v3713 = vpop.f32.mrf.mxu0
        %v3714 = vadd.f32 %v3631, %v3713
        %v3715 = vpop.f32.mrf.mxu0
        %3716 = vdwg.mxu0
        %3717 = vmatprep.subr.mxu0 0.0
        %3718 = vmatpush1.msra.mxu0 0.0
        %3719 = vmatprep.subr.mxu0 0.0
        %3720 = vmatpush1.msra.mxu0 0.0
        %3721 = vmatprep.subr.mxu0 0.0
        %3722 = vmatpush1.msra.mxu0 0.0
        %3723 = vmatprep.subr.mxu0 0.0
        %3724 = vmatpush1.msra.mxu0 0.0
        %3725 = vmatprep.subr.mxu0 0.0
        %3726 = vmatpush1.msra.mxu0 0.0
        %3727 = vmatprep.subr.mxu0 0.0
        %3728 = vmatpush1.msra.mxu0 0.0
        %3729 = vmatprep.subr.mxu0 0.0
        %3730 = vmatpush1.msra.mxu0 0.0
        %3731 = vmatprep.subr.mxu0 0.0
        %3732 = vmatpush1.msra.mxu0 0.0
        %3733 = vmatprep.subr.mxu0 0.0
        %3734 = vmatpush1.msra.mxu0 0.0
        %3735 = vmatprep.subr.mxu0 0.0
        %3736 = vmatpush1.msra.mxu0 0.0
        %3737 = vmatprep.subr.mxu0 0.0
        %3738 = vmatpush1.msra.mxu0 0.0
        %3739 = vmatprep.subr.mxu0 0.0
        %3740 = vmatpush1.msra.mxu0 0.0
        %3741 = vmatprep.subr.mxu0 0.0
        %3742 = vmatpush1.msra.mxu0 0.0
        %3743 = vmatprep.subr.mxu0 0.0
        %3744 = vmatpush1.msra.mxu0 0.0
        %3745 = vmatprep.subr.mxu0 0.0
        %v3746 = vand.u32 %v1773, 4294901760
        %3747 = vmatpush1.msra.mxu0 %v3746
        %3748 = vmatprep.subr.mxu0 0.0
        %v3749 = vand.u32 %v1767, 4294901760
        %3750 = vmatpush1.msra.mxu0 %v3749
        %3751 = vmatprep.subr.mxu0 0.0
        %3752 = vmatpush2.msra.mxu0 0.0
        %3753 = vmatprep.subr.mxu0 0.0
        %3754 = vmatpush2.msra.mxu0 0.0
        %3755 = vmatprep.subr.mxu0 0.0
        %3756 = vmatpush2.msra.mxu0 0.0
        %3757 = vmatprep.subr.mxu0 0.0
        %3758 = vmatpush2.msra.mxu0 0.0
        %3759 = vmatprep.subr.mxu0 0.0
        %3760 = vmatpush2.msra.mxu0 0.0
        %3761 = vmatprep.subr.mxu0 0.0
        %3762 = vmatpush2.msra.mxu0 0.0
        %3763 = vmatprep.subr.mxu0 0.0
        %3764 = vmatpush2.msra.mxu0 0.0
        %3765 = vmatprep.subr.mxu0 0.0
        %3766 = vmatpush2.msra.mxu0 0.0
        %3767 = vmatprep.subr.mxu0 0.0
        %3768 = vmatpush2.msra.mxu0 0.0
        %3769 = vmatprep.subr.mxu0 0.0
        %3770 = vmatpush2.msra.mxu0 0.0
        %3771 = vmatprep.subr.mxu0 0.0
        %3772 = vmatpush2.msra.mxu0 0.0
        %3773 = vmatprep.subr.mxu0 0.0
        %3774 = vmatpush2.msra.mxu0 0.0
        %3775 = vmatprep.subr.mxu0 0.0
        %3776 = vmatpush2.msra.mxu0 0.0
        %3777 = vmatprep.subr.mxu0 0.0
        %3778 = vmatpush2.msra.mxu0 0.0
        %3779 = vmatprep.subr.mxu0 0.0
        %3780 = vmatpush2.msra.mxu0 0.0
        %3781 = vmatprep.subr.mxu0 0.0
        %3782 = vmatpush2.msra.mxu0 0.0
        %3783 = vmatprep.mubr.f32.mxu0 0.0
        %v3784 = vand.u32 %v2285, 4294901760
        %3785 = vmatmul.mubr.f32.gmra.mxu0 %v3784
        %v3786 = vpop.f32.mrf.mxu0
        %v3787 = vadd.f32 %v3708, %v3786
        %v3788 = vpop.f32.mrf.mxu0
        %3789 = vmatprep.mubr.f32.mxu0 0.0
        %v3790 = vand.u32 %v2288, 4294901760
        %3791 = vmatmul.mubr.f32.gmra.mxu0 %v3790
        %v3792 = vpop.f32.mrf.mxu0
        %v3793 = vadd.f32 %v3714, %v3792
        %v3794 = vpop.f32.mrf.mxu0
        %3795 = vdwg.mxu0
        %3796 = vmatprep.subr.mxu0 0.0
        %3797 = vmatpush1.msra.mxu0 0.0
        %3798 = vmatprep.subr.mxu0 0.0
        %3799 = vmatpush1.msra.mxu0 0.0
        %3800 = vmatprep.subr.mxu0 0.0
        %3801 = vmatpush1.msra.mxu0 0.0
        %3802 = vmatprep.subr.mxu0 0.0
        %3803 = vmatpush1.msra.mxu0 0.0
        %3804 = vmatprep.subr.mxu0 0.0
        %3805 = vmatpush1.msra.mxu0 0.0
        %3806 = vmatprep.subr.mxu0 0.0
        %3807 = vmatpush1.msra.mxu0 0.0
        %3808 = vmatprep.subr.mxu0 0.0
        %3809 = vmatpush1.msra.mxu0 0.0
        %3810 = vmatprep.subr.mxu0 0.0
        %3811 = vmatpush1.msra.mxu0 0.0
        %3812 = vmatprep.subr.mxu0 0.0
        %3813 = vmatpush1.msra.mxu0 0.0
        %3814 = vmatprep.subr.mxu0 0.0
        %3815 = vmatpush1.msra.mxu0 0.0
        %3816 = vmatprep.subr.mxu0 0.0
        %3817 = vmatpush1.msra.mxu0 0.0
        %3818 = vmatprep.subr.mxu0 0.0
        %3819 = vmatpush1.msra.mxu0 0.0
        %3820 = vmatprep.subr.mxu0 0.0
        %3821 = vmatpush1.msra.mxu0 0.0
        %3822 = vmatprep.subr.mxu0 0.0
        %3823 = vmatpush1.msra.mxu0 0.0
        %3824 = vmatprep.subr.mxu0 0.0
        %v3825 = vand.u32 %v2281, 4294901760
        %3826 = vmatpush1.msra.mxu0 %v3825
        %3827 = vmatprep.subr.mxu0 0.0
        %v3828 = vand.u32 %v2275, 4294901760
        %3829 = vmatpush1.msra.mxu0 %v3828
        %3830 = vmatprep.subr.mxu0 0.0
        %3831 = vmatpush2.msra.mxu0 0.0
        %3832 = vmatprep.subr.mxu0 0.0
        %3833 = vmatpush2.msra.mxu0 0.0
        %3834 = vmatprep.subr.mxu0 0.0
        %3835 = vmatpush2.msra.mxu0 0.0
        %3836 = vmatprep.subr.mxu0 0.0
        %3837 = vmatpush2.msra.mxu0 0.0
        %3838 = vmatprep.subr.mxu0 0.0
        %3839 = vmatpush2.msra.mxu0 0.0
        %3840 = vmatprep.subr.mxu0 0.0
        %3841 = vmatpush2.msra.mxu0 0.0
        %3842 = vmatprep.subr.mxu0 0.0
        %3843 = vmatpush2.msra.mxu0 0.0
        %3844 = vmatprep.subr.mxu0 0.0
        %3845 = vmatpush2.msra.mxu0 0.0
        %3846 = vmatprep.subr.mxu0 0.0
        %3847 = vmatpush2.msra.mxu0 0.0
        %3848 = vmatprep.subr.mxu0 0.0
        %3849 = vmatpush2.msra.mxu0 0.0
        %3850 = vmatprep.subr.mxu0 0.0
        %3851 = vmatpush2.msra.mxu0 0.0
        %3852 = vmatprep.subr.mxu0 0.0
        %3853 = vmatpush2.msra.mxu0 0.0
        %3854 = vmatprep.subr.mxu0 0.0
        %3855 = vmatpush2.msra.mxu0 0.0
        %3856 = vmatprep.subr.mxu0 0.0
        %3857 = vmatpush2.msra.mxu0 0.0
        %3858 = vmatprep.subr.mxu0 0.0
        %3859 = vmatpush2.msra.mxu0 0.0
        %3860 = vmatprep.subr.mxu0 0.0
        %3861 = vmatpush2.msra.mxu0 0.0
        %3862 = vmatprep.mubr.f32.mxu0 0.0
        %v3863 = vand.u32 %v2285, 4294901760
        %v3864 = vsub.f32 %v2285, %v3863
        %v3865 = vand.u32 %v3864, 4294901760
        %v3866 = vsub.f32 %v3864, %v3865
        %v3867 = vand.u32 %v3866, 4294901760
        %3868 = vmatmul.mubr.f32.gmra.mxu0 %v3867
        %v3869 = vpop.f32.mrf.mxu0
        %v3870 = vadd.f32 0.0, %v3869
        %v3871 = vpop.f32.mrf.mxu0
        %3872 = vmatprep.mubr.f32.mxu0 0.0
        %v3873 = vand.u32 %v2288, 4294901760
        %v3874 = vsub.f32 %v2288, %v3873
        %v3875 = vand.u32 %v3874, 4294901760
        %v3876 = vsub.f32 %v3874, %v3875
        %v3877 = vand.u32 %v3876, 4294901760
        %3878 = vmatmul.mubr.f32.gmra.mxu0 %v3877
        %v3879 = vpop.f32.mrf.mxu0
        %v3880 = vadd.f32 0.0, %v3879
        %v3881 = vpop.f32.mrf.mxu0
        %3882 = vdwg.mxu0
        %3883 = vmatprep.subr.mxu0 0.0
        %3884 = vmatpush1.msra.mxu0 0.0
        %3885 = vmatprep.subr.mxu0 0.0
        %3886 = vmatpush1.msra.mxu0 0.0
        %3887 = vmatprep.subr.mxu0 0.0
        %3888 = vmatpush1.msra.mxu0 0.0
        %3889 = vmatprep.subr.mxu0 0.0
        %3890 = vmatpush1.msra.mxu0 0.0
        %3891 = vmatprep.subr.mxu0 0.0
        %3892 = vmatpush1.msra.mxu0 0.0
        %3893 = vmatprep.subr.mxu0 0.0
        %3894 = vmatpush1.msra.mxu0 0.0
        %3895 = vmatprep.subr.mxu0 0.0
        %3896 = vmatpush1.msra.mxu0 0.0
        %3897 = vmatprep.subr.mxu0 0.0
        %3898 = vmatpush1.msra.mxu0 0.0
        %3899 = vmatprep.subr.mxu0 0.0
        %3900 = vmatpush1.msra.mxu0 0.0
        %3901 = vmatprep.subr.mxu0 0.0
        %3902 = vmatpush1.msra.mxu0 0.0
        %3903 = vmatprep.subr.mxu0 0.0
        %3904 = vmatpush1.msra.mxu0 0.0
        %3905 = vmatprep.subr.mxu0 0.0
        %3906 = vmatpush1.msra.mxu0 0.0
        %3907 = vmatprep.subr.mxu0 0.0
        %3908 = vmatpush1.msra.mxu0 0.0
        %3909 = vmatprep.subr.mxu0 0.0
        %3910 = vmatpush1.msra.mxu0 0.0
        %3911 = vmatprep.subr.mxu0 0.0
        %v3912 = vand.u32 %v2281, 4294901760
        %v3913 = vsub.f32 %v2281, %v3912
        %v3914 = vand.u32 %v3913, 4294901760
        %v3915 = vsub.f32 %v3913, %v3914
        %v3916 = vand.u32 %v3915, 4294901760
        %3917 = vmatpush1.msra.mxu0 %v3916
        %3918 = vmatprep.subr.mxu0 0.0
        %v3919 = vand.u32 %v2275, 4294901760
        %v3920 = vsub.f32 %v2275, %v3919
        %v3921 = vand.u32 %v3920, 4294901760
        %v3922 = vsub.f32 %v3920, %v3921
        %v3923 = vand.u32 %v3922, 4294901760
        %3924 = vmatpush1.msra.mxu0 %v3923
        %3925 = vmatprep.subr.mxu0 0.0
        %3926 = vmatpush2.msra.mxu0 0.0
        %3927 = vmatprep.subr.mxu0 0.0
        %3928 = vmatpush2.msra.mxu0 0.0
        %3929 = vmatprep.subr.mxu0 0.0
        %3930 = vmatpush2.msra.mxu0 0.0
        %3931 = vmatprep.subr.mxu0 0.0
        %3932 = vmatpush2.msra.mxu0 0.0
        %3933 = vmatprep.subr.mxu0 0.0
        %3934 = vmatpush2.msra.mxu0 0.0
        %3935 = vmatprep.subr.mxu0 0.0
        %3936 = vmatpush2.msra.mxu0 0.0
        %3937 = vmatprep.subr.mxu0 0.0
        %3938 = vmatpush2.msra.mxu0 0.0
        %3939 = vmatprep.subr.mxu0 0.0
        %3940 = vmatpush2.msra.mxu0 0.0
        %3941 = vmatprep.subr.mxu0 0.0
        %3942 = vmatpush2.msra.mxu0 0.0
        %3943 = vmatprep.subr.mxu0 0.0
        %3944 = vmatpush2.msra.mxu0 0.0
        %3945 = vmatprep.subr.mxu0 0.0
        %3946 = vmatpush2.msra.mxu0 0.0
        %3947 = vmatprep.subr.mxu0 0.0
        %3948 = vmatpush2.msra.mxu0 0.0
        %3949 = vmatprep.subr.mxu0 0.0
        %3950 = vmatpush2.msra.mxu0 0.0
        %3951 = vmatprep.subr.mxu0 0.0
        %3952 = vmatpush2.msra.mxu0 0.0
        %3953 = vmatprep.subr.mxu0 0.0
        %3954 = vmatpush2.msra.mxu0 0.0
        %3955 = vmatprep.subr.mxu0 0.0
        %3956 = vmatpush2.msra.mxu0 0.0
        %3957 = vmatprep.mubr.f32.mxu0 0.0
        %v3958 = vand.u32 %v2285, 4294901760
        %3959 = vmatmul.mubr.f32.gmra.mxu0 %v3958
        %v3960 = vpop.f32.mrf.mxu0
        %v3961 = vadd.f32 %v3870, %v3960
        %v3962 = vpop.f32.mrf.mxu0
        %3963 = vmatprep.mubr.f32.mxu0 0.0
        %v3964 = vand.u32 %v2288, 4294901760
        %3965 = vmatmul.mubr.f32.gmra.mxu0 %v3964
        %v3966 = vpop.f32.mrf.mxu0
        %v3967 = vadd.f32 %v3880, %v3966
        %v3968 = vpop.f32.mrf.mxu0
        %3969 = vdwg.mxu0
        %3970 = vmatprep.subr.mxu0 0.0
        %3971 = vmatpush1.msra.mxu0 0.0
        %3972 = vmatprep.subr.mxu0 0.0
        %3973 = vmatpush1.msra.mxu0 0.0
        %3974 = vmatprep.subr.mxu0 0.0
        %3975 = vmatpush1.msra.mxu0 0.0
        %3976 = vmatprep.subr.mxu0 0.0
        %3977 = vmatpush1.msra.mxu0 0.0
        %3978 = vmatprep.subr.mxu0 0.0
        %3979 = vmatpush1.msra.mxu0 0.0
        %3980 = vmatprep.subr.mxu0 0.0
        %3981 = vmatpush1.msra.mxu0 0.0
        %3982 = vmatprep.subr.mxu0 0.0
        %3983 = vmatpush1.msra.mxu0 0.0
        %3984 = vmatprep.subr.mxu0 0.0
        %3985 = vmatpush1.msra.mxu0 0.0
        %3986 = vmatprep.subr.mxu0 0.0
        %3987 = vmatpush1.msra.mxu0 0.0
        %3988 = vmatprep.subr.mxu0 0.0
        %3989 = vmatpush1.msra.mxu0 0.0
        %3990 = vmatprep.subr.mxu0 0.0
        %3991 = vmatpush1.msra.mxu0 0.0
        %3992 = vmatprep.subr.mxu0 0.0
        %3993 = vmatpush1.msra.mxu0 0.0
        %3994 = vmatprep.subr.mxu0 0.0
        %3995 = vmatpush1.msra.mxu0 0.0
        %3996 = vmatprep.subr.mxu0 0.0
        %3997 = vmatpush1.msra.mxu0 0.0
        %3998 = vmatprep.subr.mxu0 0.0
        %v3999 = vand.u32 %v2281, 4294901760
        %v4000 = vsub.f32 %v2281, %v3999
        %4001 = vmatpush1.msra.mxu0 %v4000
        %4002 = vmatprep.subr.mxu0 0.0
        %v4003 = vand.u32 %v2275, 4294901760
        %v4004 = vsub.f32 %v2275, %v4003
        %4005 = vmatpush1.msra.mxu0 %v4004
        %4006 = vmatprep.subr.mxu0 0.0
        %4007 = vmatpush2.msra.mxu0 0.0
        %4008 = vmatprep.subr.mxu0 0.0
        %4009 = vmatpush2.msra.mxu0 0.0
        %4010 = vmatprep.subr.mxu0 0.0
        %4011 = vmatpush2.msra.mxu0 0.0
        %4012 = vmatprep.subr.mxu0 0.0
        %4013 = vmatpush2.msra.mxu0 0.0
        %4014 = vmatprep.subr.mxu0 0.0
        %4015 = vmatpush2.msra.mxu0 0.0
        %4016 = vmatprep.subr.mxu0 0.0
        %4017 = vmatpush2.msra.mxu0 0.0
        %4018 = vmatprep.subr.mxu0 0.0
        %4019 = vmatpush2.msra.mxu0 0.0
        %4020 = vmatprep.subr.mxu0 0.0
        %4021 = vmatpush2.msra.mxu0 0.0
        %4022 = vmatprep.subr.mxu0 0.0
        %4023 = vmatpush2.msra.mxu0 0.0
        %4024 = vmatprep.subr.mxu0 0.0
        %4025 = vmatpush2.msra.mxu0 0.0
        %4026 = vmatprep.subr.mxu0 0.0
        %4027 = vmatpush2.msra.mxu0 0.0
        %4028 = vmatprep.subr.mxu0 0.0
        %4029 = vmatpush2.msra.mxu0 0.0
        %4030 = vmatprep.subr.mxu0 0.0
        %4031 = vmatpush2.msra.mxu0 0.0
        %4032 = vmatprep.subr.mxu0 0.0
        %4033 = vmatpush2.msra.mxu0 0.0
        %4034 = vmatprep.subr.mxu0 0.0
        %4035 = vmatpush2.msra.mxu0 0.0
        %4036 = vmatprep.subr.mxu0 0.0
        %4037 = vmatpush2.msra.mxu0 0.0
        %4038 = vmatprep.mubr.f32.mxu0 0.0
        %v4039 = vand.u32 %v2285, 4294901760
        %v4040 = vsub.f32 %v2285, %v4039
        %4041 = vmatmul.mubr.f32.gmra.mxu0 %v4040
        %v4042 = vpop.f32.mrf.mxu0
        %v4043 = vadd.f32 %v3961, %v4042
        %v4044 = vpop.f32.mrf.mxu0
        %4045 = vmatprep.mubr.f32.mxu0 0.0
        %v4046 = vand.u32 %v2288, 4294901760
        %v4047 = vsub.f32 %v2288, %v4046
        %4048 = vmatmul.mubr.f32.gmra.mxu0 %v4047
        %v4049 = vpop.f32.mrf.mxu0
        %v4050 = vadd.f32 %v3967, %v4049
        %v4051 = vpop.f32.mrf.mxu0
        %4052 = vdwg.mxu0
        %4053 = vmatprep.subr.mxu0 0.0
        %4054 = vmatpush1.msra.mxu0 0.0
        %4055 = vmatprep.subr.mxu0 0.0
        %4056 = vmatpush1.msra.mxu0 0.0
        %4057 = vmatprep.subr.mxu0 0.0
        %4058 = vmatpush1.msra.mxu0 0.0
        %4059 = vmatprep.subr.mxu0 0.0
        %4060 = vmatpush1.msra.mxu0 0.0
        %4061 = vmatprep.subr.mxu0 0.0
        %4062 = vmatpush1.msra.mxu0 0.0
        %4063 = vmatprep.subr.mxu0 0.0
        %4064 = vmatpush1.msra.mxu0 0.0
        %4065 = vmatprep.subr.mxu0 0.0
        %4066 = vmatpush1.msra.mxu0 0.0
        %4067 = vmatprep.subr.mxu0 0.0
        %4068 = vmatpush1.msra.mxu0 0.0
        %4069 = vmatprep.subr.mxu0 0.0
        %4070 = vmatpush1.msra.mxu0 0.0
        %4071 = vmatprep.subr.mxu0 0.0
        %4072 = vmatpush1.msra.mxu0 0.0
        %4073 = vmatprep.subr.mxu0 0.0
        %4074 = vmatpush1.msra.mxu0 0.0
        %4075 = vmatprep.subr.mxu0 0.0
        %4076 = vmatpush1.msra.mxu0 0.0
        %4077 = vmatprep.subr.mxu0 0.0
        %4078 = vmatpush1.msra.mxu0 0.0
        %4079 = vmatprep.subr.mxu0 0.0
        %4080 = vmatpush1.msra.mxu0 0.0
        %4081 = vmatprep.subr.mxu0 0.0
        %v4082 = vand.u32 %v2281, 4294901760
        %4083 = vmatpush1.msra.mxu0 %v4082
        %4084 = vmatprep.subr.mxu0 0.0
        %v4085 = vand.u32 %v2275, 4294901760
        %4086 = vmatpush1.msra.mxu0 %v4085
        %4087 = vmatprep.subr.mxu0 0.0
        %4088 = vmatpush2.msra.mxu0 0.0
        %4089 = vmatprep.subr.mxu0 0.0
        %4090 = vmatpush2.msra.mxu0 0.0
        %4091 = vmatprep.subr.mxu0 0.0
        %4092 = vmatpush2.msra.mxu0 0.0
        %4093 = vmatprep.subr.mxu0 0.0
        %4094 = vmatpush2.msra.mxu0 0.0
        %4095 = vmatprep.subr.mxu0 0.0
        %4096 = vmatpush2.msra.mxu0 0.0
        %4097 = vmatprep.subr.mxu0 0.0
        %4098 = vmatpush2.msra.mxu0 0.0
        %4099 = vmatprep.subr.mxu0 0.0
        %4100 = vmatpush2.msra.mxu0 0.0
        %4101 = vmatprep.subr.mxu0 0.0
        %4102 = vmatpush2.msra.mxu0 0.0
        %4103 = vmatprep.subr.mxu0 0.0
        %4104 = vmatpush2.msra.mxu0 0.0
        %4105 = vmatprep.subr.mxu0 0.0
        %4106 = vmatpush2.msra.mxu0 0.0
        %4107 = vmatprep.subr.mxu0 0.0
        %4108 = vmatpush2.msra.mxu0 0.0
        %4109 = vmatprep.subr.mxu0 0.0
        %4110 = vmatpush2.msra.mxu0 0.0
        %4111 = vmatprep.subr.mxu0 0.0
        %4112 = vmatpush2.msra.mxu0 0.0
        %4113 = vmatprep.subr.mxu0 0.0
        %4114 = vmatpush2.msra.mxu0 0.0
        %4115 = vmatprep.subr.mxu0 0.0
        %4116 = vmatpush2.msra.mxu0 0.0
        %4117 = vmatprep.subr.mxu0 0.0
        %4118 = vmatpush2.msra.mxu0 0.0
        %4119 = vmatprep.mubr.f32.mxu0 0.0
        %v4120 = vand.u32 %v2285, 4294901760
        %v4121 = vsub.f32 %v2285, %v4120
        %v4122 = vand.u32 %v4121, 4294901760
        %4123 = vmatmul.mubr.f32.gmra.mxu0 %v4122
        %v4124 = vpop.f32.mrf.mxu0
        %v4125 = vadd.f32 %v4043, %v4124
        %v4126 = vpop.f32.mrf.mxu0
        %4127 = vmatprep.mubr.f32.mxu0 0.0
        %v4128 = vand.u32 %v2288, 4294901760
        %v4129 = vsub.f32 %v2288, %v4128
        %v4130 = vand.u32 %v4129, 4294901760
        %4131 = vmatmul.mubr.f32.gmra.mxu0 %v4130
        %v4132 = vpop.f32.mrf.mxu0
        %v4133 = vadd.f32 %v4050, %v4132
        %v4134 = vpop.f32.mrf.mxu0
        %4135 = vdwg.mxu0
        %4136 = vmatprep.subr.mxu0 0.0
        %4137 = vmatpush1.msra.mxu0 0.0
        %4138 = vmatprep.subr.mxu0 0.0
        %4139 = vmatpush1.msra.mxu0 0.0
        %4140 = vmatprep.subr.mxu0 0.0
        %4141 = vmatpush1.msra.mxu0 0.0
        %4142 = vmatprep.subr.mxu0 0.0
        %4143 = vmatpush1.msra.mxu0 0.0
        %4144 = vmatprep.subr.mxu0 0.0
        %4145 = vmatpush1.msra.mxu0 0.0
        %4146 = vmatprep.subr.mxu0 0.0
        %4147 = vmatpush1.msra.mxu0 0.0
        %4148 = vmatprep.subr.mxu0 0.0
        %4149 = vmatpush1.msra.mxu0 0.0
        %4150 = vmatprep.subr.mxu0 0.0
        %4151 = vmatpush1.msra.mxu0 0.0
        %4152 = vmatprep.subr.mxu0 0.0
        %4153 = vmatpush1.msra.mxu0 0.0
        %4154 = vmatprep.subr.mxu0 0.0
        %4155 = vmatpush1.msra.mxu0 0.0
        %4156 = vmatprep.subr.mxu0 0.0
        %4157 = vmatpush1.msra.mxu0 0.0
        %4158 = vmatprep.subr.mxu0 0.0
        %4159 = vmatpush1.msra.mxu0 0.0
        %4160 = vmatprep.subr.mxu0 0.0
        %4161 = vmatpush1.msra.mxu0 0.0
        %4162 = vmatprep.subr.mxu0 0.0
        %4163 = vmatpush1.msra.mxu0 0.0
        %4164 = vmatprep.subr.mxu0 0.0
        %v4165 = vand.u32 %v2281, 4294901760
        %v4166 = vsub.f32 %v2281, %v4165
        %v4167 = vand.u32 %v4166, 4294901760
        %4168 = vmatpush1.msra.mxu0 %v4167
        %4169 = vmatprep.subr.mxu0 0.0
        %v4170 = vand.u32 %v2275, 4294901760
        %v4171 = vsub.f32 %v2275, %v4170
        %v4172 = vand.u32 %v4171, 4294901760
        %4173 = vmatpush1.msra.mxu0 %v4172
        %4174 = vmatprep.subr.mxu0 0.0
        %4175 = vmatpush2.msra.mxu0 0.0
        %4176 = vmatprep.subr.mxu0 0.0
        %4177 = vmatpush2.msra.mxu0 0.0
        %4178 = vmatprep.subr.mxu0 0.0
        %4179 = vmatpush2.msra.mxu0 0.0
        %4180 = vmatprep.subr.mxu0 0.0
        %4181 = vmatpush2.msra.mxu0 0.0
        %4182 = vmatprep.subr.mxu0 0.0
        %4183 = vmatpush2.msra.mxu0 0.0
        %4184 = vmatprep.subr.mxu0 0.0
        %4185 = vmatpush2.msra.mxu0 0.0
        %4186 = vmatprep.subr.mxu0 0.0
        %4187 = vmatpush2.msra.mxu0 0.0
        %4188 = vmatprep.subr.mxu0 0.0
        %4189 = vmatpush2.msra.mxu0 0.0
        %4190 = vmatprep.subr.mxu0 0.0
        %4191 = vmatpush2.msra.mxu0 0.0
        %4192 = vmatprep.subr.mxu0 0.0
        %4193 = vmatpush2.msra.mxu0 0.0
        %4194 = vmatprep.subr.mxu0 0.0
        %4195 = vmatpush2.msra.mxu0 0.0
        %4196 = vmatprep.subr.mxu0 0.0
        %4197 = vmatpush2.msra.mxu0 0.0
        %4198 = vmatprep.subr.mxu0 0.0
        %4199 = vmatpush2.msra.mxu0 0.0
        %4200 = vmatprep.subr.mxu0 0.0
        %4201 = vmatpush2.msra.mxu0 0.0
        %4202 = vmatprep.subr.mxu0 0.0
        %4203 = vmatpush2.msra.mxu0 0.0
        %4204 = vmatprep.subr.mxu0 0.0
        %4205 = vmatpush2.msra.mxu0 0.0
        %4206 = vmatprep.mubr.f32.mxu0 0.0
        %v4207 = vand.u32 %v2285, 4294901760
        %4208 = vmatmul.mubr.f32.gmra.mxu0 %v4207
        %v4209 = vpop.f32.mrf.mxu0
        %v4210 = vadd.f32 %v4125, %v4209
        %v4211 = vpop.f32.mrf.mxu0
        %4212 = vmatprep.mubr.f32.mxu0 0.0
        %v4213 = vand.u32 %v2288, 4294901760
        %4214 = vmatmul.mubr.f32.gmra.mxu0 %v4213
        %v4215 = vpop.f32.mrf.mxu0
        %v4216 = vadd.f32 %v4133, %v4215
        %v4217 = vpop.f32.mrf.mxu0
        %4218 = vdwg.mxu0
        %4219 = vmatprep.subr.mxu0 0.0
        %4220 = vmatpush1.msra.mxu0 0.0
        %4221 = vmatprep.subr.mxu0 0.0
        %4222 = vmatpush1.msra.mxu0 0.0
        %4223 = vmatprep.subr.mxu0 0.0
        %4224 = vmatpush1.msra.mxu0 0.0
        %4225 = vmatprep.subr.mxu0 0.0
        %4226 = vmatpush1.msra.mxu0 0.0
        %4227 = vmatprep.subr.mxu0 0.0
        %4228 = vmatpush1.msra.mxu0 0.0
        %4229 = vmatprep.subr.mxu0 0.0
        %4230 = vmatpush1.msra.mxu0 0.0
        %4231 = vmatprep.subr.mxu0 0.0
        %4232 = vmatpush1.msra.mxu0 0.0
        %4233 = vmatprep.subr.mxu0 0.0
        %4234 = vmatpush1.msra.mxu0 0.0
        %4235 = vmatprep.subr.mxu0 0.0
        %4236 = vmatpush1.msra.mxu0 0.0
        %4237 = vmatprep.subr.mxu0 0.0
        %4238 = vmatpush1.msra.mxu0 0.0
        %4239 = vmatprep.subr.mxu0 0.0
        %4240 = vmatpush1.msra.mxu0 0.0
        %4241 = vmatprep.subr.mxu0 0.0
        %4242 = vmatpush1.msra.mxu0 0.0
        %4243 = vmatprep.subr.mxu0 0.0
        %4244 = vmatpush1.msra.mxu0 0.0
        %4245 = vmatprep.subr.mxu0 0.0
        %4246 = vmatpush1.msra.mxu0 0.0
        %4247 = vmatprep.subr.mxu0 0.0
        %v4248 = vand.u32 %v2281, 4294901760
        %4249 = vmatpush1.msra.mxu0 %v4248
        %4250 = vmatprep.subr.mxu0 0.0
        %v4251 = vand.u32 %v2275, 4294901760
        %4252 = vmatpush1.msra.mxu0 %v4251
        %4253 = vmatprep.subr.mxu0 0.0
        %4254 = vmatpush2.msra.mxu0 0.0
        %4255 = vmatprep.subr.mxu0 0.0
        %4256 = vmatpush2.msra.mxu0 0.0
        %4257 = vmatprep.subr.mxu0 0.0
        %4258 = vmatpush2.msra.mxu0 0.0
        %4259 = vmatprep.subr.mxu0 0.0
        %4260 = vmatpush2.msra.mxu0 0.0
        %4261 = vmatprep.subr.mxu0 0.0
        %4262 = vmatpush2.msra.mxu0 0.0
        %4263 = vmatprep.subr.mxu0 0.0
        %4264 = vmatpush2.msra.mxu0 0.0
        %4265 = vmatprep.subr.mxu0 0.0
        %4266 = vmatpush2.msra.mxu0 0.0
        %4267 = vmatprep.subr.mxu0 0.0
        %4268 = vmatpush2.msra.mxu0 0.0
        %4269 = vmatprep.subr.mxu0 0.0
        %4270 = vmatpush2.msra.mxu0 0.0
        %4271 = vmatprep.subr.mxu0 0.0
        %4272 = vmatpush2.msra.mxu0 0.0
        %4273 = vmatprep.subr.mxu0 0.0
        %4274 = vmatpush2.msra.mxu0 0.0
        %4275 = vmatprep.subr.mxu0 0.0
        %4276 = vmatpush2.msra.mxu0 0.0
        %4277 = vmatprep.subr.mxu0 0.0
        %4278 = vmatpush2.msra.mxu0 0.0
        %4279 = vmatprep.subr.mxu0 0.0
        %4280 = vmatpush2.msra.mxu0 0.0
        %4281 = vmatprep.subr.mxu0 0.0
        %4282 = vmatpush2.msra.mxu0 0.0
        %4283 = vmatprep.subr.mxu0 0.0
        %4284 = vmatpush2.msra.mxu0 0.0
        %4285 = vmatprep.mubr.f32.mxu0 0.0
        %v4286 = vand.u32 %v2285, 4294901760
        %4287 = vmatmul.mubr.f32.gmra.mxu0 %v4286
        %v4288 = vpop.f32.mrf.mxu0
        %v4289 = vadd.f32 %v4210, %v4288
        %v4290 = vpop.f32.mrf.mxu0
        %4291 = vmatprep.mubr.f32.mxu0 0.0
        %v4292 = vand.u32 %v2288, 4294901760
        %4293 = vmatmul.mubr.f32.gmra.mxu0 %v4292
        %v4294 = vpop.f32.mrf.mxu0
        %v4295 = vadd.f32 %v4216, %v4294
        %v4296 = vpop.f32.mrf.mxu0
        %4297 = vdwg.mxu0
        %vm4298 = vcmask 64512
        %4299 = vst.msk [vmem:[%s236] sm:$0xff] %vm4298, %v2783
        %4300 = vst.msk [vmem:[%s236 + $0x20] sm:$0xff] %vm4298, %v3285
        %4301 = vst.msk [vmem:[%s236 + $0x40] sm:$0xff] %vm4298, %v3787
        %4302 = vst.msk [vmem:[%s236 + $0x60] sm:$0xff] %vm4298, %v4289
        %4307 = vrot.lane.b32.xlu0 %v2783, 120
        %v4308 = vpop.permute.xlu0 %4307
        %4309 = vrot.lane.b32.xlu0 %v3285, 120
        %v4310 = vpop.permute.xlu0 %4309
        %4311 = vrot.lane.b32.xlu0 %v3787, 120
        %v4312 = vpop.permute.xlu0 %4311
        %4313 = vrot.lane.b32.xlu0 %v4289, 120
        %v4314 = vpop.permute.xlu0 %4313
        %s4319 = scalar_lea.vmem %s236, 8 [#allocation8]
        %4320 = vst.msk [vmem:[%s4319] sm:$0xff] %vm4298, %v4308
        %4321 = vst.msk [vmem:[%s4319 + $0x20] sm:$0xff] %vm4298, %v4310
        %4322 = vst.msk [vmem:[%s4319 + $0x40] sm:$0xff] %vm4298, %v4312
        %4323 = vst.msk [vmem:[%s4319 + $0x60] sm:$0xff] %vm4298, %v4314
        %s4324 = scalar_lea.vmem %s236, 16 [#allocation8]
        %4325 = vst.msk [vmem:[%s4324] sm:$0xff] %vm4298, %v2789
        %4326 = vst.msk [vmem:[%s4324 + $0x20] sm:$0xff] %vm4298, %v3291
        %4327 = vst.msk [vmem:[%s4324 + $0x40] sm:$0xff] %vm4298, %v3793
        %4328 = vst.msk [vmem:[%s4324 + $0x60] sm:$0xff] %vm4298, %v4295
        %4333 = vrot.lane.b32.xlu0 %v2789, 120
        %v4334 = vpop.permute.xlu0 %4333
        %4335 = vrot.lane.b32.xlu0 %v3291, 120
        %v4336 = vpop.permute.xlu0 %4335
        %4337 = vrot.lane.b32.xlu0 %v3793, 120
        %v4338 = vpop.permute.xlu0 %4337
        %4339 = vrot.lane.b32.xlu0 %v4295, 120
        %v4340 = vpop.permute.xlu0 %4339
        %s4345 = scalar_lea.vmem %s236, 24 [#allocation8]
        %4346 = vst.msk [vmem:[%s4345] sm:$0xff] %vm4298, %v4334
        %4347 = vst.msk [vmem:[%s4345 + $0x20] sm:$0xff] %vm4298, %v4336
        %4348 = vst.msk [vmem:[%s4345 + $0x40] sm:$0xff] %vm4298, %v4338
        %4349 = vst.msk [vmem:[%s4345 + $0x60] sm:$0xff] %vm4298, %v4340
        %s4350 = sand.u32 %s113, 1
        %s4351 = scalar_lea.sflag [#allocation4], %s4350
        %s4352 = sand.u32 %s113, 1
        %s4353 = smul.addr %s4352, 128
        %s4354 = scalar_lea.vmem [#allocation8], %s4353
        // Predicated region
        $region45: #{tpu_custom_call.1} parent=31 // pred_check
          %p4355 = pneg %p123
        $region46: #{tpu_custom_call.1} parent=31 // pred_check_branch
          %4357 = sbr.rel (%p4355) target = $region48
        $region47: #{tpu_custom_call.1} parent=31 // pred_region
          %s4358 = smul.u32 4, %s26
          %s4360 = ssub.s32 2048, 2048
          %4361 = vsyncadd %s4351, %s4360
          %s4362 = smul.addr %s4358, 4
          %s4363 = smul.addr %s25, 16
          %s4364 = sadd.s32 %s4362, %s4363
          %s4365 = smul.addr %s4364, 128
          %s4366 = scalar_lea.hbm %s3, %s4365
          %s4367 = sshll.u32 %s4354, 4
          %s4368 = int_to_ptr.vmem [resolvable:$true] %s4367
          %4373 = dma.vmem_to_hbm [thread:$0]  %s4368, 2048, %s4366, %s4351, 128, 128, 8
        $region48: #{tpu_custom_call.1} parent=31 // pred_fallthru
          _
      $region32: #{tpu_custom_call.1} parent=5 // pred_fallthru
        _
      %p4374 = scmp.le.s32.totalorder 2, %s16
      // Predicated region
      $region49: #{tpu_custom_call.1} parent=5 // pred_check
        %p4375 = pneg %p4374
      $region50: #{tpu_custom_call.1} parent=5 // pred_check_branch
        %4377 = sbr.rel (%p4375) target = $region52
      $region51: #{tpu_custom_call.1} parent=5 // pred_region
        %s4378 = ssub.s32 %s16, 2
        // Predicated region
        $region53: #{tpu_custom_call.1} parent=51 // pred_check
          %p4379 = pneg %p129
        $region54: #{tpu_custom_call.1} parent=51 // pred_check_branch
          %4381 = sbr.rel (%p4379) target = $region56
        $region55: #{tpu_custom_call.1} parent=51 // pred_region
          %s4382 = sand.u32 %s114, 1
          %s4383 = scalar_lea.sflag [#allocation4], %s4382
          %s4384 = sand.u32 %s114, 1
          %s4385 = smul.addr %s4384, 128
          %s4386 = scalar_lea.vmem [#allocation8], %s4385
          %4387 = dma.done %s4383, 2048
        $region56: #{tpu_custom_call.1} parent=51 // pred_fallthru
          _
      $region52: #{tpu_custom_call.1} parent=5 // pred_fallthru
        _
    $region6: #{tpu_custom_call.1} parent=1 // loop_footer
      %s20 = sadd.s32 1, %s16
    $region7: #{tpu_custom_call.1} parent=1 // loop_footer_branch
      %15 = sbr.rel target = $region3
    $region8: #{tpu_custom_call.1} parent=1 // loop_exit
      _
    %4388 = vsyncpa [#allocation3], 1
    %s4389 = scalar_lea.sflag [#allocation3], 1
    %4390 = vsyncpa %s4389, 1
    %4391 = vsyncpa [#allocation6], 1
    %4392 = vsyncpa [#allocation4], 1
    %s4393 = scalar_lea.sflag [#allocation4], 1
    %4394 = vsyncpa %s4393, 1

</llo_original>
